<compile_context>
chip_gen: v7x
topology: tpu7x:2x2x1
jax: 0.10.0
libtpu: 0.0.40
codegen_flags: <defaults>
</compile_context>

<pallas_src>
import math

import jax
import jax.numpy as jnp
from jax.experimental import pallas as pl
from jax.experimental.pallas import tpu as pltpu


def attention_rotary(q_in, k_in, v_in, params, *, num_heads, theta=10000.0,
                     heads_per_step=None, batch_tile=None):
    """Pallas TPU implementation of AttentionRotary.forward (mask=None path)."""
    B, T, D = q_in.shape
    assert D % num_heads == 0, "d_model must be divisible by num_heads"
    d_k = D // num_heads
    assert d_k % 2 == 0, "rotary head dim must be even"

    wq, bq, wk, bk, wv, bv, wo, bo = params

    # ---- head grouping: 2 heads per step fills the 256-wide MXU (v6e/v7x)
    # on the dominant projection matmuls; harmless on v5e's 128-wide MXU. ----
    if heads_per_step is None:
        heads_per_step = 2 if num_heads % 2 == 0 else 1
    assert num_heads % heads_per_step == 0
    n_groups = num_heads // heads_per_step
    wd = heads_per_step * d_k

    # ---- fold several batch rows per grid step so the projection M-dim is
    # large and the ~0.35us/step grid overhead is amortized. ----
    if batch_tile is None:
        target = min(B, max(1, 256 // T))
        batch_tile = 1
        for cand in range(target, 0, -1):
            if B % cand == 0:
                batch_tile = cand
                break
    assert B % batch_tile == 0
    m_rows = batch_tile * T
    scale = 1.0 / math.sqrt(d_k)

    # ---- glue: rotary tables (tiled over the folded batch rows).  Pair sign
    # and lane-parity select are pre-folded into two masked sin tables. ----
    inv_freq = 1.0 / (theta ** (jnp.arange(0, d_k, 2, dtype=jnp.float32) / d_k))
    pos = jnp.arange(T, dtype=jnp.float32)
    freqs = jnp.repeat(pos[:, None] * inv_freq[None, :], 2, axis=-1)   # (T, d_k)
    lane_even = (jnp.arange(d_k) % 2 == 0)[None, :]
    cos_h = jnp.cos(freqs)
    sin_f = jnp.sin(freqs) * jnp.where(lane_even, -1.0, 1.0)           # sign fold
    sin_e_h = jnp.where(lane_even, sin_f, 0.0)                         # even lanes
    sin_o_h = jnp.where(lane_even, 0.0, sin_f)                         # odd lanes
    cos_t = jnp.tile(cos_h, (batch_tile, 1))
    sin_e_t = jnp.tile(sin_e_h, (batch_tile, 1))
    sin_o_t = jnp.tile(sin_o_h, (batch_tile, 1))

    # ---- glue: bf16 activations & weights; weights regrouped per head-group
    # so the kernel selects a group with one dynamic leading index. ----
    qb = q_in.astype(jnp.bfloat16)
    kb = k_in.astype(jnp.bfloat16)
    vb = v_in.astype(jnp.bfloat16)

    def cols_by_group(w):   # (D, D) -> (G, D, wd): head-group columns of W_{q,k,v}
        return w.reshape(D, n_groups, wd).transpose(1, 0, 2).astype(jnp.bfloat16)

    def rows_by_group(w):   # (D, D) -> (G, wd, D): head-group rows of W_o
        return w.reshape(n_groups, wd, D).astype(jnp.bfloat16)

    def bias_by_group(b):   # (D,) -> (G, 1, wd)
        return b.reshape(n_groups, 1, wd).astype(jnp.float32)

    wq_g, wk_g, wv_g = cols_by_group(wq), cols_by_group(wk), cols_by_group(wv)
    bq_g, bk_g, bv_g = bias_by_group(bq), bias_by_group(bk), bias_by_group(bv)
    wo_g = rows_by_group(wo)
    bo_2 = bo.reshape(1, D).astype(jnp.float32)

    def kernel(xq_ref, xk_ref, xv_ref,
               wq_ref, bq_ref, wk_ref, bk_ref, wv_ref, bv_ref,
               wo_ref, bo_ref, cos_ref, sin_e_ref, sin_o_ref,
               out_ref, acc_ref):
        g = pl.program_id(1)
        last = pl.num_programs(1) - 1

        xq = xq_ref[...].reshape(m_rows, D)          # bf16 (cast in wrapper)
        xk = xk_ref[...].reshape(m_rows, D)
        xv = xv_ref[...].reshape(m_rows, D)

        # per-head-group QKV projections (bf16 MXU, f32 accumulation)
        q = jnp.dot(xq, wq_ref[g], preferred_element_type=jnp.float32) + bq_ref[g]
        k = jnp.dot(xk, wk_ref[g], preferred_element_type=jnp.float32) + bk_ref[g]
        v = jnp.dot(xv, wv_ref[g], preferred_element_type=jnp.float32) + bv_ref[g]

        cos = cos_ref[...]
        sin_e = sin_e_ref[...]
        sin_o = sin_o_ref[...]

        def rope(x):  # (m_rows, d_k): interleaved-pair rotary via XLU lane rolls
            return (x * cos
                    + pltpu.roll(x, d_k - 1, 1) * sin_e
                    + pltpu.roll(x, 1, 1) * sin_o)

        v_b = v.astype(jnp.bfloat16)
        q_heads, k_heads = [], []
        for hh in range(heads_per_step):
            cols = slice(hh * d_k, (hh + 1) * d_k)
            q_heads.append((rope(q[:, cols]) * scale).astype(jnp.bfloat16))
            k_heads.append(rope(k[:, cols]).astype(jnp.bfloat16))

        # per (batch row, head) attention; softmax normalized AFTER the PV matmul
        row_outs = []
        for r in range(batch_tile):
            rows = slice(r * T, (r + 1) * T)
            head_outs = []
            for hh in range(heads_per_step):
                cols = slice(hh * d_k, (hh + 1) * d_k)
                qh = q_heads[hh][rows]
                kh = k_heads[hh][rows]
                vh = v_b[rows, cols]
                s = jax.lax.dot_general(qh, kh, (((1,), (1,)), ((), ())),
                                        preferred_element_type=jnp.float32)  # (T,T)
                s = s - jnp.max(s, axis=-1, keepdims=True)
                p = jnp.exp(s)
                denom = jnp.sum(p, axis=-1, keepdims=True)
                o = jnp.dot(p.astype(jnp.bfloat16), vh,
                            preferred_element_type=jnp.float32)              # (T,d_k)
                head_outs.append(o * pl.reciprocal(denom, approx=True))
            row_outs.append(jnp.concatenate(head_outs, axis=-1))
        attn = jnp.concatenate(row_outs, axis=0).astype(jnp.bfloat16)   # (M, wd)

        # this head-group's slice of the output projection -> f32 accumulator
        contrib = jnp.dot(attn, wo_ref[g],
                          preferred_element_type=jnp.float32
                          ).reshape(batch_tile, T, D)

        @pl.when(g == 0)
        def _init():
            acc_ref[...] = contrib

        @pl.when(g != 0)
        def _accum():
            acc_ref[...] = acc_ref[...] + contrib

        @pl.when(g == last)
        def _finalize():
            out_ref[...] = (acc_ref[...] + bo_ref[...]).astype(out_ref.dtype)

    x_spec = pl.BlockSpec((batch_tile, T, D), lambda b, g: (b, 0, 0))
    out_spec = pl.BlockSpec((batch_tile, T, D), lambda b, g: (b, 0, 0))
    const3 = lambda b, g: (0, 0, 0)
    const2 = lambda b, g: (0, 0)
    # whole-array constant-index blocks: DMA'd once, single-buffered
    wcol_spec = pl.BlockSpec((n_groups, D, wd), const3, pipeline_mode=pl.Buffered(1))
    wrow_spec = pl.BlockSpec((n_groups, wd, D), const3, pipeline_mode=pl.Buffered(1))
    bias_spec = pl.BlockSpec((n_groups, 1, wd), const3, pipeline_mode=pl.Buffered(1))
    bo_spec = pl.BlockSpec((1, D), const2, pipeline_mode=pl.Buffered(1))
    tab_spec = pl.BlockSpec((m_rows, d_k), const2, pipeline_mode=pl.Buffered(1))

    # generation-aware scoped-VMEM limit (v5e/v6e: 128 MiB phys, v7x: 64 MiB)
    try:
        cap = pltpu.get_tpu_info().vmem_capacity_bytes
        vmem_limit = min(int(cap * 0.85), 110 * 1024 * 1024)
    except Exception:
        vmem_limit = 64 * 1024 * 1024
    vmem_limit = max(vmem_limit, 32 * 1024 * 1024)

    return pl.pallas_call(
        kernel,
        out_shape=jax.ShapeDtypeStruct((B, T, D), q_in.dtype),
        grid=(B // batch_tile, n_groups),
        in_specs=[
            x_spec, x_spec, x_spec,              # xq, xk, xv (bf16)
            wcol_spec, bias_spec,                # W_q, b_q   (grouped)
            wcol_spec, bias_spec,                # W_k, b_k
            wcol_spec, bias_spec,                # W_v, b_v
            wrow_spec, bo_spec,                  # W_o, b_o
            tab_spec, tab_spec, tab_spec,        # cos, sin_even, sin_odd
        ],
        out_specs=out_spec,
        scratch_shapes=[pltpu.VMEM((batch_tile, T, D), jnp.float32)],
        compiler_params=pltpu.CompilerParams(
            dimension_semantics=("parallel", "arbitrary"),
            vmem_limit_bytes=vmem_limit),
    )(qb, kb, vb,
      wq_g, bq_g, wk_g, bk_g, wv_g, bv_g,
      wo_g, bo_2,
      cos_t, sin_e_t, sin_o_t)


# ----------------------- pure-JAX reference (for checking) ------------------
def _rotate_half(x):
    xr = x.reshape(x.shape[:-1] + (x.shape[-1] // 2, 2))
    x1, x2 = xr[..., 0], xr[..., 1]
    return jnp.stack((-x2, x1), axis=-1).reshape(x.shape)


def reference(q_in, k_in, v_in, params, *, num_heads, theta=10000.0):
    B, T, D = q_in.shape
    d_k = D // num_heads
    wq, bq, wk, bk, wv, bv, wo, bo = params

    inv_freq = 1.0 / (theta ** (jnp.arange(0, d_k, 2, dtype=jnp.float32) / d_k))
    pos = jnp.arange(T, dtype=jnp.float32)
    freqs = jnp.repeat(pos[:, None] * inv_freq[None, :], 2, axis=-1)  # (T, d_k)
    cos, sin = jnp.cos(freqs), jnp.sin(freqs)

    def split(x):  # (B,T,D) -> (B,H,T,d_k)
        return x.reshape(B, T, num_heads, d_k).transpose(0, 2, 1, 3)

    q = split(q_in @ wq + bq)
    k = split(k_in @ wk + bk)
    v = split(v_in @ wv + bv)

    q = q * cos + _rotate_half(q) * sin
    k = k * cos + _rotate_half(k) * sin

    scores = jnp.einsum('bhqd,bhkd->bhqk', q, k) / math.sqrt(d_k)
    probs = jax.nn.softmax(scores, axis=-1)
    out = jnp.einsum('bhqk,bhkd->bhqd', probs, v)
    out = out.transpose(0, 2, 1, 3).reshape(B, T, D)
    return out @ wo + bo


if __name__ == "__main__":
    # d_k = 128 == one lane tile per head; T = 8 == one sublane tile.
    B, T, D, H = 2, 8, 512, 4

    key = jax.random.PRNGKey(0)
    keys = jax.random.split(key, 11)

    q_in = jax.random.normal(keys[0], (B, T, D), dtype=jnp.float32)
    k_in = jax.random.normal(keys[1], (B, T, D), dtype=jnp.float32)
    v_in = jax.random.normal(keys[2], (B, T, D), dtype=jnp.float32)

    def lin_init(kw, kb):
        bound = 1.0 / math.sqrt(D)
        w = jax.random.uniform(kw, (D, D), jnp.float32, -bound, bound)
        b = jax.random.uniform(kb, (D,), jnp.float32, -bound, bound)
        return w, b

    wq, bq = lin_init(keys[3], keys[4])
    wk, bk = lin_init(keys[5], keys[6])
    wv, bv = lin_init(keys[7], keys[8])
    wo, bo = lin_init(keys[9], keys[10])
    params = (wq, bq, wk, bk, wv, bv, wo, bo)

    out = attention_rotary(q_in, k_in, v_in, params, num_heads=H)
    out = jax.block_until_ready(out)

    ref = reference(q_in, k_in, v_in, params, num_heads=H)
    assert out.shape == (B, T, D)
    err = float(jnp.max(jnp.abs(out - ref)))
    # kernel matmuls run in bf16 (f32 accumulation); compare against the f32
    # reference with a correspondingly relaxed tolerance.
    assert jnp.allclose(out, ref, atol=2e-2, rtol=2e-2), f"max err {err}"

    print("KERNEL_OK")
</pallas_src>

<mosaic_0001>
module attributes {stable_mosaic.version = 11 : i64} {
  func.func @kernel(%arg0: i32, %arg1: i32, %arg2: memref<2x8x512xbf16, #tpu.memory_space<vmem>>, %arg3: memref<2x8x512xbf16, #tpu.memory_space<vmem>>, %arg4: memref<2x8x512xbf16, #tpu.memory_space<vmem>>, %arg5: memref<2x512x256xbf16, #tpu.memory_space<vmem>>, %arg6: memref<2x1x256xf32, #tpu.memory_space<vmem>>, %arg7: memref<2x512x256xbf16, #tpu.memory_space<vmem>>, %arg8: memref<2x1x256xf32, #tpu.memory_space<vmem>>, %arg9: memref<2x512x256xbf16, #tpu.memory_space<vmem>>, %arg10: memref<2x1x256xf32, #tpu.memory_space<vmem>>, %arg11: memref<2x256x512xbf16, #tpu.memory_space<vmem>>, %arg12: memref<1x512xf32, #tpu.memory_space<vmem>>, %arg13: memref<16x128xf32, #tpu.memory_space<vmem>>, %arg14: memref<16x128xf32, #tpu.memory_space<vmem>>, %arg15: memref<16x128xf32, #tpu.memory_space<vmem>>, %arg16: memref<2x8x512xf32, #tpu.memory_space<vmem>>, %arg17: memref<2x8x512xf32, #tpu.memory_space<vmem>>) attributes {dimension_semantics = [#tpu.dimension_semantics<parallel>, #tpu.dimension_semantics<arbitrary>], iteration_bounds = array<i64: 1, 2>, scalar_prefetch = 0 : i64, scratch_operands = 1 : i64, tpu.core_type = #tpu.core_type<tc>, window_params = [{transform_indices = @transform_0, window_bounds = array<i64: 2, 8, 512>}, {transform_indices = @transform_1, window_bounds = array<i64: 2, 8, 512>}, {transform_indices = @transform_2, window_bounds = array<i64: 2, 8, 512>}, {pipeline_mode = #tpu.pipeline_mode<synchronous>, transform_indices = @transform_3, window_bounds = array<i64: 2, 512, 256>}, {pipeline_mode = #tpu.pipeline_mode<synchronous>, transform_indices = @transform_4, window_bounds = array<i64: 2, 1, 256>}, {pipeline_mode = #tpu.pipeline_mode<synchronous>, transform_indices = @transform_5, window_bounds = array<i64: 2, 512, 256>}, {pipeline_mode = #tpu.pipeline_mode<synchronous>, transform_indices = @transform_6, window_bounds = array<i64: 2, 1, 256>}, {pipeline_mode = #tpu.pipeline_mode<synchronous>, transform_indices = @transform_7, window_bounds = array<i64: 2, 512, 256>}, {pipeline_mode = #tpu.pipeline_mode<synchronous>, transform_indices = @transform_8, window_bounds = array<i64: 2, 1, 256>}, {pipeline_mode = #tpu.pipeline_mode<synchronous>, transform_indices = @transform_9, window_bounds = array<i64: 2, 256, 512>}, {pipeline_mode = #tpu.pipeline_mode<synchronous>, transform_indices = @transform_10, window_bounds = array<i64: 1, 512>}, {pipeline_mode = #tpu.pipeline_mode<synchronous>, transform_indices = @transform_11, window_bounds = array<i64: 16, 128>}, {pipeline_mode = #tpu.pipeline_mode<synchronous>, transform_indices = @transform_12, window_bounds = array<i64: 16, 128>}, {pipeline_mode = #tpu.pipeline_mode<synchronous>, transform_indices = @transform_13, window_bounds = array<i64: 16, 128>}, {transform_indices = @transform_14, window_bounds = array<i64: 2, 8, 512>}]} {
    %c0 = arith.constant 0 : index
    %c0_0 = arith.constant 0 : index
    %c0_1 = arith.constant 0 : index
    %0 = vector.load %arg2[%c0, %c0_0, %c0_1] : memref<2x8x512xbf16, #tpu.memory_space<vmem>>, vector<2x8x512xbf16>
    %1 = vector.shape_cast %0 : vector<2x8x512xbf16> to vector<16x512xbf16>
    %c0_2 = arith.constant 0 : index
    %c0_3 = arith.constant 0 : index
    %c0_4 = arith.constant 0 : index
    %2 = vector.load %arg3[%c0_2, %c0_3, %c0_4] : memref<2x8x512xbf16, #tpu.memory_space<vmem>>, vector<2x8x512xbf16>
    %3 = vector.shape_cast %2 : vector<2x8x512xbf16> to vector<16x512xbf16>
    %c0_5 = arith.constant 0 : index
    %c0_6 = arith.constant 0 : index
    %c0_7 = arith.constant 0 : index
    %4 = vector.load %arg4[%c0_5, %c0_6, %c0_7] : memref<2x8x512xbf16, #tpu.memory_space<vmem>>, vector<2x8x512xbf16>
    %5 = vector.shape_cast %4 : vector<2x8x512xbf16> to vector<16x512xbf16>
    %6 = arith.index_cast %arg1 : i32 to index
    %c0_8 = arith.constant 0 : index
    %c0_9 = arith.constant 0 : index
    %7 = vector.load %arg5[%6, %c0_8, %c0_9] : memref<2x512x256xbf16, #tpu.memory_space<vmem>>, vector<1x512x256xbf16>
    %8 = vector.shape_cast %7 : vector<1x512x256xbf16> to vector<512x256xbf16>
    %cst = arith.constant dense<0.000000e+00> : vector<16x256xf32>
    %9 = tpu.matmul %1, %8, %cst {dimension_numbers = #tpu.dot_dimension_numbers<[1], [0], [0], [1], [0, 0, 1, 1], [], []>} : vector<16x512xbf16>, vector<512x256xbf16>, vector<16x256xf32> -> vector<16x256xf32>
    %10 = arith.index_cast %arg1 : i32 to index
    %c0_10 = arith.constant 0 : index
    %c0_11 = arith.constant 0 : index
    %11 = vector.load %arg6[%10, %c0_10, %c0_11] : memref<2x1x256xf32, #tpu.memory_space<vmem>>, vector<1x1x256xf32>
    %12 = vector.shape_cast %11 : vector<1x1x256xf32> to vector<1x256xf32>
    %13 = vector.broadcast %12 : vector<1x256xf32> to vector<16x256xf32>
    %14 = arith.addf %9, %13 : vector<16x256xf32>
    %15 = arith.index_cast %arg1 : i32 to index
    %c0_12 = arith.constant 0 : index
    %c0_13 = arith.constant 0 : index
    %16 = vector.load %arg7[%15, %c0_12, %c0_13] : memref<2x512x256xbf16, #tpu.memory_space<vmem>>, vector<1x512x256xbf16>
    %17 = vector.shape_cast %16 : vector<1x512x256xbf16> to vector<512x256xbf16>
    %cst_14 = arith.constant dense<0.000000e+00> : vector<16x256xf32>
    %18 = tpu.matmul %3, %17, %cst_14 {dimension_numbers = #tpu.dot_dimension_numbers<[1], [0], [0], [1], [0, 0, 1, 1], [], []>} : vector<16x512xbf16>, vector<512x256xbf16>, vector<16x256xf32> -> vector<16x256xf32>
    %19 = arith.index_cast %arg1 : i32 to index
    %c0_15 = arith.constant 0 : index
    %c0_16 = arith.constant 0 : index
    %20 = vector.load %arg8[%19, %c0_15, %c0_16] : memref<2x1x256xf32, #tpu.memory_space<vmem>>, vector<1x1x256xf32>
    %21 = vector.shape_cast %20 : vector<1x1x256xf32> to vector<1x256xf32>
    %22 = vector.broadcast %21 : vector<1x256xf32> to vector<16x256xf32>
    %23 = arith.addf %18, %22 : vector<16x256xf32>
    %24 = arith.index_cast %arg1 : i32 to index
    %c0_17 = arith.constant 0 : index
    %c0_18 = arith.constant 0 : index
    %25 = vector.load %arg9[%24, %c0_17, %c0_18] : memref<2x512x256xbf16, #tpu.memory_space<vmem>>, vector<1x512x256xbf16>
    %26 = vector.shape_cast %25 : vector<1x512x256xbf16> to vector<512x256xbf16>
    %cst_19 = arith.constant dense<0.000000e+00> : vector<16x256xf32>
    %27 = tpu.matmul %5, %26, %cst_19 {dimension_numbers = #tpu.dot_dimension_numbers<[1], [0], [0], [1], [0, 0, 1, 1], [], []>} : vector<16x512xbf16>, vector<512x256xbf16>, vector<16x256xf32> -> vector<16x256xf32>
    %28 = arith.index_cast %arg1 : i32 to index
    %c0_20 = arith.constant 0 : index
    %c0_21 = arith.constant 0 : index
    %29 = vector.load %arg10[%28, %c0_20, %c0_21] : memref<2x1x256xf32, #tpu.memory_space<vmem>>, vector<1x1x256xf32>
    %30 = vector.shape_cast %29 : vector<1x1x256xf32> to vector<1x256xf32>
    %31 = vector.broadcast %30 : vector<1x256xf32> to vector<16x256xf32>
    %32 = arith.addf %27, %31 : vector<16x256xf32>
    %c0_22 = arith.constant 0 : index
    %c0_23 = arith.constant 0 : index
    %33 = vector.load %arg13[%c0_22, %c0_23] : memref<16x128xf32, #tpu.memory_space<vmem>>, vector<16x128xf32>
    %c0_24 = arith.constant 0 : index
    %c0_25 = arith.constant 0 : index
    %34 = vector.load %arg14[%c0_24, %c0_25] : memref<16x128xf32, #tpu.memory_space<vmem>>, vector<16x128xf32>
    %c0_26 = arith.constant 0 : index
    %c0_27 = arith.constant 0 : index
    %35 = vector.load %arg15[%c0_26, %c0_27] : memref<16x128xf32, #tpu.memory_space<vmem>>, vector<16x128xf32>
    %36 = arith.truncf %32 : vector<16x256xf32> to vector<16x256xbf16>
    %37 = vector.extract_strided_slice %14 {offsets = [0, 0], sizes = [16, 128], strides = [1, 1]} : vector<16x256xf32> to vector<16x128xf32>
    %38 = arith.mulf %37, %33 : vector<16x128xf32>
    %c127_i32 = arith.constant 127 : i32
    %39 = tpu.dynamic_rotate %37 by %c127_i32 dim 1 : vector<16x128xf32>, i32 -> vector<16x128xf32>
    %40 = arith.mulf %39, %34 : vector<16x128xf32>
    %41 = arith.addf %38, %40 : vector<16x128xf32>
    %c1_i32 = arith.constant 1 : i32
    %42 = tpu.dynamic_rotate %37 by %c1_i32 dim 1 : vector<16x128xf32>, i32 -> vector<16x128xf32>
    %43 = arith.mulf %42, %35 : vector<16x128xf32>
    %44 = arith.addf %41, %43 : vector<16x128xf32>
    %cst_28 = arith.constant 0.0883883461 : f32
    %45 = vector.broadcast %cst_28 : f32 to vector<16x128xf32>
    %46 = arith.mulf %44, %45 : vector<16x128xf32>
    %47 = arith.truncf %46 : vector<16x128xf32> to vector<16x128xbf16>
    %48 = vector.extract_strided_slice %23 {offsets = [0, 0], sizes = [16, 128], strides = [1, 1]} : vector<16x256xf32> to vector<16x128xf32>
    %49 = arith.mulf %48, %33 : vector<16x128xf32>
    %c127_i32_29 = arith.constant 127 : i32
    %50 = tpu.dynamic_rotate %48 by %c127_i32_29 dim 1 : vector<16x128xf32>, i32 -> vector<16x128xf32>
    %51 = arith.mulf %50, %34 : vector<16x128xf32>
    %52 = arith.addf %49, %51 : vector<16x128xf32>
    %c1_i32_30 = arith.constant 1 : i32
    %53 = tpu.dynamic_rotate %48 by %c1_i32_30 dim 1 : vector<16x128xf32>, i32 -> vector<16x128xf32>
    %54 = arith.mulf %53, %35 : vector<16x128xf32>
    %55 = arith.addf %52, %54 : vector<16x128xf32>
    %56 = arith.truncf %55 : vector<16x128xf32> to vector<16x128xbf16>
    %57 = vector.extract_strided_slice %14 {offsets = [0, 128], sizes = [16, 128], strides = [1, 1]} : vector<16x256xf32> to vector<16x128xf32>
    %58 = arith.mulf %57, %33 : vector<16x128xf32>
    %c127_i32_31 = arith.constant 127 : i32
    %59 = tpu.dynamic_rotate %57 by %c127_i32_31 dim 1 : vector<16x128xf32>, i32 -> vector<16x128xf32>
    %60 = arith.mulf %59, %34 : vector<16x128xf32>
    %61 = arith.addf %58, %60 : vector<16x128xf32>
    %c1_i32_32 = arith.constant 1 : i32
    %62 = tpu.dynamic_rotate %57 by %c1_i32_32 dim 1 : vector<16x128xf32>, i32 -> vector<16x128xf32>
    %63 = arith.mulf %62, %35 : vector<16x128xf32>
    %64 = arith.addf %61, %63 : vector<16x128xf32>
    %cst_33 = arith.constant 0.0883883461 : f32
    %65 = vector.broadcast %cst_33 : f32 to vector<16x128xf32>
    %66 = arith.mulf %64, %65 : vector<16x128xf32>
    %67 = arith.truncf %66 : vector<16x128xf32> to vector<16x128xbf16>
    %68 = vector.extract_strided_slice %23 {offsets = [0, 128], sizes = [16, 128], strides = [1, 1]} : vector<16x256xf32> to vector<16x128xf32>
    %69 = arith.mulf %68, %33 : vector<16x128xf32>
    %c127_i32_34 = arith.constant 127 : i32
    %70 = tpu.dynamic_rotate %68 by %c127_i32_34 dim 1 : vector<16x128xf32>, i32 -> vector<16x128xf32>
    %71 = arith.mulf %70, %34 : vector<16x128xf32>
    %72 = arith.addf %69, %71 : vector<16x128xf32>
    %c1_i32_35 = arith.constant 1 : i32
    %73 = tpu.dynamic_rotate %68 by %c1_i32_35 dim 1 : vector<16x128xf32>, i32 -> vector<16x128xf32>
    %74 = arith.mulf %73, %35 : vector<16x128xf32>
    %75 = arith.addf %72, %74 : vector<16x128xf32>
    %76 = arith.truncf %75 : vector<16x128xf32> to vector<16x128xbf16>
    %77 = vector.extract_strided_slice %47 {offsets = [0, 0], sizes = [8, 128], strides = [1, 1]} : vector<16x128xbf16> to vector<8x128xbf16>
    %78 = vector.extract_strided_slice %56 {offsets = [0, 0], sizes = [8, 128], strides = [1, 1]} : vector<16x128xbf16> to vector<8x128xbf16>
    %79 = vector.extract_strided_slice %36 {offsets = [0, 0], sizes = [8, 128], strides = [1, 1]} : vector<16x256xbf16> to vector<8x128xbf16>
    %cst_36 = arith.constant dense<0.000000e+00> : vector<8x8xf32>
    %80 = tpu.matmul %77, %78, %cst_36 {dimension_numbers = #tpu.dot_dimension_numbers<[1], [1], [0], [0], [0, 0, 1, 0], [], []>} : vector<8x128xbf16>, vector<8x128xbf16>, vector<8x8xf32> -> vector<8x8xf32>
    %cst_37 = arith.constant dense<0xFF800000> : vector<8xf32>
    %81 = vector.multi_reduction <maximumf>, %80, %cst_37 [1] : vector<8x8xf32> to vector<8xf32>
    %82 = vector.shape_cast %81 : vector<8xf32> to vector<8x1xf32>
    %83 = vector.broadcast %82 : vector<8x1xf32> to vector<8x8xf32>
    %84 = arith.subf %80, %83 : vector<8x8xf32>
    %85 = math.exp %84 : vector<8x8xf32>
    %cst_38 = arith.constant dense<0.000000e+00> : vector<8xf32>
    %86 = vector.multi_reduction <add>, %85, %cst_38 [1] : vector<8x8xf32> to vector<8xf32>
    %87 = vector.shape_cast %86 : vector<8xf32> to vector<8x1xf32>
    %88 = arith.truncf %85 : vector<8x8xf32> to vector<8x8xbf16>
    %cst_39 = arith.constant dense<0.000000e+00> : vector<8x128xf32>
    %89 = tpu.matmul %88, %79, %cst_39 {dimension_numbers = #tpu.dot_dimension_numbers<[1], [0], [0], [1], [0, 0, 1, 1], [], []>} : vector<8x8xbf16>, vector<8x128xbf16>, vector<8x128xf32> -> vector<8x128xf32>
    %90 = tpu.reciprocal %87 {approx = true} : vector<8x1xf32> -> vector<8x1xf32>
    %91 = vector.broadcast %90 : vector<8x1xf32> to vector<8x128xf32>
    %92 = arith.mulf %89, %91 : vector<8x128xf32>
    %93 = vector.extract_strided_slice %67 {offsets = [0, 0], sizes = [8, 128], strides = [1, 1]} : vector<16x128xbf16> to vector<8x128xbf16>
    %94 = vector.extract_strided_slice %76 {offsets = [0, 0], sizes = [8, 128], strides = [1, 1]} : vector<16x128xbf16> to vector<8x128xbf16>
    %95 = vector.extract_strided_slice %36 {offsets = [0, 128], sizes = [8, 128], strides = [1, 1]} : vector<16x256xbf16> to vector<8x128xbf16>
    %cst_40 = arith.constant dense<0.000000e+00> : vector<8x8xf32>
    %96 = tpu.matmul %93, %94, %cst_40 {dimension_numbers = #tpu.dot_dimension_numbers<[1], [1], [0], [0], [0, 0, 1, 0], [], []>} : vector<8x128xbf16>, vector<8x128xbf16>, vector<8x8xf32> -> vector<8x8xf32>
    %cst_41 = arith.constant dense<0xFF800000> : vector<8xf32>
    %97 = vector.multi_reduction <maximumf>, %96, %cst_41 [1] : vector<8x8xf32> to vector<8xf32>
    %98 = vector.shape_cast %97 : vector<8xf32> to vector<8x1xf32>
    %99 = vector.broadcast %98 : vector<8x1xf32> to vector<8x8xf32>
    %100 = arith.subf %96, %99 : vector<8x8xf32>
    %101 = math.exp %100 : vector<8x8xf32>
    %cst_42 = arith.constant dense<0.000000e+00> : vector<8xf32>
    %102 = vector.multi_reduction <add>, %101, %cst_42 [1] : vector<8x8xf32> to vector<8xf32>
    %103 = vector.shape_cast %102 : vector<8xf32> to vector<8x1xf32>
    %104 = arith.truncf %101 : vector<8x8xf32> to vector<8x8xbf16>
    %cst_43 = arith.constant dense<0.000000e+00> : vector<8x128xf32>
    %105 = tpu.matmul %104, %95, %cst_43 {dimension_numbers = #tpu.dot_dimension_numbers<[1], [0], [0], [1], [0, 0, 1, 1], [], []>} : vector<8x8xbf16>, vector<8x128xbf16>, vector<8x128xf32> -> vector<8x128xf32>
    %106 = tpu.reciprocal %103 {approx = true} : vector<8x1xf32> -> vector<8x1xf32>
    %107 = vector.broadcast %106 : vector<8x1xf32> to vector<8x128xf32>
    %108 = arith.mulf %105, %107 : vector<8x128xf32>
    %109 = tpu.concatenate %92, %108 in 1 : vector<8x128xf32>, vector<8x128xf32> -> vector<8x256xf32>
    %110 = vector.extract_strided_slice %47 {offsets = [8, 0], sizes = [8, 128], strides = [1, 1]} : vector<16x128xbf16> to vector<8x128xbf16>
    %111 = vector.extract_strided_slice %56 {offsets = [8, 0], sizes = [8, 128], strides = [1, 1]} : vector<16x128xbf16> to vector<8x128xbf16>
    %112 = vector.extract_strided_slice %36 {offsets = [8, 0], sizes = [8, 128], strides = [1, 1]} : vector<16x256xbf16> to vector<8x128xbf16>
    %cst_44 = arith.constant dense<0.000000e+00> : vector<8x8xf32>
    %113 = tpu.matmul %110, %111, %cst_44 {dimension_numbers = #tpu.dot_dimension_numbers<[1], [1], [0], [0], [0, 0, 1, 0], [], []>} : vector<8x128xbf16>, vector<8x128xbf16>, vector<8x8xf32> -> vector<8x8xf32>
    %cst_45 = arith.constant dense<0xFF800000> : vector<8xf32>
    %114 = vector.multi_reduction <maximumf>, %113, %cst_45 [1] : vector<8x8xf32> to vector<8xf32>
    %115 = vector.shape_cast %114 : vector<8xf32> to vector<8x1xf32>
    %116 = vector.broadcast %115 : vector<8x1xf32> to vector<8x8xf32>
    %117 = arith.subf %113, %116 : vector<8x8xf32>
    %118 = math.exp %117 : vector<8x8xf32>
    %cst_46 = arith.constant dense<0.000000e+00> : vector<8xf32>
    %119 = vector.multi_reduction <add>, %118, %cst_46 [1] : vector<8x8xf32> to vector<8xf32>
    %120 = vector.shape_cast %119 : vector<8xf32> to vector<8x1xf32>
    %121 = arith.truncf %118 : vector<8x8xf32> to vector<8x8xbf16>
    %cst_47 = arith.constant dense<0.000000e+00> : vector<8x128xf32>
    %122 = tpu.matmul %121, %112, %cst_47 {dimension_numbers = #tpu.dot_dimension_numbers<[1], [0], [0], [1], [0, 0, 1, 1], [], []>} : vector<8x8xbf16>, vector<8x128xbf16>, vector<8x128xf32> -> vector<8x128xf32>
    %123 = tpu.reciprocal %120 {approx = true} : vector<8x1xf32> -> vector<8x1xf32>
    %124 = vector.broadcast %123 : vector<8x1xf32> to vector<8x128xf32>
    %125 = arith.mulf %122, %124 : vector<8x128xf32>
    %126 = vector.extract_strided_slice %67 {offsets = [8, 0], sizes = [8, 128], strides = [1, 1]} : vector<16x128xbf16> to vector<8x128xbf16>
    %127 = vector.extract_strided_slice %76 {offsets = [8, 0], sizes = [8, 128], strides = [1, 1]} : vector<16x128xbf16> to vector<8x128xbf16>
    %128 = vector.extract_strided_slice %36 {offsets = [8, 128], sizes = [8, 128], strides = [1, 1]} : vector<16x256xbf16> to vector<8x128xbf16>
    %cst_48 = arith.constant dense<0.000000e+00> : vector<8x8xf32>
    %129 = tpu.matmul %126, %127, %cst_48 {dimension_numbers = #tpu.dot_dimension_numbers<[1], [1], [0], [0], [0, 0, 1, 0], [], []>} : vector<8x128xbf16>, vector<8x128xbf16>, vector<8x8xf32> -> vector<8x8xf32>
    %cst_49 = arith.constant dense<0xFF800000> : vector<8xf32>
    %130 = vector.multi_reduction <maximumf>, %129, %cst_49 [1] : vector<8x8xf32> to vector<8xf32>
    %131 = vector.shape_cast %130 : vector<8xf32> to vector<8x1xf32>
    %132 = vector.broadcast %131 : vector<8x1xf32> to vector<8x8xf32>
    %133 = arith.subf %129, %132 : vector<8x8xf32>
    %134 = math.exp %133 : vector<8x8xf32>
    %cst_50 = arith.constant dense<0.000000e+00> : vector<8xf32>
    %135 = vector.multi_reduction <add>, %134, %cst_50 [1] : vector<8x8xf32> to vector<8xf32>
    %136 = vector.shape_cast %135 : vector<8xf32> to vector<8x1xf32>
    %137 = arith.truncf %134 : vector<8x8xf32> to vector<8x8xbf16>
    %cst_51 = arith.constant dense<0.000000e+00> : vector<8x128xf32>
    %138 = tpu.matmul %137, %128, %cst_51 {dimension_numbers = #tpu.dot_dimension_numbers<[1], [0], [0], [1], [0, 0, 1, 1], [], []>} : vector<8x8xbf16>, vector<8x128xbf16>, vector<8x128xf32> -> vector<8x128xf32>
    %139 = tpu.reciprocal %136 {approx = true} : vector<8x1xf32> -> vector<8x1xf32>
    %140 = vector.broadcast %139 : vector<8x1xf32> to vector<8x128xf32>
    %141 = arith.mulf %138, %140 : vector<8x128xf32>
    %142 = tpu.concatenate %125, %141 in 1 : vector<8x128xf32>, vector<8x128xf32> -> vector<8x256xf32>
    %143 = tpu.concatenate %109, %142 in 0 : vector<8x256xf32>, vector<8x256xf32> -> vector<16x256xf32>
    %144 = arith.truncf %143 : vector<16x256xf32> to vector<16x256xbf16>
    %145 = arith.index_cast %arg1 : i32 to index
    %c0_52 = arith.constant 0 : index
    %c0_53 = arith.constant 0 : index
    %146 = vector.load %arg11[%145, %c0_52, %c0_53] : memref<2x256x512xbf16, #tpu.memory_space<vmem>>, vector<1x256x512xbf16>
    %147 = vector.shape_cast %146 : vector<1x256x512xbf16> to vector<256x512xbf16>
    %cst_54 = arith.constant dense<0.000000e+00> : vector<16x512xf32>
    %148 = tpu.matmul %144, %147, %cst_54 {dimension_numbers = #tpu.dot_dimension_numbers<[1], [0], [0], [1], [0, 0, 1, 1], [], []>} : vector<16x256xbf16>, vector<256x512xbf16>, vector<16x512xf32> -> vector<16x512xf32>
    %149 = vector.shape_cast %148 : vector<16x512xf32> to vector<2x8x512xf32>
    %c0_i32 = arith.constant 0 : i32
    %150 = arith.cmpi eq, %arg1, %c0_i32 : i32
    %151 = arith.extui %150 : i1 to i32
    %c0_i32_55 = arith.constant 0 : i32
    %152 = arith.cmpi ne, %151, %c0_i32_55 : i32
    scf.if %152 {
      %c0_60 = arith.constant 0 : index
      %c0_61 = arith.constant 0 : index
      %c0_62 = arith.constant 0 : index
      %159 = vector.load %arg17[%c0_60, %c0_61, %c0_62] : memref<2x8x512xf32, #tpu.memory_space<vmem>>, vector<2x8x512xf32>
      tpu.vector_store %arg17[%c0_60, %c0_61, %c0_62], %149 {strides = array<i32>} : memref<2x8x512xf32, #tpu.memory_space<vmem>>, vector<2x8x512xf32>,
    } else {
    }
    %c0_i32_56 = arith.constant 0 : i32
    %153 = arith.cmpi ne, %arg1, %c0_i32_56 : i32
    %154 = arith.extui %153 : i1 to i32
    %c0_i32_57 = arith.constant 0 : i32
    %155 = arith.cmpi ne, %154, %c0_i32_57 : i32
    scf.if %155 {
      %c0_60 = arith.constant 0 : index
      %c0_61 = arith.constant 0 : index
      %c0_62 = arith.constant 0 : index
      %159 = vector.load %arg17[%c0_60, %c0_61, %c0_62] : memref<2x8x512xf32, #tpu.memory_space<vmem>>, vector<2x8x512xf32>
      %160 = arith.addf %159, %149 : vector<2x8x512xf32>
      %c0_63 = arith.constant 0 : index
      %c0_64 = arith.constant 0 : index
      %c0_65 = arith.constant 0 : index
      %161 = vector.load %arg17[%c0_63, %c0_64, %c0_65] : memref<2x8x512xf32, #tpu.memory_space<vmem>>, vector<2x8x512xf32>
      tpu.vector_store %arg17[%c0_63, %c0_64, %c0_65], %160 {strides = array<i32>} : memref<2x8x512xf32, #tpu.memory_space<vmem>>, vector<2x8x512xf32>,
    } else {
    }
    %c1_i32_58 = arith.constant 1 : i32
    %156 = arith.cmpi eq, %arg1, %c1_i32_58 : i32
    %157 = arith.extui %156 : i1 to i32
    %c0_i32_59 = arith.constant 0 : i32
    %158 = arith.cmpi ne, %157, %c0_i32_59 : i32
    scf.if %158 {
      %c0_60 = arith.constant 0 : index
      %c0_61 = arith.constant 0 : index
      %c0_62 = arith.constant 0 : index
      %159 = vector.load %arg17[%c0_60, %c0_61, %c0_62] : memref<2x8x512xf32, #tpu.memory_space<vmem>>, vector<2x8x512xf32>
      %c0_63 = arith.constant 0 : index
      %c0_64 = arith.constant 0 : index
      %160 = vector.load %arg12[%c0_63, %c0_64] : memref<1x512xf32, #tpu.memory_space<vmem>>, vector<1x512xf32>
      %161 = vector.shape_cast %160 : vector<1x512xf32> to vector<1x1x512xf32>
      %162 = vector.broadcast %161 : vector<1x1x512xf32> to vector<2x8x512xf32>
      %163 = arith.addf %159, %162 : vector<2x8x512xf32>
      %c0_65 = arith.constant 0 : index
      %c0_66 = arith.constant 0 : index
      %c0_67 = arith.constant 0 : index
      %164 = vector.load %arg16[%c0_65, %c0_66, %c0_67] : memref<2x8x512xf32, #tpu.memory_space<vmem>>, vector<2x8x512xf32>
      tpu.vector_store %arg16[%c0_65, %c0_66, %c0_67], %163 {strides = array<i32>} : memref<2x8x512xf32, #tpu.memory_space<vmem>>, vector<2x8x512xf32>,
    } else {
    }
    return
  }
  func.func @transform_0(%arg0: i32, %arg1: i32) -> (i32, i32, i32) {
    %c0_i32 = arith.constant 0 : i32
    %c0_i32_0 = arith.constant 0 : i32
    %c0_i32_1 = arith.constant 0 : i32
    return %arg0, %c0_i32, %c0_i32_0 : i32, i32, i32
  }
  func.func @transform_1(%arg0: i32, %arg1: i32) -> (i32, i32, i32) {
    %c0_i32 = arith.constant 0 : i32
    %c0_i32_0 = arith.constant 0 : i32
    %c0_i32_1 = arith.constant 0 : i32
    return %arg0, %c0_i32, %c0_i32_0 : i32, i32, i32
  }
  func.func @transform_2(%arg0: i32, %arg1: i32) -> (i32, i32, i32) {
    %c0_i32 = arith.constant 0 : i32
    %c0_i32_0 = arith.constant 0 : i32
    %c0_i32_1 = arith.constant 0 : i32
    return %arg0, %c0_i32, %c0_i32_0 : i32, i32, i32
  }
  func.func @transform_3(%arg0: i32, %arg1: i32) -> (i32, i32, i32) {
    %c0_i32 = arith.constant 0 : i32
    %c0_i32_0 = arith.constant 0 : i32
    %c0_i32_1 = arith.constant 0 : i32
    %c0_i32_2 = arith.constant 0 : i32
    return %c0_i32, %c0_i32_0, %c0_i32_1 : i32, i32, i32
  }
  func.func @transform_4(%arg0: i32, %arg1: i32) -> (i32, i32, i32) {
    %c0_i32 = arith.constant 0 : i32
    %c0_i32_0 = arith.constant 0 : i32
    %c0_i32_1 = arith.constant 0 : i32
    %c0_i32_2 = arith.constant 0 : i32
    return %c0_i32, %c0_i32_0, %c0_i32_1 : i32, i32, i32
  }
  func.func @transform_5(%arg0: i32, %arg1: i32) -> (i32, i32, i32) {
    %c0_i32 = arith.constant 0 : i32
    %c0_i32_0 = arith.constant 0 : i32
    %c0_i32_1 = arith.constant 0 : i32
    %c0_i32_2 = arith.constant 0 : i32
    return %c0_i32, %c0_i32_0, %c0_i32_1 : i32, i32, i32
  }
  func.func @transform_6(%arg0: i32, %arg1: i32) -> (i32, i32, i32) {
    %c0_i32 = arith.constant 0 : i32
    %c0_i32_0 = arith.constant 0 : i32
    %c0_i32_1 = arith.constant 0 : i32
    %c0_i32_2 = arith.constant 0 : i32
    return %c0_i32, %c0_i32_0, %c0_i32_1 : i32, i32, i32
  }
  func.func @transform_7(%arg0: i32, %arg1: i32) -> (i32, i32, i32) {
    %c0_i32 = arith.constant 0 : i32
    %c0_i32_0 = arith.constant 0 : i32
    %c0_i32_1 = arith.constant 0 : i32
    %c0_i32_2 = arith.constant 0 : i32
    return %c0_i32, %c0_i32_0, %c0_i32_1 : i32, i32, i32
  }
  func.func @transform_8(%arg0: i32, %arg1: i32) -> (i32, i32, i32) {
    %c0_i32 = arith.constant 0 : i32
    %c0_i32_0 = arith.constant 0 : i32
    %c0_i32_1 = arith.constant 0 : i32
    %c0_i32_2 = arith.constant 0 : i32
    return %c0_i32, %c0_i32_0, %c0_i32_1 : i32, i32, i32
  }
  func.func @transform_9(%arg0: i32, %arg1: i32) -> (i32, i32, i32) {
    %c0_i32 = arith.constant 0 : i32
    %c0_i32_0 = arith.constant 0 : i32
    %c0_i32_1 = arith.constant 0 : i32
    %c0_i32_2 = arith.constant 0 : i32
    return %c0_i32, %c0_i32_0, %c0_i32_1 : i32, i32, i32
  }
  func.func @transform_10(%arg0: i32, %arg1: i32) -> (i32, i32) {
    %c0_i32 = arith.constant 0 : i32
    %c0_i32_0 = arith.constant 0 : i32
    %c0_i32_1 = arith.constant 0 : i32
    return %c0_i32, %c0_i32_0 : i32, i32
  }
  func.func @transform_11(%arg0: i32, %arg1: i32) -> (i32, i32) {
    %c0_i32 = arith.constant 0 : i32
    %c0_i32_0 = arith.constant 0 : i32
    %c0_i32_1 = arith.constant 0 : i32
    return %c0_i32, %c0_i32_0 : i32, i32
  }
  func.func @transform_12(%arg0: i32, %arg1: i32) -> (i32, i32) {
    %c0_i32 = arith.constant 0 : i32
    %c0_i32_0 = arith.constant 0 : i32
    %c0_i32_1 = arith.constant 0 : i32
    return %c0_i32, %c0_i32_0 : i32, i32
  }
  func.func @transform_13(%arg0: i32, %arg1: i32) -> (i32, i32) {
    %c0_i32 = arith.constant 0 : i32
    %c0_i32_0 = arith.constant 0 : i32
    %c0_i32_1 = arith.constant 0 : i32
    return %c0_i32, %c0_i32_0 : i32, i32
  }
  func.func @transform_14(%arg0: i32, %arg1: i32) -> (i32, i32, i32) {
    %c0_i32 = arith.constant 0 : i32
    %c0_i32_0 = arith.constant 0 : i32
    %c0_i32_1 = arith.constant 0 : i32
    return %arg0, %c0_i32, %c0_i32_0 : i32, i32, i32
  }
}

</mosaic_0001>

<llo_original>
// kernel: tpu_custom_call.1
$region0: #{tpu_custom_call.1}
  #allocation0 [shape = 'u32[]', space=smem, size = 0x4, offset = 0x4, fixed_abs, tag = 'smem constant byte address 0x4 - core index']
  #allocation1 [shape = 'u32[144,128]{1,0:T(1,128)}', space=vmem, size = 0x12000, scoped, tag = 'internal scratch']
  #allocation2 [shape = 'f32[2,8,512]{2,1,0:T(8,128)}', space=vmem, size = 0x8000, scoped, tag = 'scratch operand']
  %s0 = inlined_call_operand.hbm [shape: bf16[2,8,512], index: 0, kind: input, shape index: {}]
  %s1 = inlined_call_operand.hbm [shape: bf16[2,8,512], index: 1, kind: input, shape index: {}]
  %s2 = inlined_call_operand.hbm [shape: bf16[2,8,512], index: 2, kind: input, shape index: {}]
  %s3 = inlined_call_operand.hbm [shape: bf16[2,512,256], index: 3, kind: input, shape index: {}]
  %s4 = inlined_call_operand.hbm [shape: f32[2,1,256], index: 4, kind: input, shape index: {}]
  %s5 = inlined_call_operand.hbm [shape: bf16[2,512,256], index: 5, kind: input, shape index: {}]
  %s6 = inlined_call_operand.hbm [shape: f32[2,1,256], index: 6, kind: input, shape index: {}]
  %s7 = inlined_call_operand.hbm [shape: bf16[2,512,256], index: 7, kind: input, shape index: {}]
  %s8 = inlined_call_operand.hbm [shape: f32[2,1,256], index: 8, kind: input, shape index: {}]
  %s9 = inlined_call_operand.hbm [shape: bf16[2,256,512], index: 9, kind: input, shape index: {}]
  %s10 = inlined_call_operand.hbm [shape: f32[1,512], index: 10, kind: input, shape index: {}]
  %s11 = inlined_call_operand.hbm [shape: f32[16,128], index: 11, kind: input, shape index: {}]
  %s12 = inlined_call_operand.hbm [shape: f32[16,128], index: 12, kind: input, shape index: {}]
  %s13 = inlined_call_operand.hbm [shape: f32[16,128], index: 13, kind: input, shape index: {}]
  %s14 = inlined_call_operand.hbm [shape: f32[2,8,512], index: 14, kind: output, shape index: {}]
  %s15 = sld [smem:[#allocation0]]
  $region157: #{tpu_custom_call.1} parent=0
    _
  %s17 = ssub.s32 1, %s15
  %s18 = scalar_select 0, %s17, %s15
  $region1: #{tpu_custom_call.1} parent=0
    #allocation3 [shape = 'u8[16384]{0}', space=vmem, size = 0x4000, scoped, tag = 'input window, operand 0, single buffered']
    #allocation4 [shape = 's32[2]{0}', space=sflag, size = 0x8, scoped, tag = 'scoped memory for tpu_custom_call.1']
    #allocation5 [shape = 's32[2]{0}', space=sflag, size = 0x8, scoped, tag = 'scoped memory for tpu_custom_call.1']
    #allocation6 [shape = 'u8[16384]{0}', space=vmem, size = 0x4000, scoped, tag = 'input window, operand 1, single buffered']
    #allocation7 [shape = 's32[1]{0}', space=sflag, size = 0x4, scoped, tag = 'scoped memory for tpu_custom_call.1']
    #allocation8 [shape = 'u8[16384]{0}', space=vmem, size = 0x4000, scoped, tag = 'input window, operand 2, single buffered']
    #allocation9 [shape = 'u8[524288]{0}', space=vmem, size = 0x80000, scoped, tag = 'input window, operand 3, single buffered']
    #allocation10 [shape = 's32[1]{0}', space=sflag, size = 0x4, scoped, tag = 'scoped memory for tpu_custom_call.1']
    #allocation11 [shape = 'u8[2048]{0}', space=vmem, size = 0x800, scoped, tag = 'input window, operand 4, single buffered']
    #allocation12 [shape = 'u8[524288]{0}', space=vmem, size = 0x80000, scoped, tag = 'input window, operand 5, single buffered']
    #allocation13 [shape = 's32[1]{0}', space=sflag, size = 0x4, scoped, tag = 'scoped memory for tpu_custom_call.1']
    #allocation14 [shape = 'u8[2048]{0}', space=vmem, size = 0x800, scoped, tag = 'input window, operand 6, single buffered']
    #allocation15 [shape = 'u8[524288]{0}', space=vmem, size = 0x80000, scoped, tag = 'input window, operand 7, single buffered']
    #allocation16 [shape = 's32[1]{0}', space=sflag, size = 0x4, scoped, tag = 'scoped memory for tpu_custom_call.1']
    #allocation17 [shape = 'u8[2048]{0}', space=vmem, size = 0x800, scoped, tag = 'input window, operand 8, single buffered']
    #allocation18 [shape = 'u8[524288]{0}', space=vmem, size = 0x80000, scoped, tag = 'input window, operand 9, single buffered']
    #allocation19 [shape = 's32[1]{0}', space=sflag, size = 0x4, scoped, tag = 'scoped memory for tpu_custom_call.1']
    #allocation20 [shape = 'u8[2048]{0}', space=vmem, size = 0x800, scoped, tag = 'input window, operand 10, single buffered']
    #allocation21 [shape = 'u8[8192]{0}', space=vmem, size = 0x2000, scoped, tag = 'input window, operand 11, single buffered']
    #allocation22 [shape = 's32[1]{0}', space=sflag, size = 0x4, scoped, tag = 'scoped memory for tpu_custom_call.1']
    #allocation23 [shape = 'u8[8192]{0}', space=vmem, size = 0x2000, scoped, tag = 'input window, operand 12, single buffered']
    #allocation24 [shape = 'u8[8192]{0}', space=vmem, size = 0x2000, scoped, tag = 'input window, operand 13, single buffered']
    #allocation25 [shape = 's32[1]{0}', space=sflag, size = 0x4, scoped, tag = 'scoped memory for tpu_custom_call.1']
    #allocation26 [shape = 'u8[32768]{0}', space=vmem, size = 0x8000, scoped, tag = 'output window, operand 0, single buffered']
    %19 = vsyncpa [#allocation4], 0
    %20 = vsyncpa [#allocation7], 0
    %21 = vsyncpa [#allocation10], 0
    %22 = vsyncpa [#allocation13], 0
    %23 = vsyncpa [#allocation16], 0
    %24 = vsyncpa [#allocation19], 0
    %25 = vsyncpa [#allocation22], 0
    %26 = vsyncpa [#allocation25], 0
    %27 = vsyncpa [#allocation5], 0
    loop: start=0, step=1, limit=4
    $region2: #{tpu_custom_call.1} parent=1 // loop_pre_header
      _
    $region3: #{tpu_custom_call.1} parent=1 // loop_header
      %s29 = sphi 0, %s33
      %p30 = scmp.ge.s32.totalorder %s29, 4
      %s36 = sphi 0, %s48
      %s37 = sphi 0, %s44
      %s38 = sphi 0, %s36
      %s39 = sphi 0, %s37
      %s40 = sphi 0, %s38
      %s41 = sphi 0, %s39
      %s51 = sphi 0, %s53
      %s54 = sphi 0, %s51
      %s55 = sphi 0, %s54
      %s71 = sphi 0, %s55
      %s77 = sphi 0, %s79
      %s80 = sphi 0, %s77
      %s81 = sphi 0, %s80
      %s97 = sphi 0, %s81
      %s103 = sphi 0, %s105
      %s106 = sphi 0, %s103
      %s107 = sphi 0, %s106
      %s123 = sphi 0, %s107
      %s127 = sphi 0, %s127
      %s129 = sphi 0, %s127
      %s130 = sphi 0, %s129
      %s144 = sphi 0, %s130
      %s148 = sphi 0, %s148
      %s150 = sphi 0, %s148
      %s151 = sphi 0, %s150
      %s165 = sphi 0, %s151
      %s169 = sphi 0, %s169
      %s171 = sphi 0, %s169
      %s172 = sphi 0, %s171
      %s186 = sphi 0, %s172
      %s190 = sphi 0, %s190
      %s192 = sphi 0, %s190
      %s193 = sphi 0, %s192
      %s207 = sphi 0, %s193
      %s211 = sphi 0, %s211
      %s213 = sphi 0, %s211
      %s214 = sphi 0, %s213
      %s228 = sphi 0, %s214
      %s232 = sphi 0, %s232
      %s234 = sphi 0, %s232
      %s235 = sphi 0, %s234
      %s249 = sphi 0, %s235
      %s253 = sphi 0, %s253
      %s255 = sphi 0, %s253
      %s256 = sphi 0, %s255
      %s270 = sphi 0, %s256
      %s274 = sphi 0, %s274
      %s276 = sphi 0, %s274
      %s277 = sphi 0, %s276
      %s291 = sphi 0, %s277
      %s295 = sphi 0, %s295
      %s297 = sphi 0, %s295
      %s298 = sphi 0, %s297
      %s312 = sphi 0, %s298
      %s316 = sphi 0, %s316
      %s318 = sphi 0, %s316
      %s319 = sphi 0, %s318
      %s333 = sphi 0, %s319
      %s337 = sphi 0, %s337
      %s339 = sphi 0, %s337
      %s340 = sphi 0, %s339
      %s354 = sphi 0, %s340
      %s360 = sphi 0, %s362
      %s363 = sphi 0, %s360
      %s364 = sphi 0, %s363
      %s380 = sphi 0, %s364
    $region4: #{tpu_custom_call.1} parent=1 // loop_header_branch
      %32 = sbr.rel (%p30) target = $region8
    $region5: #{tpu_custom_call.1} parent=1 // loop_body
      %s34 = ssub.s32 %s29, 1
      %s35 = ssub.s32 %s29, 2
      %s42 = sadd.s32 1, %s37
      %p43 = scmp.ge.s32.totalorder %s42, 2
      %s44 = scalar_select %p43, 0, %s42
      %s45 = sadd.s32 1, %s36
      %s46 = scalar_select %p43, %s45, %s36
      %p47 = scmp.ge.s32.totalorder %s46, 1
      %s48 = scalar_select %p47, 0, %s46
      %s49 = ssub.s32 %s36, %s48
      %p50 = scmp.eq.s32.totalorder %s49, 0
      %s52 = sadd.s32 %s51, 1
      %s53 = scalar_select %p50, %s51, %s52
      %p56 = pneg %p50
      %p57 = scmp.eq.s32.totalorder %s29, 1
      %p58 = por %p56, %p57
      %p59 = scmp.ne.s32.totalorder %s51, %s54
      %p60 = scmp.eq.s32.totalorder %s29, 0
      %p61 = por %p59, %p60
      %p62 = scmp.ne.s32.totalorder %s51, %s54
      %p63 = scmp.eq.s32.totalorder %s34, 1
      %p64 = por %p62, %p63
      %p65 = scmp.ne.s32.totalorder %s54, %s55
      %p66 = scmp.eq.s32.totalorder %s34, 0
      %p67 = por %p65, %p66
      %p68 = scmp.ne.s32.totalorder %s54, %s55
      %p69 = scmp.eq.s32.totalorder %s35, 1
      %p70 = por %p68, %p69
      %p72 = scmp.ne.s32.totalorder %s55, %s71
      %p73 = scmp.eq.s32.totalorder %s35, 0
      %p74 = por %p72, %p73
      %s75 = ssub.s32 %s36, %s48
      %p76 = scmp.eq.s32.totalorder %s75, 0
      %s78 = sadd.s32 %s77, 1
      %s79 = scalar_select %p76, %s77, %s78
      %p82 = pneg %p76
      %p83 = scmp.eq.s32.totalorder %s29, 1
      %p84 = por %p82, %p83
      %p85 = scmp.ne.s32.totalorder %s77, %s80
      %p86 = scmp.eq.s32.totalorder %s29, 0
      %p87 = por %p85, %p86
      %p88 = scmp.ne.s32.totalorder %s77, %s80
      %p89 = scmp.eq.s32.totalorder %s34, 1
      %p90 = por %p88, %p89
      %p91 = scmp.ne.s32.totalorder %s80, %s81
      %p92 = scmp.eq.s32.totalorder %s34, 0
      %p93 = por %p91, %p92
      %p94 = scmp.ne.s32.totalorder %s80, %s81
      %p95 = scmp.eq.s32.totalorder %s35, 1
      %p96 = por %p94, %p95
      %p98 = scmp.ne.s32.totalorder %s81, %s97
      %p99 = scmp.eq.s32.totalorder %s35, 0
      %p100 = por %p98, %p99
      %s101 = ssub.s32 %s36, %s48
      %p102 = scmp.eq.s32.totalorder %s101, 0
      %s104 = sadd.s32 %s103, 1
      %s105 = scalar_select %p102, %s103, %s104
      %p108 = pneg %p102
      %p109 = scmp.eq.s32.totalorder %s29, 1
      %p110 = por %p108, %p109
      %p111 = scmp.ne.s32.totalorder %s103, %s106
      %p112 = scmp.eq.s32.totalorder %s29, 0
      %p113 = por %p111, %p112
      %p114 = scmp.ne.s32.totalorder %s103, %s106
      %p115 = scmp.eq.s32.totalorder %s34, 1
      %p116 = por %p114, %p115
      %p117 = scmp.ne.s32.totalorder %s106, %s107
      %p118 = scmp.eq.s32.totalorder %s34, 0
      %p119 = por %p117, %p118
      %p120 = scmp.ne.s32.totalorder %s106, %s107
      %p121 = scmp.eq.s32.totalorder %s35, 1
      %p122 = por %p120, %p121
      %p124 = scmp.ne.s32.totalorder %s107, %s123
      %p125 = scmp.eq.s32.totalorder %s35, 0
      %p126 = por %p124, %p125
      %s128 = sadd.s32 %s127, 1
      %p131 = scmp.eq.s32.totalorder %s29, 1
      %p132 = scmp.ne.s32.totalorder %s127, %s129
      %p133 = scmp.eq.s32.totalorder %s29, 0
      %p134 = por %p132, %p133
      %p135 = scmp.ne.s32.totalorder %s127, %s129
      %p136 = scmp.eq.s32.totalorder %s34, 1
      %p137 = por %p135, %p136
      %p138 = scmp.ne.s32.totalorder %s129, %s130
      %p139 = scmp.eq.s32.totalorder %s34, 0
      %p140 = por %p138, %p139
      %p141 = scmp.ne.s32.totalorder %s129, %s130
      %p142 = scmp.eq.s32.totalorder %s35, 1
      %p143 = por %p141, %p142
      %p145 = scmp.ne.s32.totalorder %s130, %s144
      %p146 = scmp.eq.s32.totalorder %s35, 0
      %p147 = por %p145, %p146
      %s149 = sadd.s32 %s148, 1
      %p152 = scmp.eq.s32.totalorder %s29, 1
      %p153 = scmp.ne.s32.totalorder %s148, %s150
      %p154 = scmp.eq.s32.totalorder %s29, 0
      %p155 = por %p153, %p154
      %p156 = scmp.ne.s32.totalorder %s148, %s150
      %p157 = scmp.eq.s32.totalorder %s34, 1
      %p158 = por %p156, %p157
      %p159 = scmp.ne.s32.totalorder %s150, %s151
      %p160 = scmp.eq.s32.totalorder %s34, 0
      %p161 = por %p159, %p160
      %p162 = scmp.ne.s32.totalorder %s150, %s151
      %p163 = scmp.eq.s32.totalorder %s35, 1
      %p164 = por %p162, %p163
      %p166 = scmp.ne.s32.totalorder %s151, %s165
      %p167 = scmp.eq.s32.totalorder %s35, 0
      %p168 = por %p166, %p167
      %s170 = sadd.s32 %s169, 1
      %p173 = scmp.eq.s32.totalorder %s29, 1
      %p174 = scmp.ne.s32.totalorder %s169, %s171
      %p175 = scmp.eq.s32.totalorder %s29, 0
      %p176 = por %p174, %p175
      %p177 = scmp.ne.s32.totalorder %s169, %s171
      %p178 = scmp.eq.s32.totalorder %s34, 1
      %p179 = por %p177, %p178
      %p180 = scmp.ne.s32.totalorder %s171, %s172
      %p181 = scmp.eq.s32.totalorder %s34, 0
      %p182 = por %p180, %p181
      %p183 = scmp.ne.s32.totalorder %s171, %s172
      %p184 = scmp.eq.s32.totalorder %s35, 1
      %p185 = por %p183, %p184
      %p187 = scmp.ne.s32.totalorder %s172, %s186
      %p188 = scmp.eq.s32.totalorder %s35, 0
      %p189 = por %p187, %p188
      %s191 = sadd.s32 %s190, 1
      %p194 = scmp.eq.s32.totalorder %s29, 1
      %p195 = scmp.ne.s32.totalorder %s190, %s192
      %p196 = scmp.eq.s32.totalorder %s29, 0
      %p197 = por %p195, %p196
      %p198 = scmp.ne.s32.totalorder %s190, %s192
      %p199 = scmp.eq.s32.totalorder %s34, 1
      %p200 = por %p198, %p199
      %p201 = scmp.ne.s32.totalorder %s192, %s193
      %p202 = scmp.eq.s32.totalorder %s34, 0
      %p203 = por %p201, %p202
      %p204 = scmp.ne.s32.totalorder %s192, %s193
      %p205 = scmp.eq.s32.totalorder %s35, 1
      %p206 = por %p204, %p205
      %p208 = scmp.ne.s32.totalorder %s193, %s207
      %p209 = scmp.eq.s32.totalorder %s35, 0
      %p210 = por %p208, %p209
      %s212 = sadd.s32 %s211, 1
      %p215 = scmp.eq.s32.totalorder %s29, 1
      %p216 = scmp.ne.s32.totalorder %s211, %s213
      %p217 = scmp.eq.s32.totalorder %s29, 0
      %p218 = por %p216, %p217
      %p219 = scmp.ne.s32.totalorder %s211, %s213
      %p220 = scmp.eq.s32.totalorder %s34, 1
      %p221 = por %p219, %p220
      %p222 = scmp.ne.s32.totalorder %s213, %s214
      %p223 = scmp.eq.s32.totalorder %s34, 0
      %p224 = por %p222, %p223
      %p225 = scmp.ne.s32.totalorder %s213, %s214
      %p226 = scmp.eq.s32.totalorder %s35, 1
      %p227 = por %p225, %p226
      %p229 = scmp.ne.s32.totalorder %s214, %s228
      %p230 = scmp.eq.s32.totalorder %s35, 0
      %p231 = por %p229, %p230
      %s233 = sadd.s32 %s232, 1
      %p236 = scmp.eq.s32.totalorder %s29, 1
      %p237 = scmp.ne.s32.totalorder %s232, %s234
      %p238 = scmp.eq.s32.totalorder %s29, 0
      %p239 = por %p237, %p238
      %p240 = scmp.ne.s32.totalorder %s232, %s234
      %p241 = scmp.eq.s32.totalorder %s34, 1
      %p242 = por %p240, %p241
      %p243 = scmp.ne.s32.totalorder %s234, %s235
      %p244 = scmp.eq.s32.totalorder %s34, 0
      %p245 = por %p243, %p244
      %p246 = scmp.ne.s32.totalorder %s234, %s235
      %p247 = scmp.eq.s32.totalorder %s35, 1
      %p248 = por %p246, %p247
      %p250 = scmp.ne.s32.totalorder %s235, %s249
      %p251 = scmp.eq.s32.totalorder %s35, 0
      %p252 = por %p250, %p251
      %s254 = sadd.s32 %s253, 1
      %p257 = scmp.eq.s32.totalorder %s29, 1
      %p258 = scmp.ne.s32.totalorder %s253, %s255
      %p259 = scmp.eq.s32.totalorder %s29, 0
      %p260 = por %p258, %p259
      %p261 = scmp.ne.s32.totalorder %s253, %s255
      %p262 = scmp.eq.s32.totalorder %s34, 1
      %p263 = por %p261, %p262
      %p264 = scmp.ne.s32.totalorder %s255, %s256
      %p265 = scmp.eq.s32.totalorder %s34, 0
      %p266 = por %p264, %p265
      %p267 = scmp.ne.s32.totalorder %s255, %s256
      %p268 = scmp.eq.s32.totalorder %s35, 1
      %p269 = por %p267, %p268
      %p271 = scmp.ne.s32.totalorder %s256, %s270
      %p272 = scmp.eq.s32.totalorder %s35, 0
      %p273 = por %p271, %p272
      %s275 = sadd.s32 %s274, 1
      %p278 = scmp.eq.s32.totalorder %s29, 1
      %p279 = scmp.ne.s32.totalorder %s274, %s276
      %p280 = scmp.eq.s32.totalorder %s29, 0
      %p281 = por %p279, %p280
      %p282 = scmp.ne.s32.totalorder %s274, %s276
      %p283 = scmp.eq.s32.totalorder %s34, 1
      %p284 = por %p282, %p283
      %p285 = scmp.ne.s32.totalorder %s276, %s277
      %p286 = scmp.eq.s32.totalorder %s34, 0
      %p287 = por %p285, %p286
      %p288 = scmp.ne.s32.totalorder %s276, %s277
      %p289 = scmp.eq.s32.totalorder %s35, 1
      %p290 = por %p288, %p289
      %p292 = scmp.ne.s32.totalorder %s277, %s291
      %p293 = scmp.eq.s32.totalorder %s35, 0
      %p294 = por %p292, %p293
      %s296 = sadd.s32 %s295, 1
      %p299 = scmp.eq.s32.totalorder %s29, 1
      %p300 = scmp.ne.s32.totalorder %s295, %s297
      %p301 = scmp.eq.s32.totalorder %s29, 0
      %p302 = por %p300, %p301
      %p303 = scmp.ne.s32.totalorder %s295, %s297
      %p304 = scmp.eq.s32.totalorder %s34, 1
      %p305 = por %p303, %p304
      %p306 = scmp.ne.s32.totalorder %s297, %s298
      %p307 = scmp.eq.s32.totalorder %s34, 0
      %p308 = por %p306, %p307
      %p309 = scmp.ne.s32.totalorder %s297, %s298
      %p310 = scmp.eq.s32.totalorder %s35, 1
      %p311 = por %p309, %p310
      %p313 = scmp.ne.s32.totalorder %s298, %s312
      %p314 = scmp.eq.s32.totalorder %s35, 0
      %p315 = por %p313, %p314
      %s317 = sadd.s32 %s316, 1
      %p320 = scmp.eq.s32.totalorder %s29, 1
      %p321 = scmp.ne.s32.totalorder %s316, %s318
      %p322 = scmp.eq.s32.totalorder %s29, 0
      %p323 = por %p321, %p322
      %p324 = scmp.ne.s32.totalorder %s316, %s318
      %p325 = scmp.eq.s32.totalorder %s34, 1
      %p326 = por %p324, %p325
      %p327 = scmp.ne.s32.totalorder %s318, %s319
      %p328 = scmp.eq.s32.totalorder %s34, 0
      %p329 = por %p327, %p328
      %p330 = scmp.ne.s32.totalorder %s318, %s319
      %p331 = scmp.eq.s32.totalorder %s35, 1
      %p332 = por %p330, %p331
      %p334 = scmp.ne.s32.totalorder %s319, %s333
      %p335 = scmp.eq.s32.totalorder %s35, 0
      %p336 = por %p334, %p335
      %s338 = sadd.s32 %s337, 1
      %p341 = scmp.eq.s32.totalorder %s29, 1
      %p342 = scmp.ne.s32.totalorder %s337, %s339
      %p343 = scmp.eq.s32.totalorder %s29, 0
      %p344 = por %p342, %p343
      %p345 = scmp.ne.s32.totalorder %s337, %s339
      %p346 = scmp.eq.s32.totalorder %s34, 1
      %p347 = por %p345, %p346
      %p348 = scmp.ne.s32.totalorder %s339, %s340
      %p349 = scmp.eq.s32.totalorder %s34, 0
      %p350 = por %p348, %p349
      %p351 = scmp.ne.s32.totalorder %s339, %s340
      %p352 = scmp.eq.s32.totalorder %s35, 1
      %p353 = por %p351, %p352
      %p355 = scmp.ne.s32.totalorder %s340, %s354
      %p356 = scmp.eq.s32.totalorder %s35, 0
      %p357 = por %p355, %p356
      %s358 = ssub.s32 %s36, %s48
      %p359 = scmp.eq.s32.totalorder %s358, 0
      %s361 = sadd.s32 %s360, 1
      %s362 = scalar_select %p359, %s360, %s361
      %p365 = pneg %p359
      %p366 = scmp.eq.s32.totalorder %s29, 1
      %p367 = por %p365, %p366
      %p368 = scmp.ne.s32.totalorder %s360, %s363
      %p369 = scmp.eq.s32.totalorder %s29, 0
      %p370 = por %p368, %p369
      %p371 = scmp.ne.s32.totalorder %s360, %s363
      %p372 = scmp.eq.s32.totalorder %s34, 1
      %p373 = por %p371, %p372
      %p374 = scmp.ne.s32.totalorder %s363, %s364
      %p375 = scmp.eq.s32.totalorder %s34, 0
      %p376 = por %p374, %p375
      %p377 = scmp.ne.s32.totalorder %s363, %s364
      %p378 = scmp.eq.s32.totalorder %s35, 1
      %p379 = por %p377, %p378
      %p381 = scmp.ne.s32.totalorder %s364, %s380
      %p382 = scmp.eq.s32.totalorder %s35, 0
      %p383 = por %p381, %p382
      %p384 = scmp.le.s32.totalorder 1, %s29
      %p385 = scmp.lt.s32.totalorder %s29, 3
      %p386 = pnand %p384, %p385
      %p387 = pneg %p386
      // Predicated region
      $region9: #{tpu_custom_call.1} parent=5 // pred_check
        _
      $region10: #{tpu_custom_call.1} parent=5 // pred_check_branch
        %389 = sbr.rel (%p386) target = $region12
      $region11: #{tpu_custom_call.1} parent=5 // pred_region
        %s390 = ssub.s32 %s29, 1
        // Predicated region
        $region13: #{tpu_custom_call.1} parent=11 // pred_check
          %p391 = pneg %p67
        $region14: #{tpu_custom_call.1} parent=11 // pred_check_branch
          %393 = sbr.rel (%p391) target = $region16
        $region15: #{tpu_custom_call.1} parent=11 // pred_region
          %s394 = smul.u32 2, %s38
          %s396 = ssub.s32 512, 512
          %397 = vsyncadd [#allocation4], %s396
          %s398 = smul.addr %s394, 4
          %s399 = smul.addr %s398, 64
          %s400 = scalar_lea.hbm %s0, %s399
          %s401 = sshll.u32 [#allocation3], 4
          %s402 = int_to_ptr.vmem [resolvable:$true] %s401
          %407 = dma.hbm_to_vmem [thread:$0]  %s400, 512, %s402, [#allocation4], 256, 256, 16
        $region16: #{tpu_custom_call.1} parent=11 // pred_fallthru
          _
        // Predicated region
        $region17: #{tpu_custom_call.1} parent=11 // pred_check
          %p408 = pneg %p93
        $region18: #{tpu_custom_call.1} parent=11 // pred_check_branch
          %410 = sbr.rel (%p408) target = $region20
        $region19: #{tpu_custom_call.1} parent=11 // pred_region
          %s411 = smul.u32 2, %s38
          %s413 = ssub.s32 512, 512
          %414 = vsyncadd [#allocation7], %s413
          %s415 = smul.addr %s411, 4
          %s416 = smul.addr %s415, 64
          %s417 = scalar_lea.hbm %s1, %s416
          %s418 = sshll.u32 [#allocation6], 4
          %s419 = int_to_ptr.vmem [resolvable:$true] %s418
          %424 = dma.hbm_to_vmem [thread:$0]  %s417, 512, %s419, [#allocation7], 256, 256, 16
        $region20: #{tpu_custom_call.1} parent=11 // pred_fallthru
          _
        // Predicated region
        $region21: #{tpu_custom_call.1} parent=11 // pred_check
          %p425 = pneg %p119
        $region22: #{tpu_custom_call.1} parent=11 // pred_check_branch
          %427 = sbr.rel (%p425) target = $region24
        $region23: #{tpu_custom_call.1} parent=11 // pred_region
          %s428 = smul.u32 2, %s38
          %s430 = ssub.s32 512, 512
          %431 = vsyncadd [#allocation7], %s430
          %s432 = smul.addr %s428, 4
          %s433 = smul.addr %s432, 64
          %s434 = scalar_lea.hbm %s2, %s433
          %s435 = sshll.u32 [#allocation8], 4
          %s436 = int_to_ptr.vmem [resolvable:$true] %s435
          %441 = dma.hbm_to_vmem [thread:$0]  %s434, 512, %s436, [#allocation7], 256, 256, 16
        $region24: #{tpu_custom_call.1} parent=11 // pred_fallthru
          _
        // Predicated region
        $region25: #{tpu_custom_call.1} parent=11 // pred_check
          %p442 = pneg %p140
        $region26: #{tpu_custom_call.1} parent=11 // pred_check_branch
          %444 = sbr.rel (%p442) target = $region28
        $region27: #{tpu_custom_call.1} parent=11 // pred_region
          %s446 = ssub.s32 16384, 16384
          %447 = vsyncadd [#allocation10], %s446
          %s448 = sshll.u32 [#allocation9], 4
          %s449 = int_to_ptr.vmem [resolvable:$true] %s448
          %454 = dma.hbm_to_vmem [thread:$0]  %s3, 16384, %s449, [#allocation10], 128, 128, 8
        $region28: #{tpu_custom_call.1} parent=11 // pred_fallthru
          _
        // Predicated region
        $region29: #{tpu_custom_call.1} parent=11 // pred_check
          %p455 = pneg %p161
        $region30: #{tpu_custom_call.1} parent=11 // pred_check_branch
          %457 = sbr.rel (%p455) target = $region32
        $region31: #{tpu_custom_call.1} parent=11 // pred_region
          %s459 = ssub.s32 64, 64
          %460 = vsyncadd [#allocation10], %s459
          %s461 = sshll.u32 [#allocation11], 4
          %s462 = int_to_ptr.vmem [resolvable:$true] %s461
          %467 = dma.hbm_to_vmem [thread:$0]  %s4, 64, %s462, [#allocation10], 32, 32, 2
        $region32: #{tpu_custom_call.1} parent=11 // pred_fallthru
          _
        // Predicated region
        $region33: #{tpu_custom_call.1} parent=11 // pred_check
          %p468 = pneg %p182
        $region34: #{tpu_custom_call.1} parent=11 // pred_check_branch
          %470 = sbr.rel (%p468) target = $region36
        $region35: #{tpu_custom_call.1} parent=11 // pred_region
          %s472 = ssub.s32 16384, 16384
          %473 = vsyncadd [#allocation13], %s472
          %s474 = sshll.u32 [#allocation12], 4
          %s475 = int_to_ptr.vmem [resolvable:$true] %s474
          %480 = dma.hbm_to_vmem [thread:$0]  %s5, 16384, %s475, [#allocation13], 128, 128, 8
        $region36: #{tpu_custom_call.1} parent=11 // pred_fallthru
          _
        // Predicated region
        $region37: #{tpu_custom_call.1} parent=11 // pred_check
          %p481 = pneg %p203
        $region38: #{tpu_custom_call.1} parent=11 // pred_check_branch
          %483 = sbr.rel (%p481) target = $region40
        $region39: #{tpu_custom_call.1} parent=11 // pred_region
          %s485 = ssub.s32 64, 64
          %486 = vsyncadd [#allocation13], %s485
          %s487 = sshll.u32 [#allocation14], 4
          %s488 = int_to_ptr.vmem [resolvable:$true] %s487
          %493 = dma.hbm_to_vmem [thread:$0]  %s6, 64, %s488, [#allocation13], 32, 32, 2
        $region40: #{tpu_custom_call.1} parent=11 // pred_fallthru
          _
        // Predicated region
        $region41: #{tpu_custom_call.1} parent=11 // pred_check
          %p494 = pneg %p224
        $region42: #{tpu_custom_call.1} parent=11 // pred_check_branch
          %496 = sbr.rel (%p494) target = $region44
        $region43: #{tpu_custom_call.1} parent=11 // pred_region
          %s498 = ssub.s32 16384, 16384
          %499 = vsyncadd [#allocation16], %s498
          %s500 = sshll.u32 [#allocation15], 4
          %s501 = int_to_ptr.vmem [resolvable:$true] %s500
          %506 = dma.hbm_to_vmem [thread:$0]  %s7, 16384, %s501, [#allocation16], 128, 128, 8
        $region44: #{tpu_custom_call.1} parent=11 // pred_fallthru
          _
        // Predicated region
        $region45: #{tpu_custom_call.1} parent=11 // pred_check
          %p507 = pneg %p245
        $region46: #{tpu_custom_call.1} parent=11 // pred_check_branch
          %509 = sbr.rel (%p507) target = $region48
        $region47: #{tpu_custom_call.1} parent=11 // pred_region
          %s511 = ssub.s32 64, 64
          %512 = vsyncadd [#allocation16], %s511
          %s513 = sshll.u32 [#allocation17], 4
          %s514 = int_to_ptr.vmem [resolvable:$true] %s513
          %519 = dma.hbm_to_vmem [thread:$0]  %s8, 64, %s514, [#allocation16], 32, 32, 2
        $region48: #{tpu_custom_call.1} parent=11 // pred_fallthru
          _
        // Predicated region
        $region49: #{tpu_custom_call.1} parent=11 // pred_check
          %p520 = pneg %p266
        $region50: #{tpu_custom_call.1} parent=11 // pred_check_branch
          %522 = sbr.rel (%p520) target = $region52
        $region51: #{tpu_custom_call.1} parent=11 // pred_region
          %s524 = ssub.s32 16384, 16384
          %525 = vsyncadd [#allocation19], %s524
          %s526 = sshll.u32 [#allocation18], 4
          %s527 = int_to_ptr.vmem [resolvable:$true] %s526
          %532 = dma.hbm_to_vmem [thread:$0]  %s9, 16384, %s527, [#allocation19], 256, 256, 16
        $region52: #{tpu_custom_call.1} parent=11 // pred_fallthru
          _
        // Predicated region
        $region53: #{tpu_custom_call.1} parent=11 // pred_check
          %p533 = pneg %p287
        $region54: #{tpu_custom_call.1} parent=11 // pred_check_branch
          %535 = sbr.rel (%p533) target = $region56
        $region55: #{tpu_custom_call.1} parent=11 // pred_region
          %s537 = ssub.s32 64, 64
          %538 = vsyncadd [#allocation19], %s537
          %s540 = sshll.u32 [#allocation20], 4
          %s541 = int_to_ptr.vmem [resolvable:$true] %s540
          %543 = dma.hbm_to_vmem [thread:$0]  %s10, 64, %s541, [#allocation19]
        $region56: #{tpu_custom_call.1} parent=11 // pred_fallthru
          _
        // Predicated region
        $region57: #{tpu_custom_call.1} parent=11 // pred_check
          %p544 = pneg %p308
        $region58: #{tpu_custom_call.1} parent=11 // pred_check_branch
          %546 = sbr.rel (%p544) target = $region60
        $region59: #{tpu_custom_call.1} parent=11 // pred_region
          %s548 = ssub.s32 256, 256
          %549 = vsyncadd [#allocation22], %s548
          %s550 = sshll.u32 [#allocation21], 4
          %s551 = int_to_ptr.vmem [resolvable:$true] %s550
          %556 = dma.hbm_to_vmem [thread:$0]  %s11, 256, %s551, [#allocation22], 128, 128, 8
        $region60: #{tpu_custom_call.1} parent=11 // pred_fallthru
          _
        // Predicated region
        $region61: #{tpu_custom_call.1} parent=11 // pred_check
          %p557 = pneg %p329
        $region62: #{tpu_custom_call.1} parent=11 // pred_check_branch
          %559 = sbr.rel (%p557) target = $region64
        $region63: #{tpu_custom_call.1} parent=11 // pred_region
          %s561 = ssub.s32 256, 256
          %562 = vsyncadd [#allocation22], %s561
          %s563 = sshll.u32 [#allocation23], 4
          %s564 = int_to_ptr.vmem [resolvable:$true] %s563
          %569 = dma.hbm_to_vmem [thread:$0]  %s12, 256, %s564, [#allocation22], 128, 128, 8
        $region64: #{tpu_custom_call.1} parent=11 // pred_fallthru
          _
        // Predicated region
        $region65: #{tpu_custom_call.1} parent=11 // pred_check
          %p570 = pneg %p350
        $region66: #{tpu_custom_call.1} parent=11 // pred_check_branch
          %572 = sbr.rel (%p570) target = $region68
        $region67: #{tpu_custom_call.1} parent=11 // pred_region
          %s574 = ssub.s32 256, 256
          %575 = vsyncadd [#allocation25], %s574
          %s576 = sshll.u32 [#allocation24], 4
          %s577 = int_to_ptr.vmem [resolvable:$true] %s576
          %582 = dma.hbm_to_vmem [thread:$0]  %s13, 256, %s577, [#allocation25], 128, 128, 8
        $region68: #{tpu_custom_call.1} parent=11 // pred_fallthru
          _
      $region12: #{tpu_custom_call.1} parent=5 // pred_fallthru
        _
      %p583 = scmp.lt.s32.totalorder %s29, 2
      // Predicated region
      $region69: #{tpu_custom_call.1} parent=5 // pred_check
        %p584 = pneg %p583
      $region70: #{tpu_custom_call.1} parent=5 // pred_check_branch
        %586 = sbr.rel (%p584) target = $region72
      $region71: #{tpu_custom_call.1} parent=5 // pred_region
        _
      $region72: #{tpu_custom_call.1} parent=5 // pred_fallthru
        _
      %p587 = scmp.le.s32.totalorder 1, %s29
      %p588 = scmp.lt.s32.totalorder %s29, 3
      %p589 = pnand %p587, %p588
      %p590 = pneg %p589
      // Predicated region
      $region73: #{tpu_custom_call.1} parent=5 // pred_check
        _
      $region74: #{tpu_custom_call.1} parent=5 // pred_check_branch
        %592 = sbr.rel (%p589) target = $region76
      $region75: #{tpu_custom_call.1} parent=5 // pred_region
        %s593 = ssub.s32 %s29, 1
        // Predicated region
        $region77: #{tpu_custom_call.1} parent=75 // pred_check
          %p594 = pneg %p67
        $region78: #{tpu_custom_call.1} parent=75 // pred_check_branch
          %596 = sbr.rel (%p594) target = $region80
        $region79: #{tpu_custom_call.1} parent=75 // pred_region
          %597 = dma.done [#allocation4], 512
        $region80: #{tpu_custom_call.1} parent=75 // pred_fallthru
          _
        // Predicated region
        $region81: #{tpu_custom_call.1} parent=75 // pred_check
          %p598 = pneg %p93
        $region82: #{tpu_custom_call.1} parent=75 // pred_check_branch
          %600 = sbr.rel (%p598) target = $region84
        $region83: #{tpu_custom_call.1} parent=75 // pred_region
          %601 = dma.done [#allocation7], 512
        $region84: #{tpu_custom_call.1} parent=75 // pred_fallthru
          _
        // Predicated region
        $region85: #{tpu_custom_call.1} parent=75 // pred_check
          %p602 = pneg %p119
        $region86: #{tpu_custom_call.1} parent=75 // pred_check_branch
          %604 = sbr.rel (%p602) target = $region88
        $region87: #{tpu_custom_call.1} parent=75 // pred_region
          %605 = dma.done [#allocation7], 512
        $region88: #{tpu_custom_call.1} parent=75 // pred_fallthru
          _
        // Predicated region
        $region89: #{tpu_custom_call.1} parent=75 // pred_check
          %p606 = pneg %p140
        $region90: #{tpu_custom_call.1} parent=75 // pred_check_branch
          %608 = sbr.rel (%p606) target = $region92
        $region91: #{tpu_custom_call.1} parent=75 // pred_region
          %609 = dma.done [#allocation10], 16384
        $region92: #{tpu_custom_call.1} parent=75 // pred_fallthru
          _
        // Predicated region
        $region93: #{tpu_custom_call.1} parent=75 // pred_check
          %p610 = pneg %p161
        $region94: #{tpu_custom_call.1} parent=75 // pred_check_branch
          %612 = sbr.rel (%p610) target = $region96
        $region95: #{tpu_custom_call.1} parent=75 // pred_region
          %613 = dma.done [#allocation10], 64
        $region96: #{tpu_custom_call.1} parent=75 // pred_fallthru
          _
        // Predicated region
        $region97: #{tpu_custom_call.1} parent=75 // pred_check
          %p614 = pneg %p182
        $region98: #{tpu_custom_call.1} parent=75 // pred_check_branch
          %616 = sbr.rel (%p614) target = $region100
        $region99: #{tpu_custom_call.1} parent=75 // pred_region
          %617 = dma.done [#allocation13], 16384
        $region100: #{tpu_custom_call.1} parent=75 // pred_fallthru
          _
        // Predicated region
        $region101: #{tpu_custom_call.1} parent=75 // pred_check
          %p618 = pneg %p203
        $region102: #{tpu_custom_call.1} parent=75 // pred_check_branch
          %620 = sbr.rel (%p618) target = $region104
        $region103: #{tpu_custom_call.1} parent=75 // pred_region
          %621 = dma.done [#allocation13], 64
        $region104: #{tpu_custom_call.1} parent=75 // pred_fallthru
          _
        // Predicated region
        $region105: #{tpu_custom_call.1} parent=75 // pred_check
          %p622 = pneg %p224
        $region106: #{tpu_custom_call.1} parent=75 // pred_check_branch
          %624 = sbr.rel (%p622) target = $region108
        $region107: #{tpu_custom_call.1} parent=75 // pred_region
          %625 = dma.done [#allocation16], 16384
        $region108: #{tpu_custom_call.1} parent=75 // pred_fallthru
          _
        // Predicated region
        $region109: #{tpu_custom_call.1} parent=75 // pred_check
          %p626 = pneg %p245
        $region110: #{tpu_custom_call.1} parent=75 // pred_check_branch
          %628 = sbr.rel (%p626) target = $region112
        $region111: #{tpu_custom_call.1} parent=75 // pred_region
          %629 = dma.done [#allocation16], 64
        $region112: #{tpu_custom_call.1} parent=75 // pred_fallthru
          _
        // Predicated region
        $region113: #{tpu_custom_call.1} parent=75 // pred_check
          %p630 = pneg %p266
        $region114: #{tpu_custom_call.1} parent=75 // pred_check_branch
          %632 = sbr.rel (%p630) target = $region116
        $region115: #{tpu_custom_call.1} parent=75 // pred_region
          %633 = dma.done [#allocation19], 16384
        $region116: #{tpu_custom_call.1} parent=75 // pred_fallthru
          _
        // Predicated region
        $region117: #{tpu_custom_call.1} parent=75 // pred_check
          %p634 = pneg %p287
        $region118: #{tpu_custom_call.1} parent=75 // pred_check_branch
          %636 = sbr.rel (%p634) target = $region120
        $region119: #{tpu_custom_call.1} parent=75 // pred_region
          %637 = dma.done [#allocation19], 64
        $region120: #{tpu_custom_call.1} parent=75 // pred_fallthru
          _
        // Predicated region
        $region121: #{tpu_custom_call.1} parent=75 // pred_check
          %p638 = pneg %p308
        $region122: #{tpu_custom_call.1} parent=75 // pred_check_branch
          %640 = sbr.rel (%p638) target = $region124
        $region123: #{tpu_custom_call.1} parent=75 // pred_region
          %641 = dma.done [#allocation22], 256
        $region124: #{tpu_custom_call.1} parent=75 // pred_fallthru
          _
        // Predicated region
        $region125: #{tpu_custom_call.1} parent=75 // pred_check
          %p642 = pneg %p329
        $region126: #{tpu_custom_call.1} parent=75 // pred_check_branch
          %644 = sbr.rel (%p642) target = $region128
        $region127: #{tpu_custom_call.1} parent=75 // pred_region
          %645 = dma.done [#allocation22], 256
        $region128: #{tpu_custom_call.1} parent=75 // pred_fallthru
          _
        // Predicated region
        $region129: #{tpu_custom_call.1} parent=75 // pred_check
          %p646 = pneg %p350
        $region130: #{tpu_custom_call.1} parent=75 // pred_check_branch
          %648 = sbr.rel (%p646) target = $region132
        $region131: #{tpu_custom_call.1} parent=75 // pred_region
          %649 = dma.done [#allocation25], 256
        $region132: #{tpu_custom_call.1} parent=75 // pred_fallthru
          _
        %p650 = pneg %p67
        %p651 = pneg %p64
        %p652 = pneg %p93
        %p653 = pneg %p90
        %p654 = pneg %p119
        %p655 = pneg %p116
        %p656 = pneg %p140
        %p657 = pneg %p137
        %p658 = pneg %p161
        %p659 = pneg %p158
        %p660 = pneg %p182
        %p661 = pneg %p179
        %p662 = pneg %p203
        %p663 = pneg %p200
        %p664 = pneg %p224
        %p665 = pneg %p221
        %p666 = pneg %p245
        %p667 = pneg %p242
        %p668 = pneg %p266
        %p669 = pneg %p263
        %p670 = pneg %p287
        %p671 = pneg %p284
        %p672 = pneg %p308
        %p673 = pneg %p305
        %p674 = pneg %p329
        %p675 = pneg %p326
        %p676 = pneg %p350
        %p677 = pneg %p347
        %p678 = pneg %p376
        %p679 = pneg %p373
        %s680 = smul.u32 2, %s38
        %s681 = smul.u32 2, %s38
        %s682 = smul.u32 2, %s38
        %s683 = smul.u32 2, %s38
        %v685 = vld [vmem:[#allocation3] sm:$0xff]
        %v686 = vld [vmem:[#allocation3 + $0x8] sm:$0xff]
        %v687 = vld [vmem:[#allocation3 + $0x10] sm:$0xff]
        %v688 = vld [vmem:[#allocation3 + $0x18] sm:$0xff]
        %v689 = vld [vmem:[#allocation6] sm:$0xff]
        %v690 = vld [vmem:[#allocation6 + $0x8] sm:$0xff]
        %v691 = vld [vmem:[#allocation6 + $0x10] sm:$0xff]
        %v692 = vld [vmem:[#allocation6 + $0x18] sm:$0xff]
        %v693 = vld [vmem:[#allocation8] sm:$0xff]
        %v694 = vld [vmem:[#allocation8 + $0x8] sm:$0xff]
        %v695 = vld [vmem:[#allocation8 + $0x10] sm:$0xff]
        %v696 = vld [vmem:[#allocation8 + $0x18] sm:$0xff]
        %s697 = smul.u32 %s39, 128
        %s698 = smul.addr %s697, 4
        %s699 = scalar_lea.vmem [#allocation9], %s698
        %v700 = vld [vmem:[%s699] sm:$0xff]
        %v701 = vld [vmem:[%s699 + $0x8] sm:$0xff]
        %v702 = vld [vmem:[%s699 + $0x10] sm:$0xff]
        %v703 = vld [vmem:[%s699 + $0x18] sm:$0xff]
        %v704 = vld [vmem:[%s699 + $0x20] sm:$0xff]
        %v705 = vld [vmem:[%s699 + $0x28] sm:$0xff]
        %v706 = vld [vmem:[%s699 + $0x30] sm:$0xff]
        %v707 = vld [vmem:[%s699 + $0x38] sm:$0xff]
        %v708 = vld [vmem:[%s699 + $0x40] sm:$0xff]
        %v709 = vld [vmem:[%s699 + $0x48] sm:$0xff]
        %v710 = vld [vmem:[%s699 + $0x50] sm:$0xff]
        %v711 = vld [vmem:[%s699 + $0x58] sm:$0xff]
        %v712 = vld [vmem:[%s699 + $0x60] sm:$0xff]
        %v713 = vld [vmem:[%s699 + $0x68] sm:$0xff]
        %v714 = vld [vmem:[%s699 + $0x70] sm:$0xff]
        %v715 = vld [vmem:[%s699 + $0x78] sm:$0xff]
        %v716 = vld [vmem:[%s699 + $0x80] sm:$0xff]
        %v717 = vld [vmem:[%s699 + $0x88] sm:$0xff]
        %v718 = vld [vmem:[%s699 + $0x90] sm:$0xff]
        %v719 = vld [vmem:[%s699 + $0x98] sm:$0xff]
        %v720 = vld [vmem:[%s699 + $0xa0] sm:$0xff]
        %v721 = vld [vmem:[%s699 + $0xa8] sm:$0xff]
        %v722 = vld [vmem:[%s699 + $0xb0] sm:$0xff]
        %v723 = vld [vmem:[%s699 + $0xb8] sm:$0xff]
        %v724 = vld [vmem:[%s699 + $0xc0] sm:$0xff]
        %v725 = vld [vmem:[%s699 + $0xc8] sm:$0xff]
        %v726 = vld [vmem:[%s699 + $0xd0] sm:$0xff]
        %v727 = vld [vmem:[%s699 + $0xd8] sm:$0xff]
        %v728 = vld [vmem:[%s699 + $0xe0] sm:$0xff]
        %v729 = vld [vmem:[%s699 + $0xe8] sm:$0xff]
        %v730 = vld [vmem:[%s699 + $0xf0] sm:$0xff]
        %v731 = vld [vmem:[%s699 + $0xf8] sm:$0xff]
        %v732 = vld [vmem:[%s699 + $0x100] sm:$0xff]
        %v733 = vld [vmem:[%s699 + $0x108] sm:$0xff]
        %v734 = vld [vmem:[%s699 + $0x110] sm:$0xff]
        %v735 = vld [vmem:[%s699 + $0x118] sm:$0xff]
        %v736 = vld [vmem:[%s699 + $0x120] sm:$0xff]
        %v737 = vld [vmem:[%s699 + $0x128] sm:$0xff]
        %v738 = vld [vmem:[%s699 + $0x130] sm:$0xff]
        %v739 = vld [vmem:[%s699 + $0x138] sm:$0xff]
        %v740 = vld [vmem:[%s699 + $0x140] sm:$0xff]
        %v741 = vld [vmem:[%s699 + $0x148] sm:$0xff]
        %v742 = vld [vmem:[%s699 + $0x150] sm:$0xff]
        %v743 = vld [vmem:[%s699 + $0x158] sm:$0xff]
        %v744 = vld [vmem:[%s699 + $0x160] sm:$0xff]
        %v745 = vld [vmem:[%s699 + $0x168] sm:$0xff]
        %v746 = vld [vmem:[%s699 + $0x170] sm:$0xff]
        %v747 = vld [vmem:[%s699 + $0x178] sm:$0xff]
        %v748 = vld [vmem:[%s699 + $0x180] sm:$0xff]
        %v749 = vld [vmem:[%s699 + $0x188] sm:$0xff]
        %v750 = vld [vmem:[%s699 + $0x190] sm:$0xff]
        %v751 = vld [vmem:[%s699 + $0x198] sm:$0xff]
        %v752 = vld [vmem:[%s699 + $0x1a0] sm:$0xff]
        %v753 = vld [vmem:[%s699 + $0x1a8] sm:$0xff]
        %v754 = vld [vmem:[%s699 + $0x1b0] sm:$0xff]
        %v755 = vld [vmem:[%s699 + $0x1b8] sm:$0xff]
        %v756 = vld [vmem:[%s699 + $0x1c0] sm:$0xff]
        %v757 = vld [vmem:[%s699 + $0x1c8] sm:$0xff]
        %v758 = vld [vmem:[%s699 + $0x1d0] sm:$0xff]
        %v759 = vld [vmem:[%s699 + $0x1d8] sm:$0xff]
        %v760 = vld [vmem:[%s699 + $0x1e0] sm:$0xff]
        %v761 = vld [vmem:[%s699 + $0x1e8] sm:$0xff]
        %v762 = vld [vmem:[%s699 + $0x1f0] sm:$0xff]
        %v763 = vld [vmem:[%s699 + $0x1f8] sm:$0xff]
        %s764 = smul.u32 %s39, 2
        %s765 = scalar_lea.vmem [#allocation11], %s764
        %v766 = vld [vmem:[%s765] sm:$0x3]
        %v768 = vlaneseq
        %v769 = vshrl.u32 %v768, 7
        %v770 = vsub.s32 0, %v769
        %v771 = vrot.slane %v766, %v770
        %v772 = vlaneseq
        %v773 = vshrl.u32 %v772, 7
        %v774 = vsub.s32 1, %v773
        %v775 = vrot.slane %v766, %v774
        %v782 = vunpack.c.l.b16 %v685
        %v783 = vunpack.c.h.b16 %v685
        %v784 = vunpack.c.l.b16 %v686
        %v785 = vunpack.c.h.b16 %v686
        %v786 = vunpack.c.l.b16 %v687
        %v787 = vunpack.c.h.b16 %v687
        %v788 = vunpack.c.l.b16 %v688
        %v789 = vunpack.c.h.b16 %v688
        %v790 = vpack.c.b16 %v786, %v782
        %v791 = vpack.c.b16 %v787, %v783
        %v792 = vpack.c.b16 %v788, %v784
        %v793 = vpack.c.b16 %v789, %v785
        %v862 = vunpack.c.l.b16 %v700
        %v863 = vunpack.c.h.b16 %v700
        %v864 = vunpack.c.l.b16 %v701
        %v865 = vunpack.c.h.b16 %v701
        %v866 = vunpack.c.l.b16 %v702
        %v867 = vunpack.c.h.b16 %v702
        %v868 = vunpack.c.l.b16 %v703
        %v869 = vunpack.c.h.b16 %v703
        %v870 = vunpack.c.l.b16 %v704
        %v871 = vunpack.c.h.b16 %v704
        %v872 = vunpack.c.l.b16 %v705
        %v873 = vunpack.c.h.b16 %v705
        %v874 = vunpack.c.l.b16 %v706
        %v875 = vunpack.c.h.b16 %v706
        %v876 = vunpack.c.l.b16 %v707
        %v877 = vunpack.c.h.b16 %v707
        %v878 = vunpack.c.l.b16 %v708
        %v879 = vunpack.c.h.b16 %v708
        %v880 = vunpack.c.l.b16 %v709
        %v881 = vunpack.c.h.b16 %v709
        %v882 = vunpack.c.l.b16 %v710
        %v883 = vunpack.c.h.b16 %v710
        %v884 = vunpack.c.l.b16 %v711
        %v885 = vunpack.c.h.b16 %v711
        %v886 = vunpack.c.l.b16 %v712
        %v887 = vunpack.c.h.b16 %v712
        %v888 = vunpack.c.l.b16 %v713
        %v889 = vunpack.c.h.b16 %v713
        %v890 = vunpack.c.l.b16 %v714
        %v891 = vunpack.c.h.b16 %v714
        %v892 = vunpack.c.l.b16 %v715
        %v893 = vunpack.c.h.b16 %v715
        %v894 = vunpack.c.l.b16 %v716
        %v895 = vunpack.c.h.b16 %v716
        %v896 = vunpack.c.l.b16 %v717
        %v897 = vunpack.c.h.b16 %v717
        %v898 = vunpack.c.l.b16 %v718
        %v899 = vunpack.c.h.b16 %v718
        %v900 = vunpack.c.l.b16 %v719
        %v901 = vunpack.c.h.b16 %v719
        %v902 = vunpack.c.l.b16 %v720
        %v903 = vunpack.c.h.b16 %v720
        %v904 = vunpack.c.l.b16 %v721
        %v905 = vunpack.c.h.b16 %v721
        %v906 = vunpack.c.l.b16 %v722
        %v907 = vunpack.c.h.b16 %v722
        %v908 = vunpack.c.l.b16 %v723
        %v909 = vunpack.c.h.b16 %v723
        %v910 = vunpack.c.l.b16 %v724
        %v911 = vunpack.c.h.b16 %v724
        %v912 = vunpack.c.l.b16 %v725
        %v913 = vunpack.c.h.b16 %v725
        %v914 = vunpack.c.l.b16 %v726
        %v915 = vunpack.c.h.b16 %v726
        %v916 = vunpack.c.l.b16 %v727
        %v917 = vunpack.c.h.b16 %v727
        %v918 = vunpack.c.l.b16 %v728
        %v919 = vunpack.c.h.b16 %v728
        %v920 = vunpack.c.l.b16 %v729
        %v921 = vunpack.c.h.b16 %v729
        %v922 = vunpack.c.l.b16 %v730
        %v923 = vunpack.c.h.b16 %v730
        %v924 = vunpack.c.l.b16 %v731
        %v925 = vunpack.c.h.b16 %v731
        %v926 = vunpack.c.l.b16 %v732
        %v927 = vunpack.c.h.b16 %v732
        %v928 = vunpack.c.l.b16 %v733
        %v929 = vunpack.c.h.b16 %v733
        %v930 = vunpack.c.l.b16 %v734
        %v931 = vunpack.c.h.b16 %v734
        %v932 = vunpack.c.l.b16 %v735
        %v933 = vunpack.c.h.b16 %v735
        %v934 = vunpack.c.l.b16 %v736
        %v935 = vunpack.c.h.b16 %v736
        %v936 = vunpack.c.l.b16 %v737
        %v937 = vunpack.c.h.b16 %v737
        %v938 = vunpack.c.l.b16 %v738
        %v939 = vunpack.c.h.b16 %v738
        %v940 = vunpack.c.l.b16 %v739
        %v941 = vunpack.c.h.b16 %v739
        %v942 = vunpack.c.l.b16 %v740
        %v943 = vunpack.c.h.b16 %v740
        %v944 = vunpack.c.l.b16 %v741
        %v945 = vunpack.c.h.b16 %v741
        %v946 = vunpack.c.l.b16 %v742
        %v947 = vunpack.c.h.b16 %v742
        %v948 = vunpack.c.l.b16 %v743
        %v949 = vunpack.c.h.b16 %v743
        %v950 = vunpack.c.l.b16 %v744
        %v951 = vunpack.c.h.b16 %v744
        %v952 = vunpack.c.l.b16 %v745
        %v953 = vunpack.c.h.b16 %v745
        %v954 = vunpack.c.l.b16 %v746
        %v955 = vunpack.c.h.b16 %v746
        %v956 = vunpack.c.l.b16 %v747
        %v957 = vunpack.c.h.b16 %v747
        %v958 = vunpack.c.l.b16 %v748
        %v959 = vunpack.c.h.b16 %v748
        %v960 = vunpack.c.l.b16 %v749
        %v961 = vunpack.c.h.b16 %v749
        %v962 = vunpack.c.l.b16 %v750
        %v963 = vunpack.c.h.b16 %v750
        %v964 = vunpack.c.l.b16 %v751
        %v965 = vunpack.c.h.b16 %v751
        %v966 = vunpack.c.l.b16 %v752
        %v967 = vunpack.c.h.b16 %v752
        %v968 = vunpack.c.l.b16 %v753
        %v969 = vunpack.c.h.b16 %v753
        %v970 = vunpack.c.l.b16 %v754
        %v971 = vunpack.c.h.b16 %v754
        %v972 = vunpack.c.l.b16 %v755
        %v973 = vunpack.c.h.b16 %v755
        %v974 = vunpack.c.l.b16 %v756
        %v975 = vunpack.c.h.b16 %v756
        %v976 = vunpack.c.l.b16 %v757
        %v977 = vunpack.c.h.b16 %v757
        %v978 = vunpack.c.l.b16 %v758
        %v979 = vunpack.c.h.b16 %v758
        %v980 = vunpack.c.l.b16 %v759
        %v981 = vunpack.c.h.b16 %v759
        %v982 = vunpack.c.l.b16 %v760
        %v983 = vunpack.c.h.b16 %v760
        %v984 = vunpack.c.l.b16 %v761
        %v985 = vunpack.c.h.b16 %v761
        %v986 = vunpack.c.l.b16 %v762
        %v987 = vunpack.c.h.b16 %v762
        %v988 = vunpack.c.l.b16 %v763
        %v989 = vunpack.c.h.b16 %v763
        %v990 = vpack.c.b16 %v864, %v862
        %v991 = vpack.c.b16 %v865, %v863
        %v992 = vpack.c.b16 %v868, %v866
        %v993 = vpack.c.b16 %v869, %v867
        %v994 = vpack.c.b16 %v872, %v870
        %v995 = vpack.c.b16 %v873, %v871
        %v996 = vpack.c.b16 %v876, %v874
        %v997 = vpack.c.b16 %v877, %v875
        %v998 = vpack.c.b16 %v880, %v878
        %v999 = vpack.c.b16 %v881, %v879
        %v1000 = vpack.c.b16 %v884, %v882
        %v1001 = vpack.c.b16 %v885, %v883
        %v1002 = vpack.c.b16 %v888, %v886
        %v1003 = vpack.c.b16 %v889, %v887
        %v1004 = vpack.c.b16 %v892, %v890
        %v1005 = vpack.c.b16 %v893, %v891
        %v1006 = vpack.c.b16 %v896, %v894
        %v1007 = vpack.c.b16 %v897, %v895
        %v1008 = vpack.c.b16 %v900, %v898
        %v1009 = vpack.c.b16 %v901, %v899
        %v1010 = vpack.c.b16 %v904, %v902
        %v1011 = vpack.c.b16 %v905, %v903
        %v1012 = vpack.c.b16 %v908, %v906
        %v1013 = vpack.c.b16 %v909, %v907
        %v1014 = vpack.c.b16 %v912, %v910
        %v1015 = vpack.c.b16 %v913, %v911
        %v1016 = vpack.c.b16 %v916, %v914
        %v1017 = vpack.c.b16 %v917, %v915
        %v1018 = vpack.c.b16 %v920, %v918
        %v1019 = vpack.c.b16 %v921, %v919
        %v1020 = vpack.c.b16 %v924, %v922
        %v1021 = vpack.c.b16 %v925, %v923
        %v1022 = vpack.c.b16 %v928, %v926
        %v1023 = vpack.c.b16 %v929, %v927
        %v1024 = vpack.c.b16 %v932, %v930
        %v1025 = vpack.c.b16 %v933, %v931
        %v1026 = vpack.c.b16 %v936, %v934
        %v1027 = vpack.c.b16 %v937, %v935
        %v1028 = vpack.c.b16 %v940, %v938
        %v1029 = vpack.c.b16 %v941, %v939
        %v1030 = vpack.c.b16 %v944, %v942
        %v1031 = vpack.c.b16 %v945, %v943
        %v1032 = vpack.c.b16 %v948, %v946
        %v1033 = vpack.c.b16 %v949, %v947
        %v1034 = vpack.c.b16 %v952, %v950
        %v1035 = vpack.c.b16 %v953, %v951
        %v1036 = vpack.c.b16 %v956, %v954
        %v1037 = vpack.c.b16 %v957, %v955
        %v1038 = vpack.c.b16 %v960, %v958
        %v1039 = vpack.c.b16 %v961, %v959
        %v1040 = vpack.c.b16 %v964, %v962
        %v1041 = vpack.c.b16 %v965, %v963
        %v1042 = vpack.c.b16 %v968, %v966
        %v1043 = vpack.c.b16 %v969, %v967
        %v1044 = vpack.c.b16 %v972, %v970
        %v1045 = vpack.c.b16 %v973, %v971
        %v1046 = vpack.c.b16 %v976, %v974
        %v1047 = vpack.c.b16 %v977, %v975
        %v1048 = vpack.c.b16 %v980, %v978
        %v1049 = vpack.c.b16 %v981, %v979
        %v1050 = vpack.c.b16 %v984, %v982
        %v1051 = vpack.c.b16 %v985, %v983
        %v1052 = vpack.c.b16 %v988, %v986
        %v1053 = vpack.c.b16 %v989, %v987
        %1118 = vmatprep.subr.bf16.mxu0 %v991
        %1119 = vmatpush1.bf16.msra.mxu0 %v990
        %1120 = vmatprep.subr.bf16.mxu0 %v993
        %1121 = vmatpush1.bf16.msra.mxu0 %v992
        %1122 = vmatprep.subr.bf16.mxu0 %v995
        %1123 = vmatpush1.bf16.msra.mxu0 %v994
        %1124 = vmatprep.subr.bf16.mxu0 %v997
        %1125 = vmatpush1.bf16.msra.mxu0 %v996
        %1126 = vmatprep.subr.bf16.mxu0 %v999
        %1127 = vmatpush1.bf16.msra.mxu0 %v998
        %1128 = vmatprep.subr.bf16.mxu0 %v1001
        %1129 = vmatpush1.bf16.msra.mxu0 %v1000
        %1130 = vmatprep.subr.bf16.mxu0 %v1003
        %1131 = vmatpush1.bf16.msra.mxu0 %v1002
        %1132 = vmatprep.subr.bf16.mxu0 %v1005
        %1133 = vmatpush1.bf16.msra.mxu0 %v1004
        %1134 = vmatprep.subr.bf16.mxu0 %v1007
        %1135 = vmatpush1.bf16.msra.mxu0 %v1006
        %1136 = vmatprep.subr.bf16.mxu0 %v1009
        %1137 = vmatpush1.bf16.msra.mxu0 %v1008
        %1138 = vmatprep.subr.bf16.mxu0 %v1011
        %1139 = vmatpush1.bf16.msra.mxu0 %v1010
        %1140 = vmatprep.subr.bf16.mxu0 %v1013
        %1141 = vmatpush1.bf16.msra.mxu0 %v1012
        %1142 = vmatprep.subr.bf16.mxu0 %v1015
        %1143 = vmatpush1.bf16.msra.mxu0 %v1014
        %1144 = vmatprep.subr.bf16.mxu0 %v1017
        %1145 = vmatpush1.bf16.msra.mxu0 %v1016
        %1146 = vmatprep.subr.bf16.mxu0 %v1019
        %1147 = vmatpush1.bf16.msra.mxu0 %v1018
        %1148 = vmatprep.subr.bf16.mxu0 %v1021
        %1149 = vmatpush1.bf16.msra.mxu0 %v1020
        %1150 = vmatprep.mubr.bf16.mxu0 %v791
        %1151 = vmatmul.mubr.bf16.gmra.mrb[0].mxu0 %v790
        %v1152 = vpop.f32.mrb[0].mxu0
        %v1153 = vadd.f32 %v771, %v1152
        %v1154 = vpop.f32.mrb[0].mxu0
        %v1155 = vadd.f32 %v775, %v1154
        %v1156 = vpop.f32.mrb[0].mxu0
        %v1157 = vadd.f32 %v771, %v1156
        %v1158 = vpop.f32.mrb[0].mxu0
        %v1159 = vadd.f32 %v775, %v1158
        %1160 = vdwg.mxu0
        %1161 = vmatprep.subr.bf16.mxu0 %v1023
        %1162 = vmatpush1.bf16.msra.mxu0 %v1022
        %1163 = vmatprep.subr.bf16.mxu0 %v1025
        %1164 = vmatpush1.bf16.msra.mxu0 %v1024
        %1165 = vmatprep.subr.bf16.mxu0 %v1027
        %1166 = vmatpush1.bf16.msra.mxu0 %v1026
        %1167 = vmatprep.subr.bf16.mxu0 %v1029
        %1168 = vmatpush1.bf16.msra.mxu0 %v1028
        %1169 = vmatprep.subr.bf16.mxu0 %v1031
        %1170 = vmatpush1.bf16.msra.mxu0 %v1030
        %1171 = vmatprep.subr.bf16.mxu0 %v1033
        %1172 = vmatpush1.bf16.msra.mxu0 %v1032
        %1173 = vmatprep.subr.bf16.mxu0 %v1035
        %1174 = vmatpush1.bf16.msra.mxu0 %v1034
        %1175 = vmatprep.subr.bf16.mxu0 %v1037
        %1176 = vmatpush1.bf16.msra.mxu0 %v1036
        %1177 = vmatprep.subr.bf16.mxu0 %v1039
        %1178 = vmatpush1.bf16.msra.mxu0 %v1038
        %1179 = vmatprep.subr.bf16.mxu0 %v1041
        %1180 = vmatpush1.bf16.msra.mxu0 %v1040
        %1181 = vmatprep.subr.bf16.mxu0 %v1043
        %1182 = vmatpush1.bf16.msra.mxu0 %v1042
        %1183 = vmatprep.subr.bf16.mxu0 %v1045
        %1184 = vmatpush1.bf16.msra.mxu0 %v1044
        %1185 = vmatprep.subr.bf16.mxu0 %v1047
        %1186 = vmatpush1.bf16.msra.mxu0 %v1046
        %1187 = vmatprep.subr.bf16.mxu0 %v1049
        %1188 = vmatpush1.bf16.msra.mxu0 %v1048
        %1189 = vmatprep.subr.bf16.mxu0 %v1051
        %1190 = vmatpush1.bf16.msra.mxu0 %v1050
        %1191 = vmatprep.subr.bf16.mxu0 %v1053
        %1192 = vmatpush1.bf16.msra.mxu0 %v1052
        %1193 = vmatprep.mubr.bf16.mxu0 %v793
        %1194 = vmatmul.mubr.bf16.gmra.mrb[0].mxu0 %v792
        %v1195 = vpop.f32.mrb[0].mxu0
        %v1196 = vadd.f32 %v1153, %v1195
        %v1197 = vpop.f32.mrb[0].mxu0
        %v1198 = vadd.f32 %v1155, %v1197
        %v1199 = vpop.f32.mrb[0].mxu0
        %v1200 = vadd.f32 %v1157, %v1199
        %v1201 = vpop.f32.mrb[0].mxu0
        %v1202 = vadd.f32 %v1159, %v1201
        %1203 = vdwg.mxu0
        %s1204 = smul.addr %s697, 4
        %s1205 = scalar_lea.vmem [#allocation12], %s1204
        %v1206 = vld [vmem:[%s1205] sm:$0xff]
        %v1207 = vld [vmem:[%s1205 + $0x8] sm:$0xff]
        %v1208 = vld [vmem:[%s1205 + $0x10] sm:$0xff]
        %v1209 = vld [vmem:[%s1205 + $0x18] sm:$0xff]
        %v1210 = vld [vmem:[%s1205 + $0x20] sm:$0xff]
        %v1211 = vld [vmem:[%s1205 + $0x28] sm:$0xff]
        %v1212 = vld [vmem:[%s1205 + $0x30] sm:$0xff]
        %v1213 = vld [vmem:[%s1205 + $0x38] sm:$0xff]
        %v1214 = vld [vmem:[%s1205 + $0x40] sm:$0xff]
        %v1215 = vld [vmem:[%s1205 + $0x48] sm:$0xff]
        %v1216 = vld [vmem:[%s1205 + $0x50] sm:$0xff]
        %v1217 = vld [vmem:[%s1205 + $0x58] sm:$0xff]
        %v1218 = vld [vmem:[%s1205 + $0x60] sm:$0xff]
        %v1219 = vld [vmem:[%s1205 + $0x68] sm:$0xff]
        %v1220 = vld [vmem:[%s1205 + $0x70] sm:$0xff]
        %v1221 = vld [vmem:[%s1205 + $0x78] sm:$0xff]
        %v1222 = vld [vmem:[%s1205 + $0x80] sm:$0xff]
        %v1223 = vld [vmem:[%s1205 + $0x88] sm:$0xff]
        %v1224 = vld [vmem:[%s1205 + $0x90] sm:$0xff]
        %v1225 = vld [vmem:[%s1205 + $0x98] sm:$0xff]
        %v1226 = vld [vmem:[%s1205 + $0xa0] sm:$0xff]
        %v1227 = vld [vmem:[%s1205 + $0xa8] sm:$0xff]
        %v1228 = vld [vmem:[%s1205 + $0xb0] sm:$0xff]
        %v1229 = vld [vmem:[%s1205 + $0xb8] sm:$0xff]
        %v1230 = vld [vmem:[%s1205 + $0xc0] sm:$0xff]
        %v1231 = vld [vmem:[%s1205 + $0xc8] sm:$0xff]
        %v1232 = vld [vmem:[%s1205 + $0xd0] sm:$0xff]
        %v1233 = vld [vmem:[%s1205 + $0xd8] sm:$0xff]
        %v1234 = vld [vmem:[%s1205 + $0xe0] sm:$0xff]
        %v1235 = vld [vmem:[%s1205 + $0xe8] sm:$0xff]
        %v1236 = vld [vmem:[%s1205 + $0xf0] sm:$0xff]
        %v1237 = vld [vmem:[%s1205 + $0xf8] sm:$0xff]
        %v1238 = vld [vmem:[%s1205 + $0x100] sm:$0xff]
        %v1239 = vld [vmem:[%s1205 + $0x108] sm:$0xff]
        %v1240 = vld [vmem:[%s1205 + $0x110] sm:$0xff]
        %v1241 = vld [vmem:[%s1205 + $0x118] sm:$0xff]
        %v1242 = vld [vmem:[%s1205 + $0x120] sm:$0xff]
        %v1243 = vld [vmem:[%s1205 + $0x128] sm:$0xff]
        %v1244 = vld [vmem:[%s1205 + $0x130] sm:$0xff]
        %v1245 = vld [vmem:[%s1205 + $0x138] sm:$0xff]
        %v1246 = vld [vmem:[%s1205 + $0x140] sm:$0xff]
        %v1247 = vld [vmem:[%s1205 + $0x148] sm:$0xff]
        %v1248 = vld [vmem:[%s1205 + $0x150] sm:$0xff]
        %v1249 = vld [vmem:[%s1205 + $0x158] sm:$0xff]
        %v1250 = vld [vmem:[%s1205 + $0x160] sm:$0xff]
        %v1251 = vld [vmem:[%s1205 + $0x168] sm:$0xff]
        %v1252 = vld [vmem:[%s1205 + $0x170] sm:$0xff]
        %v1253 = vld [vmem:[%s1205 + $0x178] sm:$0xff]
        %v1254 = vld [vmem:[%s1205 + $0x180] sm:$0xff]
        %v1255 = vld [vmem:[%s1205 + $0x188] sm:$0xff]
        %v1256 = vld [vmem:[%s1205 + $0x190] sm:$0xff]
        %v1257 = vld [vmem:[%s1205 + $0x198] sm:$0xff]
        %v1258 = vld [vmem:[%s1205 + $0x1a0] sm:$0xff]
        %v1259 = vld [vmem:[%s1205 + $0x1a8] sm:$0xff]
        %v1260 = vld [vmem:[%s1205 + $0x1b0] sm:$0xff]
        %v1261 = vld [vmem:[%s1205 + $0x1b8] sm:$0xff]
        %v1262 = vld [vmem:[%s1205 + $0x1c0] sm:$0xff]
        %v1263 = vld [vmem:[%s1205 + $0x1c8] sm:$0xff]
        %v1264 = vld [vmem:[%s1205 + $0x1d0] sm:$0xff]
        %v1265 = vld [vmem:[%s1205 + $0x1d8] sm:$0xff]
        %v1266 = vld [vmem:[%s1205 + $0x1e0] sm:$0xff]
        %v1267 = vld [vmem:[%s1205 + $0x1e8] sm:$0xff]
        %v1268 = vld [vmem:[%s1205 + $0x1f0] sm:$0xff]
        %v1269 = vld [vmem:[%s1205 + $0x1f8] sm:$0xff]
        %s1270 = scalar_lea.vmem [#allocation14], %s764
        %v1271 = vld [vmem:[%s1270] sm:$0x3]
        %v1273 = vlaneseq
        %v1274 = vshrl.u32 %v1273, 7
        %v1275 = vsub.s32 0, %v1274
        %v1276 = vrot.slane %v1271, %v1275
        %v1277 = vlaneseq
        %v1278 = vshrl.u32 %v1277, 7
        %v1279 = vsub.s32 1, %v1278
        %v1280 = vrot.slane %v1271, %v1279
        %v1287 = vunpack.c.l.b16 %v689
        %v1288 = vunpack.c.h.b16 %v689
        %v1289 = vunpack.c.l.b16 %v690
        %v1290 = vunpack.c.h.b16 %v690
        %v1291 = vunpack.c.l.b16 %v691
        %v1292 = vunpack.c.h.b16 %v691
        %v1293 = vunpack.c.l.b16 %v692
        %v1294 = vunpack.c.h.b16 %v692
        %v1295 = vpack.c.b16 %v1291, %v1287
        %v1296 = vpack.c.b16 %v1292, %v1288
        %v1297 = vpack.c.b16 %v1293, %v1289
        %v1298 = vpack.c.b16 %v1294, %v1290
        %v1367 = vunpack.c.l.b16 %v1206
        %v1368 = vunpack.c.h.b16 %v1206
        %v1369 = vunpack.c.l.b16 %v1207
        %v1370 = vunpack.c.h.b16 %v1207
        %v1371 = vunpack.c.l.b16 %v1208
        %v1372 = vunpack.c.h.b16 %v1208
        %v1373 = vunpack.c.l.b16 %v1209
        %v1374 = vunpack.c.h.b16 %v1209
        %v1375 = vunpack.c.l.b16 %v1210
        %v1376 = vunpack.c.h.b16 %v1210
        %v1377 = vunpack.c.l.b16 %v1211
        %v1378 = vunpack.c.h.b16 %v1211
        %v1379 = vunpack.c.l.b16 %v1212
        %v1380 = vunpack.c.h.b16 %v1212
        %v1381 = vunpack.c.l.b16 %v1213
        %v1382 = vunpack.c.h.b16 %v1213
        %v1383 = vunpack.c.l.b16 %v1214
        %v1384 = vunpack.c.h.b16 %v1214
        %v1385 = vunpack.c.l.b16 %v1215
        %v1386 = vunpack.c.h.b16 %v1215
        %v1387 = vunpack.c.l.b16 %v1216
        %v1388 = vunpack.c.h.b16 %v1216
        %v1389 = vunpack.c.l.b16 %v1217
        %v1390 = vunpack.c.h.b16 %v1217
        %v1391 = vunpack.c.l.b16 %v1218
        %v1392 = vunpack.c.h.b16 %v1218
        %v1393 = vunpack.c.l.b16 %v1219
        %v1394 = vunpack.c.h.b16 %v1219
        %v1395 = vunpack.c.l.b16 %v1220
        %v1396 = vunpack.c.h.b16 %v1220
        %v1397 = vunpack.c.l.b16 %v1221
        %v1398 = vunpack.c.h.b16 %v1221
        %v1399 = vunpack.c.l.b16 %v1222
        %v1400 = vunpack.c.h.b16 %v1222
        %v1401 = vunpack.c.l.b16 %v1223
        %v1402 = vunpack.c.h.b16 %v1223
        %v1403 = vunpack.c.l.b16 %v1224
        %v1404 = vunpack.c.h.b16 %v1224
        %v1405 = vunpack.c.l.b16 %v1225
        %v1406 = vunpack.c.h.b16 %v1225
        %v1407 = vunpack.c.l.b16 %v1226
        %v1408 = vunpack.c.h.b16 %v1226
        %v1409 = vunpack.c.l.b16 %v1227
        %v1410 = vunpack.c.h.b16 %v1227
        %v1411 = vunpack.c.l.b16 %v1228
        %v1412 = vunpack.c.h.b16 %v1228
        %v1413 = vunpack.c.l.b16 %v1229
        %v1414 = vunpack.c.h.b16 %v1229
        %v1415 = vunpack.c.l.b16 %v1230
        %v1416 = vunpack.c.h.b16 %v1230
        %v1417 = vunpack.c.l.b16 %v1231
        %v1418 = vunpack.c.h.b16 %v1231
        %v1419 = vunpack.c.l.b16 %v1232
        %v1420 = vunpack.c.h.b16 %v1232
        %v1421 = vunpack.c.l.b16 %v1233
        %v1422 = vunpack.c.h.b16 %v1233
        %v1423 = vunpack.c.l.b16 %v1234
        %v1424 = vunpack.c.h.b16 %v1234
        %v1425 = vunpack.c.l.b16 %v1235
        %v1426 = vunpack.c.h.b16 %v1235
        %v1427 = vunpack.c.l.b16 %v1236
        %v1428 = vunpack.c.h.b16 %v1236
        %v1429 = vunpack.c.l.b16 %v1237
        %v1430 = vunpack.c.h.b16 %v1237
        %v1431 = vunpack.c.l.b16 %v1238
        %v1432 = vunpack.c.h.b16 %v1238
        %v1433 = vunpack.c.l.b16 %v1239
        %v1434 = vunpack.c.h.b16 %v1239
        %v1435 = vunpack.c.l.b16 %v1240
        %v1436 = vunpack.c.h.b16 %v1240
        %v1437 = vunpack.c.l.b16 %v1241
        %v1438 = vunpack.c.h.b16 %v1241
        %v1439 = vunpack.c.l.b16 %v1242
        %v1440 = vunpack.c.h.b16 %v1242
        %v1441 = vunpack.c.l.b16 %v1243
        %v1442 = vunpack.c.h.b16 %v1243
        %v1443 = vunpack.c.l.b16 %v1244
        %v1444 = vunpack.c.h.b16 %v1244
        %v1445 = vunpack.c.l.b16 %v1245
        %v1446 = vunpack.c.h.b16 %v1245
        %v1447 = vunpack.c.l.b16 %v1246
        %v1448 = vunpack.c.h.b16 %v1246
        %v1449 = vunpack.c.l.b16 %v1247
        %v1450 = vunpack.c.h.b16 %v1247
        %v1451 = vunpack.c.l.b16 %v1248
        %v1452 = vunpack.c.h.b16 %v1248
        %v1453 = vunpack.c.l.b16 %v1249
        %v1454 = vunpack.c.h.b16 %v1249
        %v1455 = vunpack.c.l.b16 %v1250
        %v1456 = vunpack.c.h.b16 %v1250
        %v1457 = vunpack.c.l.b16 %v1251
        %v1458 = vunpack.c.h.b16 %v1251
        %v1459 = vunpack.c.l.b16 %v1252
        %v1460 = vunpack.c.h.b16 %v1252
        %v1461 = vunpack.c.l.b16 %v1253
        %v1462 = vunpack.c.h.b16 %v1253
        %v1463 = vunpack.c.l.b16 %v1254
        %v1464 = vunpack.c.h.b16 %v1254
        %v1465 = vunpack.c.l.b16 %v1255
        %v1466 = vunpack.c.h.b16 %v1255
        %v1467 = vunpack.c.l.b16 %v1256
        %v1468 = vunpack.c.h.b16 %v1256
        %v1469 = vunpack.c.l.b16 %v1257
        %v1470 = vunpack.c.h.b16 %v1257
        %v1471 = vunpack.c.l.b16 %v1258
        %v1472 = vunpack.c.h.b16 %v1258
        %v1473 = vunpack.c.l.b16 %v1259
        %v1474 = vunpack.c.h.b16 %v1259
        %v1475 = vunpack.c.l.b16 %v1260
        %v1476 = vunpack.c.h.b16 %v1260
        %v1477 = vunpack.c.l.b16 %v1261
        %v1478 = vunpack.c.h.b16 %v1261
        %v1479 = vunpack.c.l.b16 %v1262
        %v1480 = vunpack.c.h.b16 %v1262
        %v1481 = vunpack.c.l.b16 %v1263
        %v1482 = vunpack.c.h.b16 %v1263
        %v1483 = vunpack.c.l.b16 %v1264
        %v1484 = vunpack.c.h.b16 %v1264
        %v1485 = vunpack.c.l.b16 %v1265
        %v1486 = vunpack.c.h.b16 %v1265
        %v1487 = vunpack.c.l.b16 %v1266
        %v1488 = vunpack.c.h.b16 %v1266
        %v1489 = vunpack.c.l.b16 %v1267
        %v1490 = vunpack.c.h.b16 %v1267
        %v1491 = vunpack.c.l.b16 %v1268
        %v1492 = vunpack.c.h.b16 %v1268
        %v1493 = vunpack.c.l.b16 %v1269
        %v1494 = vunpack.c.h.b16 %v1269
        %v1495 = vpack.c.b16 %v1369, %v1367
        %v1496 = vpack.c.b16 %v1370, %v1368
        %v1497 = vpack.c.b16 %v1373, %v1371
        %v1498 = vpack.c.b16 %v1374, %v1372
        %v1499 = vpack.c.b16 %v1377, %v1375
        %v1500 = vpack.c.b16 %v1378, %v1376
        %v1501 = vpack.c.b16 %v1381, %v1379
        %v1502 = vpack.c.b16 %v1382, %v1380
        %v1503 = vpack.c.b16 %v1385, %v1383
        %v1504 = vpack.c.b16 %v1386, %v1384
        %v1505 = vpack.c.b16 %v1389, %v1387
        %v1506 = vpack.c.b16 %v1390, %v1388
        %v1507 = vpack.c.b16 %v1393, %v1391
        %v1508 = vpack.c.b16 %v1394, %v1392
        %v1509 = vpack.c.b16 %v1397, %v1395
        %v1510 = vpack.c.b16 %v1398, %v1396
        %v1511 = vpack.c.b16 %v1401, %v1399
        %v1512 = vpack.c.b16 %v1402, %v1400
        %v1513 = vpack.c.b16 %v1405, %v1403
        %v1514 = vpack.c.b16 %v1406, %v1404
        %v1515 = vpack.c.b16 %v1409, %v1407
        %v1516 = vpack.c.b16 %v1410, %v1408
        %v1517 = vpack.c.b16 %v1413, %v1411
        %v1518 = vpack.c.b16 %v1414, %v1412
        %v1519 = vpack.c.b16 %v1417, %v1415
        %v1520 = vpack.c.b16 %v1418, %v1416
        %v1521 = vpack.c.b16 %v1421, %v1419
        %v1522 = vpack.c.b16 %v1422, %v1420
        %v1523 = vpack.c.b16 %v1425, %v1423
        %v1524 = vpack.c.b16 %v1426, %v1424
        %v1525 = vpack.c.b16 %v1429, %v1427
        %v1526 = vpack.c.b16 %v1430, %v1428
        %v1527 = vpack.c.b16 %v1433, %v1431
        %v1528 = vpack.c.b16 %v1434, %v1432
        %v1529 = vpack.c.b16 %v1437, %v1435
        %v1530 = vpack.c.b16 %v1438, %v1436
        %v1531 = vpack.c.b16 %v1441, %v1439
        %v1532 = vpack.c.b16 %v1442, %v1440
        %v1533 = vpack.c.b16 %v1445, %v1443
        %v1534 = vpack.c.b16 %v1446, %v1444
        %v1535 = vpack.c.b16 %v1449, %v1447
        %v1536 = vpack.c.b16 %v1450, %v1448
        %v1537 = vpack.c.b16 %v1453, %v1451
        %v1538 = vpack.c.b16 %v1454, %v1452
        %v1539 = vpack.c.b16 %v1457, %v1455
        %v1540 = vpack.c.b16 %v1458, %v1456
        %v1541 = vpack.c.b16 %v1461, %v1459
        %v1542 = vpack.c.b16 %v1462, %v1460
        %v1543 = vpack.c.b16 %v1465, %v1463
        %v1544 = vpack.c.b16 %v1466, %v1464
        %v1545 = vpack.c.b16 %v1469, %v1467
        %v1546 = vpack.c.b16 %v1470, %v1468
        %v1547 = vpack.c.b16 %v1473, %v1471
        %v1548 = vpack.c.b16 %v1474, %v1472
        %v1549 = vpack.c.b16 %v1477, %v1475
        %v1550 = vpack.c.b16 %v1478, %v1476
        %v1551 = vpack.c.b16 %v1481, %v1479
        %v1552 = vpack.c.b16 %v1482, %v1480
        %v1553 = vpack.c.b16 %v1485, %v1483
        %v1554 = vpack.c.b16 %v1486, %v1484
        %v1555 = vpack.c.b16 %v1489, %v1487
        %v1556 = vpack.c.b16 %v1490, %v1488
        %v1557 = vpack.c.b16 %v1493, %v1491
        %v1558 = vpack.c.b16 %v1494, %v1492
        %1623 = vmatprep.subr.bf16.mxu0 %v1496
        %1624 = vmatpush1.bf16.msra.mxu0 %v1495
        %1625 = vmatprep.subr.bf16.mxu0 %v1498
        %1626 = vmatpush1.bf16.msra.mxu0 %v1497
        %1627 = vmatprep.subr.bf16.mxu0 %v1500
        %1628 = vmatpush1.bf16.msra.mxu0 %v1499
        %1629 = vmatprep.subr.bf16.mxu0 %v1502
        %1630 = vmatpush1.bf16.msra.mxu0 %v1501
        %1631 = vmatprep.subr.bf16.mxu0 %v1504
        %1632 = vmatpush1.bf16.msra.mxu0 %v1503
        %1633 = vmatprep.subr.bf16.mxu0 %v1506
        %1634 = vmatpush1.bf16.msra.mxu0 %v1505
        %1635 = vmatprep.subr.bf16.mxu0 %v1508
        %1636 = vmatpush1.bf16.msra.mxu0 %v1507
        %1637 = vmatprep.subr.bf16.mxu0 %v1510
        %1638 = vmatpush1.bf16.msra.mxu0 %v1509
        %1639 = vmatprep.subr.bf16.mxu0 %v1512
        %1640 = vmatpush1.bf16.msra.mxu0 %v1511
        %1641 = vmatprep.subr.bf16.mxu0 %v1514
        %1642 = vmatpush1.bf16.msra.mxu0 %v1513
        %1643 = vmatprep.subr.bf16.mxu0 %v1516
        %1644 = vmatpush1.bf16.msra.mxu0 %v1515
        %1645 = vmatprep.subr.bf16.mxu0 %v1518
        %1646 = vmatpush1.bf16.msra.mxu0 %v1517
        %1647 = vmatprep.subr.bf16.mxu0 %v1520
        %1648 = vmatpush1.bf16.msra.mxu0 %v1519
        %1649 = vmatprep.subr.bf16.mxu0 %v1522
        %1650 = vmatpush1.bf16.msra.mxu0 %v1521
        %1651 = vmatprep.subr.bf16.mxu0 %v1524
        %1652 = vmatpush1.bf16.msra.mxu0 %v1523
        %1653 = vmatprep.subr.bf16.mxu0 %v1526
        %1654 = vmatpush1.bf16.msra.mxu0 %v1525
        %1655 = vmatprep.mubr.bf16.mxu0 %v1296
        %1656 = vmatmul.mubr.bf16.gmra.mrb[0].mxu0 %v1295
        %v1657 = vpop.f32.mrb[0].mxu0
        %v1658 = vadd.f32 %v1276, %v1657
        %v1659 = vpop.f32.mrb[0].mxu0
        %v1660 = vadd.f32 %v1280, %v1659
        %v1661 = vpop.f32.mrb[0].mxu0
        %v1662 = vadd.f32 %v1276, %v1661
        %v1663 = vpop.f32.mrb[0].mxu0
        %v1664 = vadd.f32 %v1280, %v1663
        %1665 = vdwg.mxu0
        %1666 = vmatprep.subr.bf16.mxu0 %v1528
        %1667 = vmatpush1.bf16.msra.mxu0 %v1527
        %1668 = vmatprep.subr.bf16.mxu0 %v1530
        %1669 = vmatpush1.bf16.msra.mxu0 %v1529
        %1670 = vmatprep.subr.bf16.mxu0 %v1532
        %1671 = vmatpush1.bf16.msra.mxu0 %v1531
        %1672 = vmatprep.subr.bf16.mxu0 %v1534
        %1673 = vmatpush1.bf16.msra.mxu0 %v1533
        %1674 = vmatprep.subr.bf16.mxu0 %v1536
        %1675 = vmatpush1.bf16.msra.mxu0 %v1535
        %1676 = vmatprep.subr.bf16.mxu0 %v1538
        %1677 = vmatpush1.bf16.msra.mxu0 %v1537
        %1678 = vmatprep.subr.bf16.mxu0 %v1540
        %1679 = vmatpush1.bf16.msra.mxu0 %v1539
        %1680 = vmatprep.subr.bf16.mxu0 %v1542
        %1681 = vmatpush1.bf16.msra.mxu0 %v1541
        %1682 = vmatprep.subr.bf16.mxu0 %v1544
        %1683 = vmatpush1.bf16.msra.mxu0 %v1543
        %1684 = vmatprep.subr.bf16.mxu0 %v1546
        %1685 = vmatpush1.bf16.msra.mxu0 %v1545
        %1686 = vmatprep.subr.bf16.mxu0 %v1548
        %1687 = vmatpush1.bf16.msra.mxu0 %v1547
        %1688 = vmatprep.subr.bf16.mxu0 %v1550
        %1689 = vmatpush1.bf16.msra.mxu0 %v1549
        %1690 = vmatprep.subr.bf16.mxu0 %v1552
        %1691 = vmatpush1.bf16.msra.mxu0 %v1551
        %1692 = vmatprep.subr.bf16.mxu0 %v1554
        %1693 = vmatpush1.bf16.msra.mxu0 %v1553
        %1694 = vmatprep.subr.bf16.mxu0 %v1556
        %1695 = vmatpush1.bf16.msra.mxu0 %v1555
        %1696 = vmatprep.subr.bf16.mxu0 %v1558
        %1697 = vmatpush1.bf16.msra.mxu0 %v1557
        %1698 = vmatprep.mubr.bf16.mxu0 %v1298
        %1699 = vmatmul.mubr.bf16.gmra.mrb[0].mxu0 %v1297
        %v1700 = vpop.f32.mrb[0].mxu0
        %v1701 = vadd.f32 %v1658, %v1700
        %v1702 = vpop.f32.mrb[0].mxu0
        %v1703 = vadd.f32 %v1660, %v1702
        %v1704 = vpop.f32.mrb[0].mxu0
        %v1705 = vadd.f32 %v1662, %v1704
        %v1706 = vpop.f32.mrb[0].mxu0
        %v1707 = vadd.f32 %v1664, %v1706
        %1708 = vdwg.mxu0
        %s1709 = smul.addr %s697, 4
        %s1710 = scalar_lea.vmem [#allocation15], %s1709
        %v1711 = vld [vmem:[%s1710] sm:$0xff]
        %v1712 = vld [vmem:[%s1710 + $0x8] sm:$0xff]
        %v1713 = vld [vmem:[%s1710 + $0x10] sm:$0xff]
        %v1714 = vld [vmem:[%s1710 + $0x18] sm:$0xff]
        %v1715 = vld [vmem:[%s1710 + $0x20] sm:$0xff]
        %v1716 = vld [vmem:[%s1710 + $0x28] sm:$0xff]
        %v1717 = vld [vmem:[%s1710 + $0x30] sm:$0xff]
        %v1718 = vld [vmem:[%s1710 + $0x38] sm:$0xff]
        %v1719 = vld [vmem:[%s1710 + $0x40] sm:$0xff]
        %v1720 = vld [vmem:[%s1710 + $0x48] sm:$0xff]
        %v1721 = vld [vmem:[%s1710 + $0x50] sm:$0xff]
        %v1722 = vld [vmem:[%s1710 + $0x58] sm:$0xff]
        %v1723 = vld [vmem:[%s1710 + $0x60] sm:$0xff]
        %v1724 = vld [vmem:[%s1710 + $0x68] sm:$0xff]
        %v1725 = vld [vmem:[%s1710 + $0x70] sm:$0xff]
        %v1726 = vld [vmem:[%s1710 + $0x78] sm:$0xff]
        %v1727 = vld [vmem:[%s1710 + $0x80] sm:$0xff]
        %v1728 = vld [vmem:[%s1710 + $0x88] sm:$0xff]
        %v1729 = vld [vmem:[%s1710 + $0x90] sm:$0xff]
        %v1730 = vld [vmem:[%s1710 + $0x98] sm:$0xff]
        %v1731 = vld [vmem:[%s1710 + $0xa0] sm:$0xff]
        %v1732 = vld [vmem:[%s1710 + $0xa8] sm:$0xff]
        %v1733 = vld [vmem:[%s1710 + $0xb0] sm:$0xff]
        %v1734 = vld [vmem:[%s1710 + $0xb8] sm:$0xff]
        %v1735 = vld [vmem:[%s1710 + $0xc0] sm:$0xff]
        %v1736 = vld [vmem:[%s1710 + $0xc8] sm:$0xff]
        %v1737 = vld [vmem:[%s1710 + $0xd0] sm:$0xff]
        %v1738 = vld [vmem:[%s1710 + $0xd8] sm:$0xff]
        %v1739 = vld [vmem:[%s1710 + $0xe0] sm:$0xff]
        %v1740 = vld [vmem:[%s1710 + $0xe8] sm:$0xff]
        %v1741 = vld [vmem:[%s1710 + $0xf0] sm:$0xff]
        %v1742 = vld [vmem:[%s1710 + $0xf8] sm:$0xff]
        %v1743 = vld [vmem:[%s1710 + $0x100] sm:$0xff]
        %v1744 = vld [vmem:[%s1710 + $0x108] sm:$0xff]
        %v1745 = vld [vmem:[%s1710 + $0x110] sm:$0xff]
        %v1746 = vld [vmem:[%s1710 + $0x118] sm:$0xff]
        %v1747 = vld [vmem:[%s1710 + $0x120] sm:$0xff]
        %v1748 = vld [vmem:[%s1710 + $0x128] sm:$0xff]
        %v1749 = vld [vmem:[%s1710 + $0x130] sm:$0xff]
        %v1750 = vld [vmem:[%s1710 + $0x138] sm:$0xff]
        %v1751 = vld [vmem:[%s1710 + $0x140] sm:$0xff]
        %v1752 = vld [vmem:[%s1710 + $0x148] sm:$0xff]
        %v1753 = vld [vmem:[%s1710 + $0x150] sm:$0xff]
        %v1754 = vld [vmem:[%s1710 + $0x158] sm:$0xff]
        %v1755 = vld [vmem:[%s1710 + $0x160] sm:$0xff]
        %v1756 = vld [vmem:[%s1710 + $0x168] sm:$0xff]
        %v1757 = vld [vmem:[%s1710 + $0x170] sm:$0xff]
        %v1758 = vld [vmem:[%s1710 + $0x178] sm:$0xff]
        %v1759 = vld [vmem:[%s1710 + $0x180] sm:$0xff]
        %v1760 = vld [vmem:[%s1710 + $0x188] sm:$0xff]
        %v1761 = vld [vmem:[%s1710 + $0x190] sm:$0xff]
        %v1762 = vld [vmem:[%s1710 + $0x198] sm:$0xff]
        %v1763 = vld [vmem:[%s1710 + $0x1a0] sm:$0xff]
        %v1764 = vld [vmem:[%s1710 + $0x1a8] sm:$0xff]
        %v1765 = vld [vmem:[%s1710 + $0x1b0] sm:$0xff]
        %v1766 = vld [vmem:[%s1710 + $0x1b8] sm:$0xff]
        %v1767 = vld [vmem:[%s1710 + $0x1c0] sm:$0xff]
        %v1768 = vld [vmem:[%s1710 + $0x1c8] sm:$0xff]
        %v1769 = vld [vmem:[%s1710 + $0x1d0] sm:$0xff]
        %v1770 = vld [vmem:[%s1710 + $0x1d8] sm:$0xff]
        %v1771 = vld [vmem:[%s1710 + $0x1e0] sm:$0xff]
        %v1772 = vld [vmem:[%s1710 + $0x1e8] sm:$0xff]
        %v1773 = vld [vmem:[%s1710 + $0x1f0] sm:$0xff]
        %v1774 = vld [vmem:[%s1710 + $0x1f8] sm:$0xff]
        %s1775 = scalar_lea.vmem [#allocation17], %s764
        %v1776 = vld [vmem:[%s1775] sm:$0x3]
        %v1778 = vlaneseq
        %v1779 = vshrl.u32 %v1778, 7
        %v1780 = vsub.s32 0, %v1779
        %v1781 = vrot.slane %v1776, %v1780
        %v1782 = vlaneseq
        %v1783 = vshrl.u32 %v1782, 7
        %v1784 = vsub.s32 1, %v1783
        %v1785 = vrot.slane %v1776, %v1784
        %v1792 = vunpack.c.l.b16 %v693
        %v1793 = vunpack.c.h.b16 %v693
        %v1794 = vunpack.c.l.b16 %v694
        %v1795 = vunpack.c.h.b16 %v694
        %v1796 = vunpack.c.l.b16 %v695
        %v1797 = vunpack.c.h.b16 %v695
        %v1798 = vunpack.c.l.b16 %v696
        %v1799 = vunpack.c.h.b16 %v696
        %v1800 = vpack.c.b16 %v1796, %v1792
        %v1801 = vpack.c.b16 %v1797, %v1793
        %v1802 = vpack.c.b16 %v1798, %v1794
        %v1803 = vpack.c.b16 %v1799, %v1795
        %v1872 = vunpack.c.l.b16 %v1711
        %v1873 = vunpack.c.h.b16 %v1711
        %v1874 = vunpack.c.l.b16 %v1712
        %v1875 = vunpack.c.h.b16 %v1712
        %v1876 = vunpack.c.l.b16 %v1713
        %v1877 = vunpack.c.h.b16 %v1713
        %v1878 = vunpack.c.l.b16 %v1714
        %v1879 = vunpack.c.h.b16 %v1714
        %v1880 = vunpack.c.l.b16 %v1715
        %v1881 = vunpack.c.h.b16 %v1715
        %v1882 = vunpack.c.l.b16 %v1716
        %v1883 = vunpack.c.h.b16 %v1716
        %v1884 = vunpack.c.l.b16 %v1717
        %v1885 = vunpack.c.h.b16 %v1717
        %v1886 = vunpack.c.l.b16 %v1718
        %v1887 = vunpack.c.h.b16 %v1718
        %v1888 = vunpack.c.l.b16 %v1719
        %v1889 = vunpack.c.h.b16 %v1719
        %v1890 = vunpack.c.l.b16 %v1720
        %v1891 = vunpack.c.h.b16 %v1720
        %v1892 = vunpack.c.l.b16 %v1721
        %v1893 = vunpack.c.h.b16 %v1721
        %v1894 = vunpack.c.l.b16 %v1722
        %v1895 = vunpack.c.h.b16 %v1722
        %v1896 = vunpack.c.l.b16 %v1723
        %v1897 = vunpack.c.h.b16 %v1723
        %v1898 = vunpack.c.l.b16 %v1724
        %v1899 = vunpack.c.h.b16 %v1724
        %v1900 = vunpack.c.l.b16 %v1725
        %v1901 = vunpack.c.h.b16 %v1725
        %v1902 = vunpack.c.l.b16 %v1726
        %v1903 = vunpack.c.h.b16 %v1726
        %v1904 = vunpack.c.l.b16 %v1727
        %v1905 = vunpack.c.h.b16 %v1727
        %v1906 = vunpack.c.l.b16 %v1728
        %v1907 = vunpack.c.h.b16 %v1728
        %v1908 = vunpack.c.l.b16 %v1729
        %v1909 = vunpack.c.h.b16 %v1729
        %v1910 = vunpack.c.l.b16 %v1730
        %v1911 = vunpack.c.h.b16 %v1730
        %v1912 = vunpack.c.l.b16 %v1731
        %v1913 = vunpack.c.h.b16 %v1731
        %v1914 = vunpack.c.l.b16 %v1732
        %v1915 = vunpack.c.h.b16 %v1732
        %v1916 = vunpack.c.l.b16 %v1733
        %v1917 = vunpack.c.h.b16 %v1733
        %v1918 = vunpack.c.l.b16 %v1734
        %v1919 = vunpack.c.h.b16 %v1734
        %v1920 = vunpack.c.l.b16 %v1735
        %v1921 = vunpack.c.h.b16 %v1735
        %v1922 = vunpack.c.l.b16 %v1736
        %v1923 = vunpack.c.h.b16 %v1736
        %v1924 = vunpack.c.l.b16 %v1737
        %v1925 = vunpack.c.h.b16 %v1737
        %v1926 = vunpack.c.l.b16 %v1738
        %v1927 = vunpack.c.h.b16 %v1738
        %v1928 = vunpack.c.l.b16 %v1739
        %v1929 = vunpack.c.h.b16 %v1739
        %v1930 = vunpack.c.l.b16 %v1740
        %v1931 = vunpack.c.h.b16 %v1740
        %v1932 = vunpack.c.l.b16 %v1741
        %v1933 = vunpack.c.h.b16 %v1741
        %v1934 = vunpack.c.l.b16 %v1742
        %v1935 = vunpack.c.h.b16 %v1742
        %v1936 = vunpack.c.l.b16 %v1743
        %v1937 = vunpack.c.h.b16 %v1743
        %v1938 = vunpack.c.l.b16 %v1744
        %v1939 = vunpack.c.h.b16 %v1744
        %v1940 = vunpack.c.l.b16 %v1745
        %v1941 = vunpack.c.h.b16 %v1745
        %v1942 = vunpack.c.l.b16 %v1746
        %v1943 = vunpack.c.h.b16 %v1746
        %v1944 = vunpack.c.l.b16 %v1747
        %v1945 = vunpack.c.h.b16 %v1747
        %v1946 = vunpack.c.l.b16 %v1748
        %v1947 = vunpack.c.h.b16 %v1748
        %v1948 = vunpack.c.l.b16 %v1749
        %v1949 = vunpack.c.h.b16 %v1749
        %v1950 = vunpack.c.l.b16 %v1750
        %v1951 = vunpack.c.h.b16 %v1750
        %v1952 = vunpack.c.l.b16 %v1751
        %v1953 = vunpack.c.h.b16 %v1751
        %v1954 = vunpack.c.l.b16 %v1752
        %v1955 = vunpack.c.h.b16 %v1752
        %v1956 = vunpack.c.l.b16 %v1753
        %v1957 = vunpack.c.h.b16 %v1753
        %v1958 = vunpack.c.l.b16 %v1754
        %v1959 = vunpack.c.h.b16 %v1754
        %v1960 = vunpack.c.l.b16 %v1755
        %v1961 = vunpack.c.h.b16 %v1755
        %v1962 = vunpack.c.l.b16 %v1756
        %v1963 = vunpack.c.h.b16 %v1756
        %v1964 = vunpack.c.l.b16 %v1757
        %v1965 = vunpack.c.h.b16 %v1757
        %v1966 = vunpack.c.l.b16 %v1758
        %v1967 = vunpack.c.h.b16 %v1758
        %v1968 = vunpack.c.l.b16 %v1759
        %v1969 = vunpack.c.h.b16 %v1759
        %v1970 = vunpack.c.l.b16 %v1760
        %v1971 = vunpack.c.h.b16 %v1760
        %v1972 = vunpack.c.l.b16 %v1761
        %v1973 = vunpack.c.h.b16 %v1761
        %v1974 = vunpack.c.l.b16 %v1762
        %v1975 = vunpack.c.h.b16 %v1762
        %v1976 = vunpack.c.l.b16 %v1763
        %v1977 = vunpack.c.h.b16 %v1763
        %v1978 = vunpack.c.l.b16 %v1764
        %v1979 = vunpack.c.h.b16 %v1764
        %v1980 = vunpack.c.l.b16 %v1765
        %v1981 = vunpack.c.h.b16 %v1765
        %v1982 = vunpack.c.l.b16 %v1766
        %v1983 = vunpack.c.h.b16 %v1766
        %v1984 = vunpack.c.l.b16 %v1767
        %v1985 = vunpack.c.h.b16 %v1767
        %v1986 = vunpack.c.l.b16 %v1768
        %v1987 = vunpack.c.h.b16 %v1768
        %v1988 = vunpack.c.l.b16 %v1769
        %v1989 = vunpack.c.h.b16 %v1769
        %v1990 = vunpack.c.l.b16 %v1770
        %v1991 = vunpack.c.h.b16 %v1770
        %v1992 = vunpack.c.l.b16 %v1771
        %v1993 = vunpack.c.h.b16 %v1771
        %v1994 = vunpack.c.l.b16 %v1772
        %v1995 = vunpack.c.h.b16 %v1772
        %v1996 = vunpack.c.l.b16 %v1773
        %v1997 = vunpack.c.h.b16 %v1773
        %v1998 = vunpack.c.l.b16 %v1774
        %v1999 = vunpack.c.h.b16 %v1774
        %v2000 = vpack.c.b16 %v1874, %v1872
        %v2001 = vpack.c.b16 %v1875, %v1873
        %v2002 = vpack.c.b16 %v1878, %v1876
        %v2003 = vpack.c.b16 %v1879, %v1877
        %v2004 = vpack.c.b16 %v1882, %v1880
        %v2005 = vpack.c.b16 %v1883, %v1881
        %v2006 = vpack.c.b16 %v1886, %v1884
        %v2007 = vpack.c.b16 %v1887, %v1885
        %v2008 = vpack.c.b16 %v1890, %v1888
        %v2009 = vpack.c.b16 %v1891, %v1889
        %v2010 = vpack.c.b16 %v1894, %v1892
        %v2011 = vpack.c.b16 %v1895, %v1893
        %v2012 = vpack.c.b16 %v1898, %v1896
        %v2013 = vpack.c.b16 %v1899, %v1897
        %v2014 = vpack.c.b16 %v1902, %v1900
        %v2015 = vpack.c.b16 %v1903, %v1901
        %v2016 = vpack.c.b16 %v1906, %v1904
        %v2017 = vpack.c.b16 %v1907, %v1905
        %v2018 = vpack.c.b16 %v1910, %v1908
        %v2019 = vpack.c.b16 %v1911, %v1909
        %v2020 = vpack.c.b16 %v1914, %v1912
        %v2021 = vpack.c.b16 %v1915, %v1913
        %v2022 = vpack.c.b16 %v1918, %v1916
        %v2023 = vpack.c.b16 %v1919, %v1917
        %v2024 = vpack.c.b16 %v1922, %v1920
        %v2025 = vpack.c.b16 %v1923, %v1921
        %v2026 = vpack.c.b16 %v1926, %v1924
        %v2027 = vpack.c.b16 %v1927, %v1925
        %v2028 = vpack.c.b16 %v1930, %v1928
        %v2029 = vpack.c.b16 %v1931, %v1929
        %v2030 = vpack.c.b16 %v1934, %v1932
        %v2031 = vpack.c.b16 %v1935, %v1933
        %v2032 = vpack.c.b16 %v1938, %v1936
        %v2033 = vpack.c.b16 %v1939, %v1937
        %v2034 = vpack.c.b16 %v1942, %v1940
        %v2035 = vpack.c.b16 %v1943, %v1941
        %v2036 = vpack.c.b16 %v1946, %v1944
        %v2037 = vpack.c.b16 %v1947, %v1945
        %v2038 = vpack.c.b16 %v1950, %v1948
        %v2039 = vpack.c.b16 %v1951, %v1949
        %v2040 = vpack.c.b16 %v1954, %v1952
        %v2041 = vpack.c.b16 %v1955, %v1953
        %v2042 = vpack.c.b16 %v1958, %v1956
        %v2043 = vpack.c.b16 %v1959, %v1957
        %v2044 = vpack.c.b16 %v1962, %v1960
        %v2045 = vpack.c.b16 %v1963, %v1961
        %v2046 = vpack.c.b16 %v1966, %v1964
        %v2047 = vpack.c.b16 %v1967, %v1965
        %v2048 = vpack.c.b16 %v1970, %v1968
        %v2049 = vpack.c.b16 %v1971, %v1969
        %v2050 = vpack.c.b16 %v1974, %v1972
        %v2051 = vpack.c.b16 %v1975, %v1973
        %v2052 = vpack.c.b16 %v1978, %v1976
        %v2053 = vpack.c.b16 %v1979, %v1977
        %v2054 = vpack.c.b16 %v1982, %v1980
        %v2055 = vpack.c.b16 %v1983, %v1981
        %v2056 = vpack.c.b16 %v1986, %v1984
        %v2057 = vpack.c.b16 %v1987, %v1985
        %v2058 = vpack.c.b16 %v1990, %v1988
        %v2059 = vpack.c.b16 %v1991, %v1989
        %v2060 = vpack.c.b16 %v1994, %v1992
        %v2061 = vpack.c.b16 %v1995, %v1993
        %v2062 = vpack.c.b16 %v1998, %v1996
        %v2063 = vpack.c.b16 %v1999, %v1997
        %2128 = vmatprep.subr.bf16.mxu0 %v2001
        %2129 = vmatpush1.bf16.msra.mxu0 %v2000
        %2130 = vmatprep.subr.bf16.mxu0 %v2003
        %2131 = vmatpush1.bf16.msra.mxu0 %v2002
        %2132 = vmatprep.subr.bf16.mxu0 %v2005
        %2133 = vmatpush1.bf16.msra.mxu0 %v2004
        %2134 = vmatprep.subr.bf16.mxu0 %v2007
        %2135 = vmatpush1.bf16.msra.mxu0 %v2006
        %2136 = vmatprep.subr.bf16.mxu0 %v2009
        %2137 = vmatpush1.bf16.msra.mxu0 %v2008
        %2138 = vmatprep.subr.bf16.mxu0 %v2011
        %2139 = vmatpush1.bf16.msra.mxu0 %v2010
        %2140 = vmatprep.subr.bf16.mxu0 %v2013
        %2141 = vmatpush1.bf16.msra.mxu0 %v2012
        %2142 = vmatprep.subr.bf16.mxu0 %v2015
        %2143 = vmatpush1.bf16.msra.mxu0 %v2014
        %2144 = vmatprep.subr.bf16.mxu0 %v2017
        %2145 = vmatpush1.bf16.msra.mxu0 %v2016
        %2146 = vmatprep.subr.bf16.mxu0 %v2019
        %2147 = vmatpush1.bf16.msra.mxu0 %v2018
        %2148 = vmatprep.subr.bf16.mxu0 %v2021
        %2149 = vmatpush1.bf16.msra.mxu0 %v2020
        %2150 = vmatprep.subr.bf16.mxu0 %v2023
        %2151 = vmatpush1.bf16.msra.mxu0 %v2022
        %2152 = vmatprep.subr.bf16.mxu0 %v2025
        %2153 = vmatpush1.bf16.msra.mxu0 %v2024
        %2154 = vmatprep.subr.bf16.mxu0 %v2027
        %2155 = vmatpush1.bf16.msra.mxu0 %v2026
        %2156 = vmatprep.subr.bf16.mxu0 %v2029
        %2157 = vmatpush1.bf16.msra.mxu0 %v2028
        %2158 = vmatprep.subr.bf16.mxu0 %v2031
        %2159 = vmatpush1.bf16.msra.mxu0 %v2030
        %2160 = vmatprep.mubr.bf16.mxu0 %v1801
        %2161 = vmatmul.mubr.bf16.gmra.mrb[0].mxu0 %v1800
        %v2162 = vpop.f32.mrb[0].mxu0
        %v2163 = vadd.f32 %v1781, %v2162
        %v2164 = vpop.f32.mrb[0].mxu0
        %v2165 = vadd.f32 %v1785, %v2164
        %v2166 = vpop.f32.mrb[0].mxu0
        %v2167 = vadd.f32 %v1781, %v2166
        %v2168 = vpop.f32.mrb[0].mxu0
        %v2169 = vadd.f32 %v1785, %v2168
        %2170 = vdwg.mxu0
        %2171 = vmatprep.subr.bf16.mxu0 %v2033
        %2172 = vmatpush1.bf16.msra.mxu0 %v2032
        %2173 = vmatprep.subr.bf16.mxu0 %v2035
        %2174 = vmatpush1.bf16.msra.mxu0 %v2034
        %2175 = vmatprep.subr.bf16.mxu0 %v2037
        %2176 = vmatpush1.bf16.msra.mxu0 %v2036
        %2177 = vmatprep.subr.bf16.mxu0 %v2039
        %2178 = vmatpush1.bf16.msra.mxu0 %v2038
        %2179 = vmatprep.subr.bf16.mxu0 %v2041
        %2180 = vmatpush1.bf16.msra.mxu0 %v2040
        %2181 = vmatprep.subr.bf16.mxu0 %v2043
        %2182 = vmatpush1.bf16.msra.mxu0 %v2042
        %2183 = vmatprep.subr.bf16.mxu0 %v2045
        %2184 = vmatpush1.bf16.msra.mxu0 %v2044
        %2185 = vmatprep.subr.bf16.mxu0 %v2047
        %2186 = vmatpush1.bf16.msra.mxu0 %v2046
        %2187 = vmatprep.subr.bf16.mxu0 %v2049
        %2188 = vmatpush1.bf16.msra.mxu0 %v2048
        %2189 = vmatprep.subr.bf16.mxu0 %v2051
        %2190 = vmatpush1.bf16.msra.mxu0 %v2050
        %2191 = vmatprep.subr.bf16.mxu0 %v2053
        %2192 = vmatpush1.bf16.msra.mxu0 %v2052
        %2193 = vmatprep.subr.bf16.mxu0 %v2055
        %2194 = vmatpush1.bf16.msra.mxu0 %v2054
        %2195 = vmatprep.subr.bf16.mxu0 %v2057
        %2196 = vmatpush1.bf16.msra.mxu0 %v2056
        %2197 = vmatprep.subr.bf16.mxu0 %v2059
        %2198 = vmatpush1.bf16.msra.mxu0 %v2058
        %2199 = vmatprep.subr.bf16.mxu0 %v2061
        %2200 = vmatpush1.bf16.msra.mxu0 %v2060
        %2201 = vmatprep.subr.bf16.mxu0 %v2063
        %2202 = vmatpush1.bf16.msra.mxu0 %v2062
        %2203 = vmatprep.mubr.bf16.mxu0 %v1803
        %2204 = vmatmul.mubr.bf16.gmra.mrb[0].mxu0 %v1802
        %v2205 = vpop.f32.mrb[0].mxu0
        %v2206 = vadd.f32 %v2163, %v2205
        %v2207 = vpop.f32.mrb[0].mxu0
        %v2208 = vadd.f32 %v2165, %v2207
        %v2209 = vpop.f32.mrb[0].mxu0
        %v2210 = vadd.f32 %v2167, %v2209
        %v2211 = vpop.f32.mrb[0].mxu0
        %v2212 = vadd.f32 %v2169, %v2211
        %2213 = vdwg.mxu0
        %v2214 = vld [vmem:[#allocation21] sm:$0xff]
        %v2215 = vld [vmem:[#allocation21 + $0x8] sm:$0xff]
        %v2216 = vld [vmem:[#allocation23] sm:$0xff]
        %v2217 = vld [vmem:[#allocation23 + $0x8] sm:$0xff]
        %v2218 = vld [vmem:[#allocation24] sm:$0xff]
        %v2219 = vld [vmem:[#allocation24 + $0x8] sm:$0xff]
        %v2220 = vpack.c.bf16 %v2210, %v2206
        %v2221 = vpack.c.bf16 %v2212, %v2208
        %v2222 = vmul.f32 %v1196, %v2214
        %v2223 = vmul.f32 %v1200, %v2215
        %2224 = vrot.lane.b32.xlu0 %v1196, 127
        %v2225 = vpop.permute.xlu0 %2224
        %2226 = vrot.lane.b32.xlu0 %v1200, 127
        %v2227 = vpop.permute.xlu0 %2226
        %v2228 = vmul.f32 %v2225, %v2216
        %v2229 = vmul.f32 %v2227, %v2217
        %v2230 = vadd.f32 %v2222, %v2228
        %v2231 = vadd.f32 %v2223, %v2229
        %2232 = vrot.lane.b32.xlu0 %v1196, 1
        %v2233 = vpop.permute.xlu0 %2232
        %2234 = vrot.lane.b32.xlu0 %v1200, 1
        %v2235 = vpop.permute.xlu0 %2234
        %v2236 = vmul.f32 %v2233, %v2218
        %v2237 = vmul.f32 %v2235, %v2219
        %v2238 = vadd.f32 %v2230, %v2236
        %v2239 = vadd.f32 %v2231, %v2237
        %v2240 = vmul.f32 %v2238, 0.088388346
        %v2241 = vmul.f32 %v2239, 0.088388346
        %v2242 = vpack.c.bf16 %v2241, %v2240
        %v2243 = vmul.f32 %v1701, %v2214
        %v2244 = vmul.f32 %v1705, %v2215
        %2245 = vrot.lane.b32.xlu0 %v1701, 127
        %v2246 = vpop.permute.xlu0 %2245
        %2247 = vrot.lane.b32.xlu0 %v1705, 127
        %v2248 = vpop.permute.xlu0 %2247
        %v2249 = vmul.f32 %v2246, %v2216
        %v2250 = vmul.f32 %v2248, %v2217
        %v2251 = vadd.f32 %v2243, %v2249
        %v2252 = vadd.f32 %v2244, %v2250
        %2253 = vrot.lane.b32.xlu0 %v1701, 1
        %v2254 = vpop.permute.xlu0 %2253
        %2255 = vrot.lane.b32.xlu0 %v1705, 1
        %v2256 = vpop.permute.xlu0 %2255
        %v2257 = vmul.f32 %v2254, %v2218
        %v2258 = vmul.f32 %v2256, %v2219
        %v2259 = vadd.f32 %v2251, %v2257
        %v2260 = vadd.f32 %v2252, %v2258
        %v2261 = vpack.c.bf16 %v2260, %v2259
        %v2262 = vmul.f32 %v1198, %v2214
        %v2263 = vmul.f32 %v1202, %v2215
        %2264 = vrot.lane.b32.xlu0 %v1198, 127
        %v2265 = vpop.permute.xlu0 %2264
        %2266 = vrot.lane.b32.xlu0 %v1202, 127
        %v2267 = vpop.permute.xlu0 %2266
        %v2268 = vmul.f32 %v2265, %v2216
        %v2269 = vmul.f32 %v2267, %v2217
        %v2270 = vadd.f32 %v2262, %v2268
        %v2271 = vadd.f32 %v2263, %v2269
        %2272 = vrot.lane.b32.xlu0 %v1198, 1
        %v2273 = vpop.permute.xlu0 %2272
        %2274 = vrot.lane.b32.xlu0 %v1202, 1
        %v2275 = vpop.permute.xlu0 %2274
        %v2276 = vmul.f32 %v2273, %v2218
        %v2277 = vmul.f32 %v2275, %v2219
        %v2278 = vadd.f32 %v2270, %v2276
        %v2279 = vadd.f32 %v2271, %v2277
        %v2280 = vmul.f32 %v2278, 0.088388346
        %v2281 = vmul.f32 %v2279, 0.088388346
        %v2282 = vpack.c.bf16 %v2281, %v2280
        %v2283 = vmul.f32 %v1703, %v2214
        %v2284 = vmul.f32 %v1707, %v2215
        %2285 = vrot.lane.b32.xlu0 %v1703, 127
        %v2286 = vpop.permute.xlu0 %2285
        %2287 = vrot.lane.b32.xlu0 %v1707, 127
        %v2288 = vpop.permute.xlu0 %2287
        %v2289 = vmul.f32 %v2286, %v2216
        %v2290 = vmul.f32 %v2288, %v2217
        %v2291 = vadd.f32 %v2283, %v2289
        %v2292 = vadd.f32 %v2284, %v2290
        %2293 = vrot.lane.b32.xlu0 %v1703, 1
        %v2294 = vpop.permute.xlu0 %2293
        %2295 = vrot.lane.b32.xlu0 %v1707, 1
        %v2296 = vpop.permute.xlu0 %2295
        %v2297 = vmul.f32 %v2294, %v2218
        %v2298 = vmul.f32 %v2296, %v2219
        %v2299 = vadd.f32 %v2291, %v2297
        %v2300 = vadd.f32 %v2292, %v2298
        %v2301 = vpack.c.bf16 %v2300, %v2299
        %2302 = vmatprep.subr.bf16.mxu0 0
        %2303 = vmatpush1.bf16.xpose.msra.mxu0 %v2261
        %2304 = vmatprep.subr.bf16.mxu0 0
        %2305 = vmatpush1.bf16.xpose.msra.mxu0 0
        %2306 = vmatprep.subr.bf16.mxu0 0
        %2307 = vmatpush1.bf16.xpose.msra.mxu0 0
        %2308 = vmatprep.subr.bf16.mxu0 0
        %2309 = vmatpush1.bf16.xpose.msra.mxu0 0
        %2310 = vmatprep.subr.bf16.mxu0 0
        %2311 = vmatpush1.bf16.xpose.msra.mxu0 0
        %2312 = vmatprep.subr.bf16.mxu0 0
        %2313 = vmatpush1.bf16.xpose.msra.mxu0 0
        %2314 = vmatprep.subr.bf16.mxu0 0
        %2315 = vmatpush1.bf16.xpose.msra.mxu0 0
        %2316 = vmatprep.subr.bf16.mxu0 0
        %2317 = vmatpush1.bf16.xpose.msra.mxu0 0
        %2318 = vmatprep.subr.bf16.mxu0 0
        %2319 = vmatpush1.bf16.xpose.msra.mxu0 0
        %2320 = vmatprep.subr.bf16.mxu0 0
        %2321 = vmatpush1.bf16.xpose.msra.mxu0 0
        %2322 = vmatprep.subr.bf16.mxu0 0
        %2323 = vmatpush1.bf16.xpose.msra.mxu0 0
        %2324 = vmatprep.subr.bf16.mxu0 0
        %2325 = vmatpush1.bf16.xpose.msra.mxu0 0
        %2326 = vmatprep.subr.bf16.mxu0 0
        %2327 = vmatpush1.bf16.xpose.msra.mxu0 0
        %2328 = vmatprep.subr.bf16.mxu0 0
        %2329 = vmatpush1.bf16.xpose.msra.mxu0 0
        %2330 = vmatprep.subr.bf16.mxu0 0
        %2331 = vmatpush1.bf16.xpose.msra.mxu0 0
        %2332 = vmatprep.subr.bf16.mxu0 0
        %2333 = vmatpush1.bf16.xpose.msra.mxu0 0
        %2334 = vmatprep.mubr.bf16.mxu0 0
        %2335 = vmatmul.mubr.bf16.gmra.mrb[0].mxu0 %v2242
        %v2336 = vpop.f32.mrb[0].mxu0
        %v2337 = vadd.f32 0.0, %v2336
        %v2338 = vpop.f32.mrb[0].mxu0
        %v2339 = vpop.f32.mrb[0].mxu0
        %v2340 = vpop.f32.mrb[0].mxu0
        %2341 = vdwg.mxu0
        %vm2342 = vcmask 64512
        %v2343 = vsel %vm2342, %v2337, -inf
        %2344 = vmax.xlane.f32.xlu0 %v2343
        %v2345 = vpop.xlane.xlu0 %2344
        %v2346 = vsub.f32 %v2337, %v2345
        %v2347 = vmul.f32 %v2346, 1.442695
        %v2348 = vpow.pop %v2347
        %v2349 = vsel %vm2342, %v2348, 0.0
        %2350 = vadd.xlane.f32.xlu0 %v2349
        %v2351 = vpop.xlane.xlu0 %2350
        %v2352 = vpack.c.bf16 %v2348, %v2348
        %v2354 = vsel %vm2342, %v2352, 0
        %vm2356 = vcmask 1043456
        %v2358 = vsel %vm2356, %v2220, 0
        %2360 = vmatprep.subr.bf16.mxu0 0
        %2361 = vmatpush1.bf16.msra.mxu0 %v2358
        %2362 = vmatprep.subr.bf16.mxu0 0
        %2363 = vmatpush1.bf16.msra.mxu0 0
        %2364 = vmatprep.subr.bf16.mxu0 0
        %2365 = vmatpush1.bf16.msra.mxu0 0
        %2366 = vmatprep.subr.bf16.mxu0 0
        %2367 = vmatpush1.bf16.msra.mxu0 0
        %2368 = vmatprep.subr.bf16.mxu0 0
        %2369 = vmatpush1.bf16.msra.mxu0 0
        %2370 = vmatprep.subr.bf16.mxu0 0
        %2371 = vmatpush1.bf16.msra.mxu0 0
        %2372 = vmatprep.subr.bf16.mxu0 0
        %2373 = vmatpush1.bf16.msra.mxu0 0
        %2374 = vmatprep.subr.bf16.mxu0 0
        %2375 = vmatpush1.bf16.msra.mxu0 0
        %2376 = vmatprep.subr.bf16.mxu0 0
        %2377 = vmatpush1.bf16.msra.mxu0 0
        %2378 = vmatprep.subr.bf16.mxu0 0
        %2379 = vmatpush1.bf16.msra.mxu0 0
        %2380 = vmatprep.subr.bf16.mxu0 0
        %2381 = vmatpush1.bf16.msra.mxu0 0
        %2382 = vmatprep.subr.bf16.mxu0 0
        %2383 = vmatpush1.bf16.msra.mxu0 0
        %2384 = vmatprep.subr.bf16.mxu0 0
        %2385 = vmatpush1.bf16.msra.mxu0 0
        %2386 = vmatprep.subr.bf16.mxu0 0
        %2387 = vmatpush1.bf16.msra.mxu0 0
        %2388 = vmatprep.subr.bf16.mxu0 0
        %2389 = vmatpush1.bf16.msra.mxu0 0
        %2390 = vmatprep.subr.bf16.mxu0 0
        %2391 = vmatpush1.bf16.msra.mxu0 0
        %2392 = vmatprep.mubr.bf16.mxu0 0
        %2393 = vmatmul.mubr.bf16.gmra.mrb[0].mxu0 %v2354
        %v2394 = vpop.f32.mrb[0].mxu0
        %v2395 = vadd.f32 0.0, %v2394
        %v2396 = vpop.f32.mrb[0].mxu0
        %v2397 = vpop.f32.mrb[0].mxu0
        %v2398 = vpop.f32.mrb[0].mxu0
        %2399 = vdwg.mxu0
        %v2400 = vrcp.pop %v2351
        %v2401 = vmul.f32 %v2395, %v2400
        %2402 = vmatprep.subr.bf16.mxu0 0
        %2403 = vmatpush1.bf16.xpose.msra.mxu0 %v2301
        %2404 = vmatprep.subr.bf16.mxu0 0
        %2405 = vmatpush1.bf16.xpose.msra.mxu0 0
        %2406 = vmatprep.subr.bf16.mxu0 0
        %2407 = vmatpush1.bf16.xpose.msra.mxu0 0
        %2408 = vmatprep.subr.bf16.mxu0 0
        %2409 = vmatpush1.bf16.xpose.msra.mxu0 0
        %2410 = vmatprep.subr.bf16.mxu0 0
        %2411 = vmatpush1.bf16.xpose.msra.mxu0 0
        %2412 = vmatprep.subr.bf16.mxu0 0
        %2413 = vmatpush1.bf16.xpose.msra.mxu0 0
        %2414 = vmatprep.subr.bf16.mxu0 0
        %2415 = vmatpush1.bf16.xpose.msra.mxu0 0
        %2416 = vmatprep.subr.bf16.mxu0 0
        %2417 = vmatpush1.bf16.xpose.msra.mxu0 0
        %2418 = vmatprep.subr.bf16.mxu0 0
        %2419 = vmatpush1.bf16.xpose.msra.mxu0 0
        %2420 = vmatprep.subr.bf16.mxu0 0
        %2421 = vmatpush1.bf16.xpose.msra.mxu0 0
        %2422 = vmatprep.subr.bf16.mxu0 0
        %2423 = vmatpush1.bf16.xpose.msra.mxu0 0
        %2424 = vmatprep.subr.bf16.mxu0 0
        %2425 = vmatpush1.bf16.xpose.msra.mxu0 0
        %2426 = vmatprep.subr.bf16.mxu0 0
        %2427 = vmatpush1.bf16.xpose.msra.mxu0 0
        %2428 = vmatprep.subr.bf16.mxu0 0
        %2429 = vmatpush1.bf16.xpose.msra.mxu0 0
        %2430 = vmatprep.subr.bf16.mxu0 0
        %2431 = vmatpush1.bf16.xpose.msra.mxu0 0
        %2432 = vmatprep.subr.bf16.mxu0 0
        %2433 = vmatpush1.bf16.xpose.msra.mxu0 0
        %2434 = vmatprep.mubr.bf16.mxu0 0
        %2435 = vmatmul.mubr.bf16.gmra.mrb[0].mxu0 %v2282
        %v2436 = vpop.f32.mrb[0].mxu0
        %v2437 = vadd.f32 0.0, %v2436
        %v2438 = vpop.f32.mrb[0].mxu0
        %v2439 = vpop.f32.mrb[0].mxu0
        %v2440 = vpop.f32.mrb[0].mxu0
        %2441 = vdwg.mxu0
        %v2442 = vsel %vm2342, %v2437, -inf
        %2443 = vmax.xlane.f32.xlu0 %v2442
        %v2444 = vpop.xlane.xlu0 %2443
        %v2445 = vsub.f32 %v2437, %v2444
        %v2446 = vmul.f32 %v2445, 1.442695
        %v2447 = vpow.pop %v2446
        %v2448 = vsel %vm2342, %v2447, 0.0
        %2449 = vadd.xlane.f32.xlu0 %v2448
        %v2450 = vpop.xlane.xlu0 %2449
        %v2451 = vpack.c.bf16 %v2447, %v2447
        %v2453 = vsel %vm2342, %v2451, 0
        %v2456 = vsel %vm2356, %v2221, 0
        %2458 = vmatprep.subr.bf16.mxu0 0
        %2459 = vmatpush1.bf16.msra.mxu0 %v2456
        %2460 = vmatprep.subr.bf16.mxu0 0
        %2461 = vmatpush1.bf16.msra.mxu0 0
        %2462 = vmatprep.subr.bf16.mxu0 0
        %2463 = vmatpush1.bf16.msra.mxu0 0
        %2464 = vmatprep.subr.bf16.mxu0 0
        %2465 = vmatpush1.bf16.msra.mxu0 0
        %2466 = vmatprep.subr.bf16.mxu0 0
        %2467 = vmatpush1.bf16.msra.mxu0 0
        %2468 = vmatprep.subr.bf16.mxu0 0
        %2469 = vmatpush1.bf16.msra.mxu0 0
        %2470 = vmatprep.subr.bf16.mxu0 0
        %2471 = vmatpush1.bf16.msra.mxu0 0
        %2472 = vmatprep.subr.bf16.mxu0 0
        %2473 = vmatpush1.bf16.msra.mxu0 0
        %2474 = vmatprep.subr.bf16.mxu0 0
        %2475 = vmatpush1.bf16.msra.mxu0 0
        %2476 = vmatprep.subr.bf16.mxu0 0
        %2477 = vmatpush1.bf16.msra.mxu0 0
        %2478 = vmatprep.subr.bf16.mxu0 0
        %2479 = vmatpush1.bf16.msra.mxu0 0
        %2480 = vmatprep.subr.bf16.mxu0 0
        %2481 = vmatpush1.bf16.msra.mxu0 0
        %2482 = vmatprep.subr.bf16.mxu0 0
        %2483 = vmatpush1.bf16.msra.mxu0 0
        %2484 = vmatprep.subr.bf16.mxu0 0
        %2485 = vmatpush1.bf16.msra.mxu0 0
        %2486 = vmatprep.subr.bf16.mxu0 0
        %2487 = vmatpush1.bf16.msra.mxu0 0
        %2488 = vmatprep.subr.bf16.mxu0 0
        %2489 = vmatpush1.bf16.msra.mxu0 0
        %2490 = vmatprep.mubr.bf16.mxu0 0
        %2491 = vmatmul.mubr.bf16.gmra.mrb[0].mxu0 %v2453
        %v2492 = vpop.f32.mrb[0].mxu0
        %v2493 = vadd.f32 0.0, %v2492
        %v2494 = vpop.f32.mrb[0].mxu0
        %v2495 = vpop.f32.mrb[0].mxu0
        %v2496 = vpop.f32.mrb[0].mxu0
        %2497 = vdwg.mxu0
        %v2498 = vrcp.pop %v2450
        %v2499 = vmul.f32 %v2493, %v2498
        %v2501 = vrot.slane %v2242, 4
        %v2504 = vrot.slane %v2261, 4
        %2506 = vmatprep.subr.bf16.mxu0 0
        %2507 = vmatpush1.bf16.xpose.msra.mxu0 %v2504
        %2508 = vmatprep.subr.bf16.mxu0 0
        %2509 = vmatpush1.bf16.xpose.msra.mxu0 0
        %2510 = vmatprep.subr.bf16.mxu0 0
        %2511 = vmatpush1.bf16.xpose.msra.mxu0 0
        %2512 = vmatprep.subr.bf16.mxu0 0
        %2513 = vmatpush1.bf16.xpose.msra.mxu0 0
        %2514 = vmatprep.subr.bf16.mxu0 0
        %2515 = vmatpush1.bf16.xpose.msra.mxu0 0
        %2516 = vmatprep.subr.bf16.mxu0 0
        %2517 = vmatpush1.bf16.xpose.msra.mxu0 0
        %2518 = vmatprep.subr.bf16.mxu0 0
        %2519 = vmatpush1.bf16.xpose.msra.mxu0 0
        %2520 = vmatprep.subr.bf16.mxu0 0
        %2521 = vmatpush1.bf16.xpose.msra.mxu0 0
        %2522 = vmatprep.subr.bf16.mxu0 0
        %2523 = vmatpush1.bf16.xpose.msra.mxu0 0
        %2524 = vmatprep.subr.bf16.mxu0 0
        %2525 = vmatpush1.bf16.xpose.msra.mxu0 0
        %2526 = vmatprep.subr.bf16.mxu0 0
        %2527 = vmatpush1.bf16.xpose.msra.mxu0 0
        %2528 = vmatprep.subr.bf16.mxu0 0
        %2529 = vmatpush1.bf16.xpose.msra.mxu0 0
        %2530 = vmatprep.subr.bf16.mxu0 0
        %2531 = vmatpush1.bf16.xpose.msra.mxu0 0
        %2532 = vmatprep.subr.bf16.mxu0 0
        %2533 = vmatpush1.bf16.xpose.msra.mxu0 0
        %2534 = vmatprep.subr.bf16.mxu0 0
        %2535 = vmatpush1.bf16.xpose.msra.mxu0 0
        %2536 = vmatprep.subr.bf16.mxu0 0
        %2537 = vmatpush1.bf16.xpose.msra.mxu0 0
        %2538 = vmatprep.mubr.bf16.mxu0 0
        %2539 = vmatmul.mubr.bf16.gmra.mrb[0].mxu0 %v2501
        %v2540 = vpop.f32.mrb[0].mxu0
        %v2541 = vadd.f32 0.0, %v2540
        %v2542 = vpop.f32.mrb[0].mxu0
        %v2543 = vpop.f32.mrb[0].mxu0
        %v2544 = vpop.f32.mrb[0].mxu0
        %2545 = vdwg.mxu0
        %v2546 = vsel %vm2342, %v2541, -inf
        %2547 = vmax.xlane.f32.xlu0 %v2546
        %v2548 = vpop.xlane.xlu0 %2547
        %v2549 = vsub.f32 %v2541, %v2548
        %v2550 = vmul.f32 %v2549, 1.442695
        %v2551 = vpow.pop %v2550
        %v2552 = vsel %vm2342, %v2551, 0.0
        %2553 = vadd.xlane.f32.xlu0 %v2552
        %v2554 = vpop.xlane.xlu0 %2553
        %v2555 = vpack.c.bf16 %v2551, %v2551
        %v2557 = vrot.slane %v2220, 4
        %v2559 = vsel %vm2342, %v2555, 0
        %v2562 = vsel %vm2356, %v2557, 0
        %2564 = vmatprep.subr.bf16.mxu0 0
        %2565 = vmatpush1.bf16.msra.mxu0 %v2562
        %2566 = vmatprep.subr.bf16.mxu0 0
        %2567 = vmatpush1.bf16.msra.mxu0 0
        %2568 = vmatprep.subr.bf16.mxu0 0
        %2569 = vmatpush1.bf16.msra.mxu0 0
        %2570 = vmatprep.subr.bf16.mxu0 0
        %2571 = vmatpush1.bf16.msra.mxu0 0
        %2572 = vmatprep.subr.bf16.mxu0 0
        %2573 = vmatpush1.bf16.msra.mxu0 0
        %2574 = vmatprep.subr.bf16.mxu0 0
        %2575 = vmatpush1.bf16.msra.mxu0 0
        %2576 = vmatprep.subr.bf16.mxu0 0
        %2577 = vmatpush1.bf16.msra.mxu0 0
        %2578 = vmatprep.subr.bf16.mxu0 0
        %2579 = vmatpush1.bf16.msra.mxu0 0
        %2580 = vmatprep.subr.bf16.mxu0 0
        %2581 = vmatpush1.bf16.msra.mxu0 0
        %2582 = vmatprep.subr.bf16.mxu0 0
        %2583 = vmatpush1.bf16.msra.mxu0 0
        %2584 = vmatprep.subr.bf16.mxu0 0
        %2585 = vmatpush1.bf16.msra.mxu0 0
        %2586 = vmatprep.subr.bf16.mxu0 0
        %2587 = vmatpush1.bf16.msra.mxu0 0
        %2588 = vmatprep.subr.bf16.mxu0 0
        %2589 = vmatpush1.bf16.msra.mxu0 0
        %2590 = vmatprep.subr.bf16.mxu0 0
        %2591 = vmatpush1.bf16.msra.mxu0 0
        %2592 = vmatprep.subr.bf16.mxu0 0
        %2593 = vmatpush1.bf16.msra.mxu0 0
        %2594 = vmatprep.subr.bf16.mxu0 0
        %2595 = vmatpush1.bf16.msra.mxu0 0
        %2596 = vmatprep.mubr.bf16.mxu0 0
        %2597 = vmatmul.mubr.bf16.gmra.mrb[0].mxu0 %v2559
        %v2598 = vpop.f32.mrb[0].mxu0
        %v2599 = vadd.f32 0.0, %v2598
        %v2600 = vpop.f32.mrb[0].mxu0
        %v2601 = vpop.f32.mrb[0].mxu0
        %v2602 = vpop.f32.mrb[0].mxu0
        %2603 = vdwg.mxu0
        %v2604 = vrcp.pop %v2554
        %v2605 = vmul.f32 %v2599, %v2604
        %v2607 = vrot.slane %v2282, 4
        %v2610 = vrot.slane %v2301, 4
        %2612 = vmatprep.subr.bf16.mxu0 0
        %2613 = vmatpush1.bf16.xpose.msra.mxu0 %v2610
        %2614 = vmatprep.subr.bf16.mxu0 0
        %2615 = vmatpush1.bf16.xpose.msra.mxu0 0
        %2616 = vmatprep.subr.bf16.mxu0 0
        %2617 = vmatpush1.bf16.xpose.msra.mxu0 0
        %2618 = vmatprep.subr.bf16.mxu0 0
        %2619 = vmatpush1.bf16.xpose.msra.mxu0 0
        %2620 = vmatprep.subr.bf16.mxu0 0
        %2621 = vmatpush1.bf16.xpose.msra.mxu0 0
        %2622 = vmatprep.subr.bf16.mxu0 0
        %2623 = vmatpush1.bf16.xpose.msra.mxu0 0
        %2624 = vmatprep.subr.bf16.mxu0 0
        %2625 = vmatpush1.bf16.xpose.msra.mxu0 0
        %2626 = vmatprep.subr.bf16.mxu0 0
        %2627 = vmatpush1.bf16.xpose.msra.mxu0 0
        %2628 = vmatprep.subr.bf16.mxu0 0
        %2629 = vmatpush1.bf16.xpose.msra.mxu0 0
        %2630 = vmatprep.subr.bf16.mxu0 0
        %2631 = vmatpush1.bf16.xpose.msra.mxu0 0
        %2632 = vmatprep.subr.bf16.mxu0 0
        %2633 = vmatpush1.bf16.xpose.msra.mxu0 0
        %2634 = vmatprep.subr.bf16.mxu0 0
        %2635 = vmatpush1.bf16.xpose.msra.mxu0 0
        %2636 = vmatprep.subr.bf16.mxu0 0
        %2637 = vmatpush1.bf16.xpose.msra.mxu0 0
        %2638 = vmatprep.subr.bf16.mxu0 0
        %2639 = vmatpush1.bf16.xpose.msra.mxu0 0
        %2640 = vmatprep.subr.bf16.mxu0 0
        %2641 = vmatpush1.bf16.xpose.msra.mxu0 0
        %2642 = vmatprep.subr.bf16.mxu0 0
        %2643 = vmatpush1.bf16.xpose.msra.mxu0 0
        %2644 = vmatprep.mubr.bf16.mxu0 0
        %2645 = vmatmul.mubr.bf16.gmra.mrb[0].mxu0 %v2607
        %v2646 = vpop.f32.mrb[0].mxu0
        %v2647 = vadd.f32 0.0, %v2646
        %v2648 = vpop.f32.mrb[0].mxu0
        %v2649 = vpop.f32.mrb[0].mxu0
        %v2650 = vpop.f32.mrb[0].mxu0
        %2651 = vdwg.mxu0
        %v2652 = vsel %vm2342, %v2647, -inf
        %2653 = vmax.xlane.f32.xlu0 %v2652
        %v2654 = vpop.xlane.xlu0 %2653
        %v2655 = vsub.f32 %v2647, %v2654
        %v2656 = vmul.f32 %v2655, 1.442695
        %v2657 = vpow.pop %v2656
        %v2658 = vsel %vm2342, %v2657, 0.0
        %2659 = vadd.xlane.f32.xlu0 %v2658
        %v2660 = vpop.xlane.xlu0 %2659
        %v2661 = vpack.c.bf16 %v2657, %v2657
        %v2663 = vrot.slane %v2221, 4
        %v2665 = vsel %vm2342, %v2661, 0
        %v2668 = vsel %vm2356, %v2663, 0
        %2670 = vmatprep.subr.bf16.mxu0 0
        %2671 = vmatpush1.bf16.msra.mxu0 %v2668
        %2672 = vmatprep.subr.bf16.mxu0 0
        %2673 = vmatpush1.bf16.msra.mxu0 0
        %2674 = vmatprep.subr.bf16.mxu0 0
        %2675 = vmatpush1.bf16.msra.mxu0 0
        %2676 = vmatprep.subr.bf16.mxu0 0
        %2677 = vmatpush1.bf16.msra.mxu0 0
        %2678 = vmatprep.subr.bf16.mxu0 0
        %2679 = vmatpush1.bf16.msra.mxu0 0
        %2680 = vmatprep.subr.bf16.mxu0 0
        %2681 = vmatpush1.bf16.msra.mxu0 0
        %2682 = vmatprep.subr.bf16.mxu0 0
        %2683 = vmatpush1.bf16.msra.mxu0 0
        %2684 = vmatprep.subr.bf16.mxu0 0
        %2685 = vmatpush1.bf16.msra.mxu0 0
        %2686 = vmatprep.subr.bf16.mxu0 0
        %2687 = vmatpush1.bf16.msra.mxu0 0
        %2688 = vmatprep.subr.bf16.mxu0 0
        %2689 = vmatpush1.bf16.msra.mxu0 0
        %2690 = vmatprep.subr.bf16.mxu0 0
        %2691 = vmatpush1.bf16.msra.mxu0 0
        %2692 = vmatprep.subr.bf16.mxu0 0
        %2693 = vmatpush1.bf16.msra.mxu0 0
        %2694 = vmatprep.subr.bf16.mxu0 0
        %2695 = vmatpush1.bf16.msra.mxu0 0
        %2696 = vmatprep.subr.bf16.mxu0 0
        %2697 = vmatpush1.bf16.msra.mxu0 0
        %2698 = vmatprep.subr.bf16.mxu0 0
        %2699 = vmatpush1.bf16.msra.mxu0 0
        %2700 = vmatprep.subr.bf16.mxu0 0
        %2701 = vmatpush1.bf16.msra.mxu0 0
        %2702 = vmatprep.mubr.bf16.mxu0 0
        %2703 = vmatmul.mubr.bf16.gmra.mrb[0].mxu0 %v2665
        %v2704 = vpop.f32.mrb[0].mxu0
        %v2705 = vadd.f32 0.0, %v2704
        %v2706 = vpop.f32.mrb[0].mxu0
        %v2707 = vpop.f32.mrb[0].mxu0
        %v2708 = vpop.f32.mrb[0].mxu0
        %2709 = vdwg.mxu0
        %v2710 = vrcp.pop %v2660
        %v2711 = vmul.f32 %v2705, %v2710
        %v2712 = vpack.c.bf16 %v2605, %v2401
        %v2713 = vpack.c.bf16 %v2711, %v2499
        %s2714 = smul.addr %s697, 4
        %s2715 = scalar_lea.vmem [#allocation18], %s2714
        %v2716 = vld [vmem:[%s2715] sm:$0xff]
        %v2717 = vld [vmem:[%s2715 + $0x8] sm:$0xff]
        %v2718 = vld [vmem:[%s2715 + $0x10] sm:$0xff]
        %v2719 = vld [vmem:[%s2715 + $0x18] sm:$0xff]
        %v2720 = vld [vmem:[%s2715 + $0x20] sm:$0xff]
        %v2721 = vld [vmem:[%s2715 + $0x28] sm:$0xff]
        %v2722 = vld [vmem:[%s2715 + $0x30] sm:$0xff]
        %v2723 = vld [vmem:[%s2715 + $0x38] sm:$0xff]
        %v2724 = vld [vmem:[%s2715 + $0x40] sm:$0xff]
        %v2725 = vld [vmem:[%s2715 + $0x48] sm:$0xff]
        %v2726 = vld [vmem:[%s2715 + $0x50] sm:$0xff]
        %v2727 = vld [vmem:[%s2715 + $0x58] sm:$0xff]
        %v2728 = vld [vmem:[%s2715 + $0x60] sm:$0xff]
        %v2729 = vld [vmem:[%s2715 + $0x68] sm:$0xff]
        %v2730 = vld [vmem:[%s2715 + $0x70] sm:$0xff]
        %v2731 = vld [vmem:[%s2715 + $0x78] sm:$0xff]
        %v2732 = vld [vmem:[%s2715 + $0x80] sm:$0xff]
        %v2733 = vld [vmem:[%s2715 + $0x88] sm:$0xff]
        %v2734 = vld [vmem:[%s2715 + $0x90] sm:$0xff]
        %v2735 = vld [vmem:[%s2715 + $0x98] sm:$0xff]
        %v2736 = vld [vmem:[%s2715 + $0xa0] sm:$0xff]
        %v2737 = vld [vmem:[%s2715 + $0xa8] sm:$0xff]
        %v2738 = vld [vmem:[%s2715 + $0xb0] sm:$0xff]
        %v2739 = vld [vmem:[%s2715 + $0xb8] sm:$0xff]
        %v2740 = vld [vmem:[%s2715 + $0xc0] sm:$0xff]
        %v2741 = vld [vmem:[%s2715 + $0xc8] sm:$0xff]
        %v2742 = vld [vmem:[%s2715 + $0xd0] sm:$0xff]
        %v2743 = vld [vmem:[%s2715 + $0xd8] sm:$0xff]
        %v2744 = vld [vmem:[%s2715 + $0xe0] sm:$0xff]
        %v2745 = vld [vmem:[%s2715 + $0xe8] sm:$0xff]
        %v2746 = vld [vmem:[%s2715 + $0xf0] sm:$0xff]
        %v2747 = vld [vmem:[%s2715 + $0xf8] sm:$0xff]
        %v2748 = vld [vmem:[%s2715 + $0x100] sm:$0xff]
        %v2749 = vld [vmem:[%s2715 + $0x108] sm:$0xff]
        %v2750 = vld [vmem:[%s2715 + $0x110] sm:$0xff]
        %v2751 = vld [vmem:[%s2715 + $0x118] sm:$0xff]
        %v2752 = vld [vmem:[%s2715 + $0x120] sm:$0xff]
        %v2753 = vld [vmem:[%s2715 + $0x128] sm:$0xff]
        %v2754 = vld [vmem:[%s2715 + $0x130] sm:$0xff]
        %v2755 = vld [vmem:[%s2715 + $0x138] sm:$0xff]
        %v2756 = vld [vmem:[%s2715 + $0x140] sm:$0xff]
        %v2757 = vld [vmem:[%s2715 + $0x148] sm:$0xff]
        %v2758 = vld [vmem:[%s2715 + $0x150] sm:$0xff]
        %v2759 = vld [vmem:[%s2715 + $0x158] sm:$0xff]
        %v2760 = vld [vmem:[%s2715 + $0x160] sm:$0xff]
        %v2761 = vld [vmem:[%s2715 + $0x168] sm:$0xff]
        %v2762 = vld [vmem:[%s2715 + $0x170] sm:$0xff]
        %v2763 = vld [vmem:[%s2715 + $0x178] sm:$0xff]
        %v2764 = vld [vmem:[%s2715 + $0x180] sm:$0xff]
        %v2765 = vld [vmem:[%s2715 + $0x188] sm:$0xff]
        %v2766 = vld [vmem:[%s2715 + $0x190] sm:$0xff]
        %v2767 = vld [vmem:[%s2715 + $0x198] sm:$0xff]
        %v2768 = vld [vmem:[%s2715 + $0x1a0] sm:$0xff]
        %v2769 = vld [vmem:[%s2715 + $0x1a8] sm:$0xff]
        %v2770 = vld [vmem:[%s2715 + $0x1b0] sm:$0xff]
        %v2771 = vld [vmem:[%s2715 + $0x1b8] sm:$0xff]
        %v2772 = vld [vmem:[%s2715 + $0x1c0] sm:$0xff]
        %v2773 = vld [vmem:[%s2715 + $0x1c8] sm:$0xff]
        %v2774 = vld [vmem:[%s2715 + $0x1d0] sm:$0xff]
        %v2775 = vld [vmem:[%s2715 + $0x1d8] sm:$0xff]
        %v2776 = vld [vmem:[%s2715 + $0x1e0] sm:$0xff]
        %v2777 = vld [vmem:[%s2715 + $0x1e8] sm:$0xff]
        %v2778 = vld [vmem:[%s2715 + $0x1f0] sm:$0xff]
        %v2779 = vld [vmem:[%s2715 + $0x1f8] sm:$0xff]
        %v2844 = vunpack.c.l.b16 %v2716
        %v2845 = vunpack.c.h.b16 %v2716
        %v2846 = vunpack.c.l.b16 %v2717
        %v2847 = vunpack.c.h.b16 %v2717
        %v2848 = vunpack.c.l.b16 %v2718
        %v2849 = vunpack.c.h.b16 %v2718
        %v2850 = vunpack.c.l.b16 %v2719
        %v2851 = vunpack.c.h.b16 %v2719
        %v2852 = vunpack.c.l.b16 %v2720
        %v2853 = vunpack.c.h.b16 %v2720
        %v2854 = vunpack.c.l.b16 %v2721
        %v2855 = vunpack.c.h.b16 %v2721
        %v2856 = vunpack.c.l.b16 %v2722
        %v2857 = vunpack.c.h.b16 %v2722
        %v2858 = vunpack.c.l.b16 %v2723
        %v2859 = vunpack.c.h.b16 %v2723
        %v2860 = vunpack.c.l.b16 %v2724
        %v2861 = vunpack.c.h.b16 %v2724
        %v2862 = vunpack.c.l.b16 %v2725
        %v2863 = vunpack.c.h.b16 %v2725
        %v2864 = vunpack.c.l.b16 %v2726
        %v2865 = vunpack.c.h.b16 %v2726
        %v2866 = vunpack.c.l.b16 %v2727
        %v2867 = vunpack.c.h.b16 %v2727
        %v2868 = vunpack.c.l.b16 %v2728
        %v2869 = vunpack.c.h.b16 %v2728
        %v2870 = vunpack.c.l.b16 %v2729
        %v2871 = vunpack.c.h.b16 %v2729
        %v2872 = vunpack.c.l.b16 %v2730
        %v2873 = vunpack.c.h.b16 %v2730
        %v2874 = vunpack.c.l.b16 %v2731
        %v2875 = vunpack.c.h.b16 %v2731
        %v2876 = vunpack.c.l.b16 %v2732
        %v2877 = vunpack.c.h.b16 %v2732
        %v2878 = vunpack.c.l.b16 %v2733
        %v2879 = vunpack.c.h.b16 %v2733
        %v2880 = vunpack.c.l.b16 %v2734
        %v2881 = vunpack.c.h.b16 %v2734
        %v2882 = vunpack.c.l.b16 %v2735
        %v2883 = vunpack.c.h.b16 %v2735
        %v2884 = vunpack.c.l.b16 %v2736
        %v2885 = vunpack.c.h.b16 %v2736
        %v2886 = vunpack.c.l.b16 %v2737
        %v2887 = vunpack.c.h.b16 %v2737
        %v2888 = vunpack.c.l.b16 %v2738
        %v2889 = vunpack.c.h.b16 %v2738
        %v2890 = vunpack.c.l.b16 %v2739
        %v2891 = vunpack.c.h.b16 %v2739
        %v2892 = vunpack.c.l.b16 %v2740
        %v2893 = vunpack.c.h.b16 %v2740
        %v2894 = vunpack.c.l.b16 %v2741
        %v2895 = vunpack.c.h.b16 %v2741
        %v2896 = vunpack.c.l.b16 %v2742
        %v2897 = vunpack.c.h.b16 %v2742
        %v2898 = vunpack.c.l.b16 %v2743
        %v2899 = vunpack.c.h.b16 %v2743
        %v2900 = vunpack.c.l.b16 %v2744
        %v2901 = vunpack.c.h.b16 %v2744
        %v2902 = vunpack.c.l.b16 %v2745
        %v2903 = vunpack.c.h.b16 %v2745
        %v2904 = vunpack.c.l.b16 %v2746
        %v2905 = vunpack.c.h.b16 %v2746
        %v2906 = vunpack.c.l.b16 %v2747
        %v2907 = vunpack.c.h.b16 %v2747
        %v2908 = vunpack.c.l.b16 %v2748
        %v2909 = vunpack.c.h.b16 %v2748
        %v2910 = vunpack.c.l.b16 %v2749
        %v2911 = vunpack.c.h.b16 %v2749
        %v2912 = vunpack.c.l.b16 %v2750
        %v2913 = vunpack.c.h.b16 %v2750
        %v2914 = vunpack.c.l.b16 %v2751
        %v2915 = vunpack.c.h.b16 %v2751
        %v2916 = vunpack.c.l.b16 %v2752
        %v2917 = vunpack.c.h.b16 %v2752
        %v2918 = vunpack.c.l.b16 %v2753
        %v2919 = vunpack.c.h.b16 %v2753
        %v2920 = vunpack.c.l.b16 %v2754
        %v2921 = vunpack.c.h.b16 %v2754
        %v2922 = vunpack.c.l.b16 %v2755
        %v2923 = vunpack.c.h.b16 %v2755
        %v2924 = vunpack.c.l.b16 %v2756
        %v2925 = vunpack.c.h.b16 %v2756
        %v2926 = vunpack.c.l.b16 %v2757
        %v2927 = vunpack.c.h.b16 %v2757
        %v2928 = vunpack.c.l.b16 %v2758
        %v2929 = vunpack.c.h.b16 %v2758
        %v2930 = vunpack.c.l.b16 %v2759
        %v2931 = vunpack.c.h.b16 %v2759
        %v2932 = vunpack.c.l.b16 %v2760
        %v2933 = vunpack.c.h.b16 %v2760
        %v2934 = vunpack.c.l.b16 %v2761
        %v2935 = vunpack.c.h.b16 %v2761
        %v2936 = vunpack.c.l.b16 %v2762
        %v2937 = vunpack.c.h.b16 %v2762
        %v2938 = vunpack.c.l.b16 %v2763
        %v2939 = vunpack.c.h.b16 %v2763
        %v2940 = vunpack.c.l.b16 %v2764
        %v2941 = vunpack.c.h.b16 %v2764
        %v2942 = vunpack.c.l.b16 %v2765
        %v2943 = vunpack.c.h.b16 %v2765
        %v2944 = vunpack.c.l.b16 %v2766
        %v2945 = vunpack.c.h.b16 %v2766
        %v2946 = vunpack.c.l.b16 %v2767
        %v2947 = vunpack.c.h.b16 %v2767
        %v2948 = vunpack.c.l.b16 %v2768
        %v2949 = vunpack.c.h.b16 %v2768
        %v2950 = vunpack.c.l.b16 %v2769
        %v2951 = vunpack.c.h.b16 %v2769
        %v2952 = vunpack.c.l.b16 %v2770
        %v2953 = vunpack.c.h.b16 %v2770
        %v2954 = vunpack.c.l.b16 %v2771
        %v2955 = vunpack.c.h.b16 %v2771
        %v2956 = vunpack.c.l.b16 %v2772
        %v2957 = vunpack.c.h.b16 %v2772
        %v2958 = vunpack.c.l.b16 %v2773
        %v2959 = vunpack.c.h.b16 %v2773
        %v2960 = vunpack.c.l.b16 %v2774
        %v2961 = vunpack.c.h.b16 %v2774
        %v2962 = vunpack.c.l.b16 %v2775
        %v2963 = vunpack.c.h.b16 %v2775
        %v2964 = vunpack.c.l.b16 %v2776
        %v2965 = vunpack.c.h.b16 %v2776
        %v2966 = vunpack.c.l.b16 %v2777
        %v2967 = vunpack.c.h.b16 %v2777
        %v2968 = vunpack.c.l.b16 %v2778
        %v2969 = vunpack.c.h.b16 %v2778
        %v2970 = vunpack.c.l.b16 %v2779
        %v2971 = vunpack.c.h.b16 %v2779
        %v2972 = vpack.c.b16 %v2848, %v2844
        %v2973 = vpack.c.b16 %v2849, %v2845
        %v2974 = vpack.c.b16 %v2850, %v2846
        %v2975 = vpack.c.b16 %v2851, %v2847
        %v2976 = vpack.c.b16 %v2856, %v2852
        %v2977 = vpack.c.b16 %v2857, %v2853
        %v2978 = vpack.c.b16 %v2858, %v2854
        %v2979 = vpack.c.b16 %v2859, %v2855
        %v2980 = vpack.c.b16 %v2864, %v2860
        %v2981 = vpack.c.b16 %v2865, %v2861
        %v2982 = vpack.c.b16 %v2866, %v2862
        %v2983 = vpack.c.b16 %v2867, %v2863
        %v2984 = vpack.c.b16 %v2872, %v2868
        %v2985 = vpack.c.b16 %v2873, %v2869
        %v2986 = vpack.c.b16 %v2874, %v2870
        %v2987 = vpack.c.b16 %v2875, %v2871
        %v2988 = vpack.c.b16 %v2880, %v2876
        %v2989 = vpack.c.b16 %v2881, %v2877
        %v2990 = vpack.c.b16 %v2882, %v2878
        %v2991 = vpack.c.b16 %v2883, %v2879
        %v2992 = vpack.c.b16 %v2888, %v2884
        %v2993 = vpack.c.b16 %v2889, %v2885
        %v2994 = vpack.c.b16 %v2890, %v2886
        %v2995 = vpack.c.b16 %v2891, %v2887
        %v2996 = vpack.c.b16 %v2896, %v2892
        %v2997 = vpack.c.b16 %v2897, %v2893
        %v2998 = vpack.c.b16 %v2898, %v2894
        %v2999 = vpack.c.b16 %v2899, %v2895
        %v3000 = vpack.c.b16 %v2904, %v2900
        %v3001 = vpack.c.b16 %v2905, %v2901
        %v3002 = vpack.c.b16 %v2906, %v2902
        %v3003 = vpack.c.b16 %v2907, %v2903
        %v3004 = vpack.c.b16 %v2912, %v2908
        %v3005 = vpack.c.b16 %v2913, %v2909
        %v3006 = vpack.c.b16 %v2914, %v2910
        %v3007 = vpack.c.b16 %v2915, %v2911
        %v3008 = vpack.c.b16 %v2920, %v2916
        %v3009 = vpack.c.b16 %v2921, %v2917
        %v3010 = vpack.c.b16 %v2922, %v2918
        %v3011 = vpack.c.b16 %v2923, %v2919
        %v3012 = vpack.c.b16 %v2928, %v2924
        %v3013 = vpack.c.b16 %v2929, %v2925
        %v3014 = vpack.c.b16 %v2930, %v2926
        %v3015 = vpack.c.b16 %v2931, %v2927
        %v3016 = vpack.c.b16 %v2936, %v2932
        %v3017 = vpack.c.b16 %v2937, %v2933
        %v3018 = vpack.c.b16 %v2938, %v2934
        %v3019 = vpack.c.b16 %v2939, %v2935
        %v3020 = vpack.c.b16 %v2944, %v2940
        %v3021 = vpack.c.b16 %v2945, %v2941
        %v3022 = vpack.c.b16 %v2946, %v2942
        %v3023 = vpack.c.b16 %v2947, %v2943
        %v3024 = vpack.c.b16 %v2952, %v2948
        %v3025 = vpack.c.b16 %v2953, %v2949
        %v3026 = vpack.c.b16 %v2954, %v2950
        %v3027 = vpack.c.b16 %v2955, %v2951
        %v3028 = vpack.c.b16 %v2960, %v2956
        %v3029 = vpack.c.b16 %v2961, %v2957
        %v3030 = vpack.c.b16 %v2962, %v2958
        %v3031 = vpack.c.b16 %v2963, %v2959
        %v3032 = vpack.c.b16 %v2968, %v2964
        %v3033 = vpack.c.b16 %v2969, %v2965
        %v3034 = vpack.c.b16 %v2970, %v2966
        %v3035 = vpack.c.b16 %v2971, %v2967
        %3100 = vmatprep.subr.bf16.mxu0 %v2973
        %3101 = vmatpush1.bf16.msra.mxu0 %v2972
        %3102 = vmatprep.subr.bf16.mxu0 %v2977
        %3103 = vmatpush1.bf16.msra.mxu0 %v2976
        %3104 = vmatprep.subr.bf16.mxu0 %v2981
        %3105 = vmatpush1.bf16.msra.mxu0 %v2980
        %3106 = vmatprep.subr.bf16.mxu0 %v2985
        %3107 = vmatpush1.bf16.msra.mxu0 %v2984
        %3108 = vmatprep.subr.bf16.mxu0 %v2989
        %3109 = vmatpush1.bf16.msra.mxu0 %v2988
        %3110 = vmatprep.subr.bf16.mxu0 %v2993
        %3111 = vmatpush1.bf16.msra.mxu0 %v2992
        %3112 = vmatprep.subr.bf16.mxu0 %v2997
        %3113 = vmatpush1.bf16.msra.mxu0 %v2996
        %3114 = vmatprep.subr.bf16.mxu0 %v3001
        %3115 = vmatpush1.bf16.msra.mxu0 %v3000
        %3116 = vmatprep.subr.bf16.mxu0 %v3005
        %3117 = vmatpush1.bf16.msra.mxu0 %v3004
        %3118 = vmatprep.subr.bf16.mxu0 %v3009
        %3119 = vmatpush1.bf16.msra.mxu0 %v3008
        %3120 = vmatprep.subr.bf16.mxu0 %v3013
        %3121 = vmatpush1.bf16.msra.mxu0 %v3012
        %3122 = vmatprep.subr.bf16.mxu0 %v3017
        %3123 = vmatpush1.bf16.msra.mxu0 %v3016
        %3124 = vmatprep.subr.bf16.mxu0 %v3021
        %3125 = vmatpush1.bf16.msra.mxu0 %v3020
        %3126 = vmatprep.subr.bf16.mxu0 %v3025
        %3127 = vmatpush1.bf16.msra.mxu0 %v3024
        %3128 = vmatprep.subr.bf16.mxu0 %v3029
        %3129 = vmatpush1.bf16.msra.mxu0 %v3028
        %3130 = vmatprep.subr.bf16.mxu0 %v3033
        %3131 = vmatpush1.bf16.msra.mxu0 %v3032
        %3132 = vmatprep.mubr.bf16.mxu0 %v2713
        %3133 = vmatmul.mubr.bf16.gmra.mrb[0].mxu0 %v2712
        %v3134 = vpop.f32.mrb[0].mxu0
        %v3135 = vadd.f32 0.0, %v3134
        %v3136 = vpop.f32.mrb[0].mxu0
        %v3137 = vadd.f32 0.0, %v3136
        %v3138 = vpop.f32.mrb[0].mxu0
        %v3139 = vadd.f32 0.0, %v3138
        %v3140 = vpop.f32.mrb[0].mxu0
        %v3141 = vadd.f32 0.0, %v3140
        %3142 = vdwg.mxu0
        %3143 = vmatprep.subr.bf16.mxu0 %v2975
        %3144 = vmatpush1.bf16.msra.mxu0 %v2974
        %3145 = vmatprep.subr.bf16.mxu0 %v2979
        %3146 = vmatpush1.bf16.msra.mxu0 %v2978
        %3147 = vmatprep.subr.bf16.mxu0 %v2983
        %3148 = vmatpush1.bf16.msra.mxu0 %v2982
        %3149 = vmatprep.subr.bf16.mxu0 %v2987
        %3150 = vmatpush1.bf16.msra.mxu0 %v2986
        %3151 = vmatprep.subr.bf16.mxu0 %v2991
        %3152 = vmatpush1.bf16.msra.mxu0 %v2990
        %3153 = vmatprep.subr.bf16.mxu0 %v2995
        %3154 = vmatpush1.bf16.msra.mxu0 %v2994
        %3155 = vmatprep.subr.bf16.mxu0 %v2999
        %3156 = vmatpush1.bf16.msra.mxu0 %v2998
        %3157 = vmatprep.subr.bf16.mxu0 %v3003
        %3158 = vmatpush1.bf16.msra.mxu0 %v3002
        %3159 = vmatprep.subr.bf16.mxu0 %v3007
        %3160 = vmatpush1.bf16.msra.mxu0 %v3006
        %3161 = vmatprep.subr.bf16.mxu0 %v3011
        %3162 = vmatpush1.bf16.msra.mxu0 %v3010
        %3163 = vmatprep.subr.bf16.mxu0 %v3015
        %3164 = vmatpush1.bf16.msra.mxu0 %v3014
        %3165 = vmatprep.subr.bf16.mxu0 %v3019
        %3166 = vmatpush1.bf16.msra.mxu0 %v3018
        %3167 = vmatprep.subr.bf16.mxu0 %v3023
        %3168 = vmatpush1.bf16.msra.mxu0 %v3022
        %3169 = vmatprep.subr.bf16.mxu0 %v3027
        %3170 = vmatpush1.bf16.msra.mxu0 %v3026
        %3171 = vmatprep.subr.bf16.mxu0 %v3031
        %3172 = vmatpush1.bf16.msra.mxu0 %v3030
        %3173 = vmatprep.subr.bf16.mxu0 %v3035
        %3174 = vmatpush1.bf16.msra.mxu0 %v3034
        %3175 = vmatprep.mubr.bf16.mxu0 %v2713
        %3176 = vmatmul.mubr.bf16.gmra.mrb[0].mxu0 %v2712
        %v3177 = vpop.f32.mrb[0].mxu0
        %v3178 = vadd.f32 0.0, %v3177
        %v3179 = vpop.f32.mrb[0].mxu0
        %v3180 = vadd.f32 0.0, %v3179
        %v3181 = vpop.f32.mrb[0].mxu0
        %v3182 = vadd.f32 0.0, %v3181
        %v3183 = vpop.f32.mrb[0].mxu0
        %v3184 = vadd.f32 0.0, %v3183
        %3185 = vdwg.mxu0
        %p3186 = scmp.eq.s32.totalorder %s39, 0
        // Predicated region
        $region133: #{tpu_custom_call.1} parent=75 // pred_check
          %p3187 = pneg %p3186
        $region134: #{tpu_custom_call.1} parent=75 // pred_check_branch
          %3189 = sbr.rel (%p3187) target = $region136
        $region135: #{tpu_custom_call.1} parent=75 // pred_region
          %3190 = vst [vmem:[#allocation2] sm:$0xff] %v3135
          %3191 = vst [vmem:[#allocation2 + $0x8] sm:$0xff] %v3137
          %3192 = vst [vmem:[#allocation2 + $0x10] sm:$0xff] %v3178
          %3193 = vst [vmem:[#allocation2 + $0x18] sm:$0xff] %v3180
          %3194 = vst [vmem:[#allocation2 + $0x20] sm:$0xff] %v3139
          %3195 = vst [vmem:[#allocation2 + $0x28] sm:$0xff] %v3141
          %3196 = vst [vmem:[#allocation2 + $0x30] sm:$0xff] %v3182
          %3197 = vst [vmem:[#allocation2 + $0x38] sm:$0xff] %v3184
        $region136: #{tpu_custom_call.1} parent=75 // pred_fallthru
          _
        %p3198 = scmp.ne.s32.totalorder %s39, 0
        // Predicated region
        $region137: #{tpu_custom_call.1} parent=75 // pred_check
          %p3199 = pneg %p3198
        $region138: #{tpu_custom_call.1} parent=75 // pred_check_branch
          %3201 = sbr.rel (%p3199) target = $region140
        $region139: #{tpu_custom_call.1} parent=75 // pred_region
          %v3202 = vld [vmem:[#allocation2] sm:$0xff]
          %v3203 = vld [vmem:[#allocation2 + $0x8] sm:$0xff]
          %v3204 = vld [vmem:[#allocation2 + $0x10] sm:$0xff]
          %v3205 = vld [vmem:[#allocation2 + $0x18] sm:$0xff]
          %v3206 = vld [vmem:[#allocation2 + $0x20] sm:$0xff]
          %v3207 = vld [vmem:[#allocation2 + $0x28] sm:$0xff]
          %v3208 = vld [vmem:[#allocation2 + $0x30] sm:$0xff]
          %v3209 = vld [vmem:[#allocation2 + $0x38] sm:$0xff]
          %v3210 = vadd.f32 %v3202, %v3135
          %v3211 = vadd.f32 %v3203, %v3137
          %v3212 = vadd.f32 %v3204, %v3178
          %v3213 = vadd.f32 %v3205, %v3180
          %v3214 = vadd.f32 %v3206, %v3139
          %v3215 = vadd.f32 %v3207, %v3141
          %v3216 = vadd.f32 %v3208, %v3182
          %v3217 = vadd.f32 %v3209, %v3184
          %3218 = vst [vmem:[#allocation2] sm:$0xff] %v3210
          %3219 = vst [vmem:[#allocation2 + $0x8] sm:$0xff] %v3211
          %3220 = vst [vmem:[#allocation2 + $0x10] sm:$0xff] %v3212
          %3221 = vst [vmem:[#allocation2 + $0x18] sm:$0xff] %v3213
          %3222 = vst [vmem:[#allocation2 + $0x20] sm:$0xff] %v3214
          %3223 = vst [vmem:[#allocation2 + $0x28] sm:$0xff] %v3215
          %3224 = vst [vmem:[#allocation2 + $0x30] sm:$0xff] %v3216
          %3225 = vst [vmem:[#allocation2 + $0x38] sm:$0xff] %v3217
        $region140: #{tpu_custom_call.1} parent=75 // pred_fallthru
          _
        %p3226 = scmp.eq.s32.totalorder %s39, 1
        // Predicated region
        $region141: #{tpu_custom_call.1} parent=75 // pred_check
          %p3227 = pneg %p3226
        $region142: #{tpu_custom_call.1} parent=75 // pred_check_branch
          %3229 = sbr.rel (%p3227) target = $region144
        $region143: #{tpu_custom_call.1} parent=75 // pred_region
          %v3230 = vld [vmem:[#allocation2] sm:$0xff]
          %v3231 = vld [vmem:[#allocation2 + $0x8] sm:$0xff]
          %v3232 = vld [vmem:[#allocation2 + $0x10] sm:$0xff]
          %v3233 = vld [vmem:[#allocation2 + $0x18] sm:$0xff]
          %v3234 = vld [vmem:[#allocation2 + $0x20] sm:$0xff]
          %v3235 = vld [vmem:[#allocation2 + $0x28] sm:$0xff]
          %v3236 = vld [vmem:[#allocation2 + $0x30] sm:$0xff]
          %v3237 = vld [vmem:[#allocation2 + $0x38] sm:$0xff]
          %v3238 = vld [vmem:[#allocation20] sm:$0xf]
          %v3240 = vlaneseq
          %v3241 = vshrl.u32 %v3240, 7
          %v3242 = vsub.s32 0, %v3241
          %v3243 = vrot.slane %v3238, %v3242
          %v3244 = vlaneseq
          %v3245 = vshrl.u32 %v3244, 7
          %v3246 = vsub.s32 1, %v3245
          %v3247 = vrot.slane %v3238, %v3246
          %v3248 = vlaneseq
          %v3249 = vshrl.u32 %v3248, 7
          %v3250 = vsub.s32 2, %v3249
          %v3251 = vrot.slane %v3238, %v3250
          %v3252 = vlaneseq
          %v3253 = vshrl.u32 %v3252, 7
          %v3254 = vsub.s32 3, %v3253
          %v3255 = vrot.slane %v3238, %v3254
          %v3260 = vadd.f32 %v3230, %v3243
          %v3261 = vadd.f32 %v3231, %v3247
          %v3262 = vadd.f32 %v3232, %v3251
          %v3263 = vadd.f32 %v3233, %v3255
          %v3264 = vadd.f32 %v3234, %v3243
          %v3265 = vadd.f32 %v3235, %v3247
          %v3266 = vadd.f32 %v3236, %v3251
          %v3267 = vadd.f32 %v3237, %v3255
          %3268 = vst [vmem:[#allocation26] sm:$0xff] %v3260
          %3269 = vst [vmem:[#allocation26 + $0x8] sm:$0xff] %v3261
          %3270 = vst [vmem:[#allocation26 + $0x10] sm:$0xff] %v3262
          %3271 = vst [vmem:[#allocation26 + $0x18] sm:$0xff] %v3263
          %3272 = vst [vmem:[#allocation26 + $0x20] sm:$0xff] %v3264
          %3273 = vst [vmem:[#allocation26 + $0x28] sm:$0xff] %v3265
          %3274 = vst [vmem:[#allocation26 + $0x30] sm:$0xff] %v3266
          %3275 = vst [vmem:[#allocation26 + $0x38] sm:$0xff] %v3267
        $region144: #{tpu_custom_call.1} parent=75 // pred_fallthru
          _
        // Predicated region
        $region145: #{tpu_custom_call.1} parent=75 // pred_check
          %p3276 = pneg %p373
        $region146: #{tpu_custom_call.1} parent=75 // pred_check_branch
          %3278 = sbr.rel (%p3276) target = $region148
        $region147: #{tpu_custom_call.1} parent=75 // pred_region
          %s3279 = smul.u32 2, %s38
          %s3281 = ssub.s32 1024, 1024
          %3282 = vsyncadd [#allocation5], %s3281
          %s3283 = smul.addr %s3279, 4
          %s3284 = smul.addr %s3283, 128
          %s3285 = scalar_lea.hbm %s14, %s3284
          %s3286 = sshll.u32 [#allocation26], 4
          %s3287 = int_to_ptr.vmem [resolvable:$true] %s3286
          %3292 = dma.vmem_to_hbm [thread:$0]  %s3287, 1024, %s3285, [#allocation5], 512, 512, 32
        $region148: #{tpu_custom_call.1} parent=75 // pred_fallthru
          _
        // Predicated region
        $region149: #{tpu_custom_call.1} parent=75 // pred_check
          %p3293 = pneg %p373
        $region150: #{tpu_custom_call.1} parent=75 // pred_check_branch
          %3295 = sbr.rel (%p3293) target = $region152
        $region151: #{tpu_custom_call.1} parent=75 // pred_region
          %3296 = dma.done [#allocation5], 1024
        $region152: #{tpu_custom_call.1} parent=75 // pred_fallthru
          _
      $region76: #{tpu_custom_call.1} parent=5 // pred_fallthru
        _
      %p3297 = scmp.le.s32.totalorder 2, %s29
      // Predicated region
      $region153: #{tpu_custom_call.1} parent=5 // pred_check
        %p3298 = pneg %p3297
      $region154: #{tpu_custom_call.1} parent=5 // pred_check_branch
        %3300 = sbr.rel (%p3298) target = $region156
      $region155: #{tpu_custom_call.1} parent=5 // pred_region
        %s3301 = ssub.s32 %s29, 2
      $region156: #{tpu_custom_call.1} parent=5 // pred_fallthru
        _
    $region6: #{tpu_custom_call.1} parent=1 // loop_footer
      %s33 = sadd.s32 1, %s29
    $region7: #{tpu_custom_call.1} parent=1 // loop_footer_branch
      %28 = sbr.rel target = $region3
    $region8: #{tpu_custom_call.1} parent=1 // loop_exit
      _
    %3302 = vsyncpa [#allocation4], 1
    %s3303 = scalar_lea.sflag [#allocation4], 1
    %3304 = vsyncpa %s3303, 1
    %3305 = vsyncpa [#allocation7], 1
    %3306 = vsyncpa [#allocation10], 1
    %3307 = vsyncpa [#allocation13], 1
    %3308 = vsyncpa [#allocation16], 1
    %3309 = vsyncpa [#allocation19], 1
    %3310 = vsyncpa [#allocation22], 1
    %3311 = vsyncpa [#allocation25], 1
    %3312 = vsyncpa [#allocation5], 1
    %s3313 = scalar_lea.sflag [#allocation5], 1
    %3314 = vsyncpa %s3313, 1

</llo_original>
